<compile_context>
chip_gen: v5e
topology: v5e:2x2
jax: 0.10.0
libtpu: 0.0.40
codegen_flags: <defaults>
</compile_context>

<pallas_src>
import jax
import jax.numpy as jnp
from jax import lax
from jax.experimental import pallas as pl
from jax.experimental.pallas import tpu as pltpu


def _round_up(x, m):
    return ((x + m - 1) // m) * m


def make_lstm_kernel(num_layers, hidden_pad, batch_tile, time_chunk, compute_dtype):
    H = hidden_pad          # multiple of 128 (lane width)
    Bc = batch_tile         # multiple of 8 (sublanes)
    G = 4 * H
    L = num_layers

    def lstm_cell(gates, c_prev):
        # PyTorch gate order i, f, g, o.  H is a multiple of 128, so every gate
        # slice is a lane-aligned vreg view (no cross-lane shuffles).
        i_g = jax.nn.sigmoid(gates[:, 0 * H:1 * H])
        f_g = jax.nn.sigmoid(gates[:, 1 * H:2 * H])
        g_g = jnp.tanh(gates[:, 2 * H:3 * H])
        o_g = jax.nn.sigmoid(gates[:, 3 * H:4 * H])
        c_new = f_g * c_prev + i_g * g_g
        h_new = o_g * jnp.tanh(c_new)
        return h_new, c_new

    def kernel(*refs):
        # refs = (chunk_max_len[SMEM prefetch],
        #         xg, lengths, h0, c0,
        #         w_hh_l0, [w_ih_l, w_hh_l, bias_l for l = 1..L-1],
        #         y, h_n, c_n, h_scratch, c_scratch)
        maxlen_ref, x_ref, len_ref, h0_ref, c0_ref = refs[:5]
        n_w = 1 + 3 * (L - 1)
        w_refs = refs[5:5 + n_w]
        y_ref, hn_ref, cn_ref, h_sc, c_sc = refs[5 + n_w:]

        b_idx = pl.program_id(0)
        t_chunk = pl.program_id(1)

        @pl.when(t_chunk == 0)
        def _():
            h_sc[...] = h0_ref[...]
            c_sc[...] = c0_ref[...]

        chunk_start = t_chunk * time_chunk
        chunk_live = chunk_start < maxlen_ref[b_idx]

        @pl.when(jnp.logical_not(chunk_live))
        def _():
            # whole time chunk is past every sequence in this batch chunk:
            # pad_packed_sequence returns zeros there, state is unchanged.
            y_ref[...] = jnp.zeros_like(y_ref)

        @pl.when(chunk_live)
        def _():
            lengths = len_ref[...]                                   # [Bc, 1] int32
            w_hh0 = w_refs[0][...]                                   # [H, G]
            w_ihs = [w_refs[1 + 3 * (l - 1)][...] for l in range(1, L)]
            w_hhs = [w_refs[2 + 3 * (l - 1)][...] for l in range(1, L)]
            # hoist sublane broadcast of the bias out of the hot loop
            biases = [jnp.broadcast_to(w_refs[3 + 3 * (l - 1)][...], (Bc, G))
                      for l in range(1, L)]

            hs0 = tuple(h_sc[l] for l in range(L))
            cs0 = tuple(c_sc[l] for l in range(L))

            def step(s, carry):
                hs, cs = carry
                t = chunk_start + s
                # packed-seq mask, broadcast once per step (not per where)
                active = jnp.broadcast_to(lengths > t, (Bc, H))

                # ---- layer 0: input projection precomputed outside; only the
                # recurrent matmul lives inside the sequential loop. ----
                gates = (x_ref[s].astype(jnp.float32)
                         + jnp.dot(hs[0].astype(compute_dtype), w_hh0,
                                   preferred_element_type=jnp.float32))
                h_new, c_new = lstm_cell(gates, cs[0])
                new_hs = [jnp.where(active, h_new, hs[0])]
                new_cs = [jnp.where(active, c_new, cs[0])]
                layer_in = h_new

                # ---- layers 1..L-1: two MXU pushes accumulated in f32
                # (no concat temp). ----
                # TODO(synk): nn.LSTM inter-layer dropout (train mode) not reproduced.
                for l in range(1, L):
                    gates = (jnp.dot(layer_in.astype(compute_dtype), w_ihs[l - 1],
                                     preferred_element_type=jnp.float32)
                             + jnp.dot(hs[l].astype(compute_dtype), w_hhs[l - 1],
                                       preferred_element_type=jnp.float32)
                             + biases[l - 1])
                    h_new, c_new = lstm_cell(gates, cs[l])
                    new_hs.append(jnp.where(active, h_new, hs[l]))
                    new_cs.append(jnp.where(active, c_new, cs[l]))
                    layer_in = h_new

                # top-layer output; pad_packed_sequence zeroes padded positions.
                y_ref[s] = jnp.where(active, layer_in, 0.0).astype(y_ref.dtype)
                return (tuple(new_hs), tuple(new_cs))

            hs_f, cs_f = lax.fori_loop(
                0, time_chunk, step, (hs0, cs0),
                unroll=True if time_chunk <= 16 else 8)

            # state carried across time chunks: one scratch write per chunk.
            for l in range(L):
                h_sc[l] = hs_f[l]
                c_sc[l] = cs_f[l]

        # final states written once, on the last time chunk only.
        @pl.when(t_chunk == pl.num_programs(1) - 1)
        def _():
            hn_ref[...] = h_sc[...]
            cn_ref[...] = c_sc[...]

    return kernel


def variational_encoder_forward(params, inputs, lengths, hidden, *,
                                time_chunk=32, batch_chunk=128,
                                compute_dtype=jnp.bfloat16):
    """inputs: [B, T] int32 ids; lengths: [B] int32; hidden = (h0, c0), each [L, B, H]."""
    emb = params["embedding"]
    h0, c0 = hidden
    B, T = inputs.shape
    L, _, H = h0.shape
    E = emb.shape[1]

    # ---- padding so every kernel tile is (sublane=8, lane=128) aligned ----
    H_pad = _round_up(H, 128)
    G = 4 * H_pad
    # NOTE(v7x): if the batch allows, pass a smaller batch_chunk so num_b >= 2 and
    # the second TensorCore gets work via the "parallel" batch axis.
    Bc = min(_round_up(batch_chunk, 8), _round_up(B, 8))
    B_pad = _round_up(B, Bc)
    Tc = max(1, min(time_chunk, T))
    T_pad = _round_up(T, Tc)
    num_b = B_pad // Bc
    num_t = T_pad // Tc

    def pad_gate_cols(w):  # [..., 4H] -> [..., G], per-gate zero padding
        lead = w.shape[:-1]
        w4 = w.reshape(lead + (4, H))
        w4 = jnp.pad(w4, [(0, 0)] * len(lead) + [(0, 0), (0, H_pad - H)])
        return w4.reshape(lead + (G,))

    def prep_rec(w):  # torch [4H, H_in] -> [H_pad, G] (gate cols + input rows padded)
        h_in = w.shape[1]
        wt = pad_gate_cols(w.T.astype(jnp.float32))               # [H_in, G]
        wt = jnp.pad(wt, ((0, H_pad - h_in), (0, 0)))              # [H_pad, G]
        return wt.astype(compute_dtype)

    # ---- glue in plain XLA: embedding gather + dropout (eval identity) ----
    embedded = jnp.take(emb, inputs, axis=0).astype(jnp.float32)   # [B, T, E]
    # TODO(synk): nn.Dropout stochastic mask not reproduced; eval-mode identity.

    # Layer-0 input projection is time-independent -> one big MXU matmul outside
    # the recurrence.  The (tiny) weight/bias are gate-padded FIRST so xg comes
    # out already gate-padded; only T/B padding touches the big tensor.
    w_ih0 = params["w_ih_l0"].astype(jnp.float32).reshape(4, H, E)
    w_ih0 = jnp.pad(w_ih0, ((0, 0), (0, H_pad - H), (0, 0))).reshape(G, E)
    b0 = (params["b_ih_l0"] + params["b_hh_l0"]).astype(jnp.float32).reshape(4, H)
    b0 = jnp.pad(b0, ((0, 0), (0, H_pad - H))).reshape(G)
    xg = jnp.einsum("bte,ge->tbg", embedded, w_ih0) + b0           # [T, B, G]
    xg = jnp.pad(xg, ((0, T_pad - T), (0, B_pad - B), (0, 0))).astype(compute_dtype)

    lengths_p = jnp.pad(lengths.astype(jnp.int32), (0, B_pad - B))
    chunk_max = jnp.max(lengths_p.reshape(num_b, Bc), axis=1).astype(jnp.int32)  # [num_b]
    lengths_2d = lengths_p.reshape(B_pad, 1)
    h0_p = jnp.pad(h0.astype(jnp.float32), ((0, 0), (0, B_pad - B), (0, H_pad - H)))
    c0_p = jnp.pad(c0.astype(jnp.float32), ((0, 0), (0, B_pad - B), (0, H_pad - H)))

    # ---- recurrent weights: per-gate zero padding keeps padded hidden units == 0 ----
    weight_inputs = [prep_rec(params["w_hh_l0"])]                  # [H_pad, G]
    for l in range(1, L):
        weight_inputs.append(prep_rec(params[f"w_ih_l{l}"]))       # [H_pad, G]
        weight_inputs.append(prep_rec(params[f"w_hh_l{l}"]))       # [H_pad, G]
        bias = pad_gate_cols((params[f"b_ih_l{l}"] + params[f"b_hh_l{l}"]
                              ).astype(jnp.float32).reshape(1, 4 * H))  # [1, G] f32
        weight_inputs.append(bias)

    const_w = pl.Buffered(1)   # constants are never re-fetched: single-buffer them
    in_specs = [
        pl.BlockSpec((Tc, Bc, G), lambda b, t, ml: (t, b, 0)),        # precomputed x-gates
        pl.BlockSpec((Bc, 1), lambda b, t, ml: (b, 0)),               # lengths
        pl.BlockSpec((L, Bc, H_pad), lambda b, t, ml: (0, b, 0)),     # h0
        pl.BlockSpec((L, Bc, H_pad), lambda b, t, ml: (0, b, 0)),     # c0
        pl.BlockSpec((H_pad, G), lambda b, t, ml: (0, 0),
                     pipeline_mode=const_w),                          # W_hh layer 0
    ]
    for l in range(1, L):
        in_specs += [
            pl.BlockSpec((H_pad, G), lambda b, t, ml: (0, 0), pipeline_mode=const_w),
            pl.BlockSpec((H_pad, G), lambda b, t, ml: (0, 0), pipeline_mode=const_w),
            pl.BlockSpec((1, G), lambda b, t, ml: (0, 0), pipeline_mode=const_w),
        ]

    out_shape = (
        jax.ShapeDtypeStruct((T_pad, B_pad, H_pad), jnp.float32),  # y (time-major)
        jax.ShapeDtypeStruct((L, B_pad, H_pad), jnp.float32),      # h_n
        jax.ShapeDtypeStruct((L, B_pad, H_pad), jnp.float32),      # c_n
    )
    out_specs = [
        pl.BlockSpec((Tc, Bc, H_pad), lambda b, t, ml: (t, b, 0)),
        pl.BlockSpec((L, Bc, H_pad), lambda b, t, ml: (0, b, 0)),
        pl.BlockSpec((L, Bc, H_pad), lambda b, t, ml: (0, b, 0)),
    ]

    # ---- explicit VMEM budget (single-buffered weights, double-buffered streams) ----
    csize = jnp.dtype(compute_dtype).itemsize
    w_bytes = sum(int(w.size) * w.dtype.itemsize for w in weight_inputs)
    vmem_est = (
        2 * Tc * Bc * G * csize            # xg (double buffered)
        + 2 * Tc * Bc * H_pad * 4          # y (double buffered)
        + 2 * Bc * 128 * 4                 # lengths tile (lane-padded)
        + 2 * 2 * L * Bc * H_pad * 4       # h0 + c0
        + 2 * 2 * L * Bc * H_pad * 4       # h_n + c_n output buffers
        + 2 * L * Bc * H_pad * 4           # h/c scratch
        + w_bytes                          # single-buffered weights + biases
    )
    vmem_limit = int(min(128 << 20, max(32 << 20, int(vmem_est * 1.3) + (2 << 20))))

    y, h_n, c_n = pl.pallas_call(
        make_lstm_kernel(L, H_pad, Bc, Tc, compute_dtype),
        out_shape=out_shape,
        grid_spec=pltpu.PrefetchScalarGridSpec(
            num_scalar_prefetch=1,          # per-batch-chunk max length (skip padded chunks)
            grid=(num_b, num_t),            # batch parallel (megacore), time sequential
            in_specs=in_specs,
            out_specs=out_specs,
            scratch_shapes=[pltpu.VMEM((L, Bc, H_pad), jnp.float32),   # h state carry
                            pltpu.VMEM((L, Bc, H_pad), jnp.float32)],  # c state carry
        ),
        compiler_params=pltpu.CompilerParams(
            dimension_semantics=("parallel", "arbitrary"),
            vmem_limit_bytes=vmem_limit),
    )(chunk_max, xg, lengths_2d, h0_p, c0_p, *weight_inputs)

    unpacked = jnp.transpose(y[:T, :B, :H], (1, 0, 2))      # [B, T, H] batch_first
    return unpacked, (h_n[:, :B, :H], c_n[:, :B, :H])


def reference_forward(params, inputs, lengths, hidden):
    """Pure-JAX LSTM reference matching PyTorch packed-sequence eval semantics."""
    h0, c0 = hidden
    B, T = inputs.shape
    L, _, H = h0.shape
    x = jnp.take(params["embedding"], inputs, axis=0).astype(jnp.float32)
    hs = [h0[l] for l in range(L)]
    cs = [c0[l] for l in range(L)]
    ys = []
    for t in range(T):
        active = (lengths > t).reshape(B, 1)
        inp = x[:, t]
        for l in range(L):
            gates = (inp @ params[f"w_ih_l{l}"].T + hs[l] @ params[f"w_hh_l{l}"].T
                     + params[f"b_ih_l{l}"] + params[f"b_hh_l{l}"])
            i_g, f_g, g_g, o_g = jnp.split(gates, 4, axis=-1)
            i_g = jax.nn.sigmoid(i_g)
            f_g = jax.nn.sigmoid(f_g)
            g_g = jnp.tanh(g_g)
            o_g = jax.nn.sigmoid(o_g)
            c_new = f_g * cs[l] + i_g * g_g
            h_new = o_g * jnp.tanh(c_new)
            hs[l] = jnp.where(active, h_new, hs[l])
            cs[l] = jnp.where(active, c_new, cs[l])
            inp = h_new
        ys.append(jnp.where(active, hs[L - 1], 0.0))
    return jnp.stack(ys, axis=1), (jnp.stack(hs), jnp.stack(cs))


def init_params(key, vocab_size, emb_dim, hidden_size, num_layers):
    """Deterministic synthetic params matching nn.Embedding / nn.LSTM shapes."""
    keys = jax.random.split(key, 1 + 4 * num_layers)
    params = {"embedding": jax.random.normal(keys[0], (vocab_size, emb_dim), jnp.float32)}
    k = 1.0 / float(hidden_size) ** 0.5
    idx = 1
    for l in range(num_layers):
        in_dim = emb_dim if l == 0 else hidden_size
        params[f"w_ih_l{l}"] = jax.random.uniform(keys[idx], (4 * hidden_size, in_dim),
                                                  jnp.float32, -k, k); idx += 1
        params[f"w_hh_l{l}"] = jax.random.uniform(keys[idx], (4 * hidden_size, hidden_size),
                                                  jnp.float32, -k, k); idx += 1
        params[f"b_ih_l{l}"] = jax.random.uniform(keys[idx], (4 * hidden_size,),
                                                  jnp.float32, -k, k); idx += 1
        params[f"b_hh_l{l}"] = jax.random.uniform(keys[idx], (4 * hidden_size,),
                                                  jnp.float32, -k, k); idx += 1
    return params


if __name__ == "__main__":
    VOCAB, EMB, HID, LAYERS = 50, 16, 32, 2
    B, T = 2, 8

    key = jax.random.PRNGKey(0)
    pkey, ikey, hkey = jax.random.split(key, 3)
    params = init_params(pkey, VOCAB, EMB, HID, LAYERS)

    inputs = jax.random.randint(ikey, (B, T), 0, VOCAB, dtype=jnp.int32)
    lengths = jnp.array([T, 5], dtype=jnp.int32)   # max(lengths) == T (pad_packed_sequence)
    hidden = (jnp.zeros((LAYERS, B, HID), jnp.float32),
              jnp.zeros((LAYERS, B, HID), jnp.float32))

    # default path: bf16 weights + bf16 precomputed gates on the MXU, f32 state math
    unpacked, (h_n, c_n) = variational_encoder_forward(params, inputs, lengths, hidden)
    jax.block_until_ready((unpacked, h_n, c_n))

    assert unpacked.shape == (B, T, HID)
    assert h_n.shape == (LAYERS, B, HID) and c_n.shape == (LAYERS, B, HID)
    assert bool(jnp.all(jnp.isfinite(unpacked)))
    # pad_packed_sequence semantics: padded positions are exactly zero.
    assert float(jnp.abs(unpacked[1, int(lengths[1]):]).max()) == 0.0

    # correctness vs. pure-JAX reference (loose tol for bf16 weights + bf16 xg)
    y_ref, (h_ref, c_ref) = reference_forward(params, inputs, lengths, hidden)
    assert bool(jnp.allclose(unpacked, y_ref, atol=1e-1)), "bf16 path mismatch"

    # exact-math path (f32 weights and gates) must match the reference tightly
    y32, (h32, c32) = variational_encoder_forward(
        params, inputs, lengths, hidden, compute_dtype=jnp.float32)
    jax.block_until_ready((y32, h32, c32))
    assert bool(jnp.allclose(y32, y_ref, atol=1e-5))
    assert bool(jnp.allclose(h32, h_ref, atol=1e-5))
    assert bool(jnp.allclose(c32, c_ref, atol=1e-5))

    # second config: multiple batch chunks, multiple time chunks, and the
    # fully-padded-chunk skip path (second batch chunk's max length < Tc).
    B2, T2 = 16, 8
    k1, k2, k3 = jax.random.split(hkey, 3)
    inputs2 = jax.random.randint(k1, (B2, T2), 0, VOCAB, dtype=jnp.int32)
    lengths2 = jnp.array([8, 8, 8, 8, 8, 8, 8, 8, 3, 3, 3, 3, 3, 3, 2, 2], jnp.int32)
    hidden2 = (0.1 * jax.random.normal(k2, (LAYERS, B2, HID), jnp.float32),
               0.1 * jax.random.normal(k3, (LAYERS, B2, HID), jnp.float32))
    y2, (h2, c2) = variational_encoder_forward(
        params, inputs2, lengths2, hidden2,
        time_chunk=4, batch_chunk=8, compute_dtype=jnp.float32)
    jax.block_until_ready((y2, h2, c2))
    y2_ref, (h2_ref, c2_ref) = reference_forward(params, inputs2, lengths2, hidden2)
    assert bool(jnp.allclose(y2, y2_ref, atol=1e-5))
    assert bool(jnp.allclose(h2, h2_ref, atol=1e-5))
    assert bool(jnp.allclose(c2, c2_ref, atol=1e-5))
    # skipped chunk for the short-length batch chunk must be exactly zero
    assert float(jnp.abs(y2[8:, 4:]).max()) == 0.0

    print("KERNEL_OK")
</pallas_src>

<mosaic_0001>
module attributes {stable_mosaic.version = 11 : i64} {
  func.func @kernel(%arg0: i32, %arg1: i32, %arg2: memref<1xi32, #tpu.memory_space<smem>>, %arg3: memref<8x8x512xbf16, #tpu.memory_space<vmem>>, %arg4: memref<8x1xi32, #tpu.memory_space<vmem>>, %arg5: memref<2x8x128xf32, #tpu.memory_space<vmem>>, %arg6: memref<2x8x128xf32, #tpu.memory_space<vmem>>, %arg7: memref<128x512xbf16, #tpu.memory_space<vmem>>, %arg8: memref<128x512xbf16, #tpu.memory_space<vmem>>, %arg9: memref<128x512xbf16, #tpu.memory_space<vmem>>, %arg10: memref<1x512xf32, #tpu.memory_space<vmem>>, %arg11: memref<8x8x128xf32, #tpu.memory_space<vmem>>, %arg12: memref<2x8x128xf32, #tpu.memory_space<vmem>>, %arg13: memref<2x8x128xf32, #tpu.memory_space<vmem>>, %arg14: memref<2x8x128xf32, #tpu.memory_space<vmem>>, %arg15: memref<2x8x128xf32, #tpu.memory_space<vmem>>) attributes {dimension_semantics = [#tpu.dimension_semantics<parallel>, #tpu.dimension_semantics<arbitrary>], iteration_bounds = array<i64: 1, 1>, scalar_prefetch = 1 : i64, scratch_operands = 2 : i64, tpu.core_type = #tpu.core_type<tc>, window_params = [{transform_indices = @transform_0, window_bounds = array<i64: 8, 8, 512>}, {transform_indices = @transform_1, window_bounds = array<i64: 8, 1>}, {transform_indices = @transform_2, window_bounds = array<i64: 2, 8, 128>}, {transform_indices = @transform_3, window_bounds = array<i64: 2, 8, 128>}, {pipeline_mode = #tpu.pipeline_mode<synchronous>, transform_indices = @transform_4, window_bounds = array<i64: 128, 512>}, {pipeline_mode = #tpu.pipeline_mode<synchronous>, transform_indices = @transform_5, window_bounds = array<i64: 128, 512>}, {pipeline_mode = #tpu.pipeline_mode<synchronous>, transform_indices = @transform_6, window_bounds = array<i64: 128, 512>}, {pipeline_mode = #tpu.pipeline_mode<synchronous>, transform_indices = @transform_7, window_bounds = array<i64: 1, 512>}, {transform_indices = @transform_8, window_bounds = array<i64: 8, 8, 128>}, {transform_indices = @transform_9, window_bounds = array<i64: 2, 8, 128>}, {transform_indices = @transform_10, window_bounds = array<i64: 2, 8, 128>}]} {
    %c0_i32 = arith.constant 0 : i32
    %0 = arith.cmpi eq, %arg1, %c0_i32 : i32
    %1 = arith.extui %0 : i1 to i32
    %c0_i32_0 = arith.constant 0 : i32
    %2 = arith.cmpi ne, %1, %c0_i32_0 : i32
    scf.if %2 {
      %c0 = arith.constant 0 : index
      %c0_5 = arith.constant 0 : index
      %c0_6 = arith.constant 0 : index
      %15 = vector.load %arg5[%c0, %c0_5, %c0_6] : memref<2x8x128xf32, #tpu.memory_space<vmem>>, vector<2x8x128xf32>
      %c0_7 = arith.constant 0 : index
      %c0_8 = arith.constant 0 : index
      %c0_9 = arith.constant 0 : index
      %16 = vector.load %arg14[%c0_7, %c0_8, %c0_9] : memref<2x8x128xf32, #tpu.memory_space<vmem>>, vector<2x8x128xf32>
      tpu.vector_store %arg14[%c0_7, %c0_8, %c0_9], %15 {strides = array<i32>} : memref<2x8x128xf32, #tpu.memory_space<vmem>>, vector<2x8x128xf32>,
      %c0_10 = arith.constant 0 : index
      %c0_11 = arith.constant 0 : index
      %c0_12 = arith.constant 0 : index
      %17 = vector.load %arg6[%c0_10, %c0_11, %c0_12] : memref<2x8x128xf32, #tpu.memory_space<vmem>>, vector<2x8x128xf32>
      %c0_13 = arith.constant 0 : index
      %c0_14 = arith.constant 0 : index
      %c0_15 = arith.constant 0 : index
      %18 = vector.load %arg15[%c0_13, %c0_14, %c0_15] : memref<2x8x128xf32, #tpu.memory_space<vmem>>, vector<2x8x128xf32>
      tpu.vector_store %arg15[%c0_13, %c0_14, %c0_15], %17 {strides = array<i32>} : memref<2x8x128xf32, #tpu.memory_space<vmem>>, vector<2x8x128xf32>,
    } else {
    }
    %c8_i32 = arith.constant 8 : i32
    %3 = arith.muli %arg1, %c8_i32 : i32
    %4 = arith.index_cast %arg0 : i32 to index
    %5 = memref.load %arg2[%4] : memref<1xi32, #tpu.memory_space<smem>>
    %6 = arith.cmpi slt, %3, %5 : i32
    %true = arith.constant true
    %7 = arith.xori %6, %true : i1
    %8 = arith.extui %7 : i1 to i32
    %c0_i32_1 = arith.constant 0 : i32
    %9 = arith.cmpi ne, %8, %c0_i32_1 : i32
    scf.if %9 {
      %cst = arith.constant 0.000000e+00 : f32
      %15 = vector.broadcast %cst : f32 to vector<8x8x128xf32>
      %c0 = arith.constant 0 : index
      %c0_5 = arith.constant 0 : index
      %c0_6 = arith.constant 0 : index
      %16 = vector.load %arg11[%c0, %c0_5, %c0_6] : memref<8x8x128xf32, #tpu.memory_space<vmem>>, vector<8x8x128xf32>
      tpu.vector_store %arg11[%c0, %c0_5, %c0_6], %15 {strides = array<i32>} : memref<8x8x128xf32, #tpu.memory_space<vmem>>, vector<8x8x128xf32>,
    } else {
    }
    %10 = arith.extui %6 : i1 to i32
    %c0_i32_2 = arith.constant 0 : i32
    %11 = arith.cmpi ne, %10, %c0_i32_2 : i32
    scf.if %11 {
      %c0 = arith.constant 0 : index
      %c0_5 = arith.constant 0 : index
      %15 = vector.load %arg4[%c0, %c0_5] : memref<8x1xi32, #tpu.memory_space<vmem>>, vector<8x1xi32>
      %c0_6 = arith.constant 0 : index
      %c0_7 = arith.constant 0 : index
      %16 = vector.load %arg7[%c0_6, %c0_7] : memref<128x512xbf16, #tpu.memory_space<vmem>>, vector<128x512xbf16>
      %c0_8 = arith.constant 0 : index
      %c0_9 = arith.constant 0 : index
      %17 = vector.load %arg8[%c0_8, %c0_9] : memref<128x512xbf16, #tpu.memory_space<vmem>>, vector<128x512xbf16>
      %c0_10 = arith.constant 0 : index
      %c0_11 = arith.constant 0 : index
      %18 = vector.load %arg9[%c0_10, %c0_11] : memref<128x512xbf16, #tpu.memory_space<vmem>>, vector<128x512xbf16>
      %c0_12 = arith.constant 0 : index
      %c0_13 = arith.constant 0 : index
      %19 = vector.load %arg10[%c0_12, %c0_13] : memref<1x512xf32, #tpu.memory_space<vmem>>, vector<1x512xf32>
      %20 = vector.shape_cast %19 : vector<1x512xf32> to vector<1x512xf32>
      %21 = vector.broadcast %20 : vector<1x512xf32> to vector<8x512xf32>
      %c0_14 = arith.constant 0 : index
      %c0_15 = arith.constant 0 : index
      %c0_16 = arith.constant 0 : index
      %22 = vector.load %arg14[%c0_14, %c0_15, %c0_16] : memref<2x8x128xf32, #tpu.memory_space<vmem>>, vector<1x8x128xf32>
      %23 = vector.shape_cast %22 : vector<1x8x128xf32> to vector<8x128xf32>
      %c1 = arith.constant 1 : index
      %c0_17 = arith.constant 0 : index
      %c0_18 = arith.constant 0 : index
      %24 = vector.load %arg14[%c1, %c0_17, %c0_18] : memref<2x8x128xf32, #tpu.memory_space<vmem>>, vector<1x8x128xf32>
      %25 = vector.shape_cast %24 : vector<1x8x128xf32> to vector<8x128xf32>
      %c0_19 = arith.constant 0 : index
      %c0_20 = arith.constant 0 : index
      %c0_21 = arith.constant 0 : index
      %26 = vector.load %arg15[%c0_19, %c0_20, %c0_21] : memref<2x8x128xf32, #tpu.memory_space<vmem>>, vector<1x8x128xf32>
      %27 = vector.shape_cast %26 : vector<1x8x128xf32> to vector<8x128xf32>
      %c1_22 = arith.constant 1 : index
      %c0_23 = arith.constant 0 : index
      %c0_24 = arith.constant 0 : index
      %28 = vector.load %arg15[%c1_22, %c0_23, %c0_24] : memref<2x8x128xf32, #tpu.memory_space<vmem>>, vector<1x8x128xf32>
      %29 = vector.shape_cast %28 : vector<1x8x128xf32> to vector<8x128xf32>
      %c0_i32_25 = arith.constant 0 : i32
      %30 = arith.addi %3, %c0_i32_25 : i32
      %31 = vector.broadcast %30 : i32 to vector<8x1xi32>
      %32 = arith.cmpi sgt, %15, %31 : vector<8x1xi32>
      %33 = vector.shape_cast %32 : vector<8x1xi1> to vector<8x1xi1>
      %34 = vector.broadcast %33 : vector<8x1xi1> to vector<8x128xi1>
      %35 = arith.index_cast %c0_i32_25 : i32 to index
      %c0_26 = arith.constant 0 : index
      %c0_27 = arith.constant 0 : index
      %36 = vector.load %arg3[%35, %c0_26, %c0_27] : memref<8x8x512xbf16, #tpu.memory_space<vmem>>, vector<1x8x512xbf16>
      %37 = vector.shape_cast %36 : vector<1x8x512xbf16> to vector<8x512xbf16>
      %38 = arith.extf %37 : vector<8x512xbf16> to vector<8x512xf32>
      %39 = arith.truncf %23 : vector<8x128xf32> to vector<8x128xbf16>
      %cst = arith.constant dense<0.000000e+00> : vector<8x512xf32>
      %40 = tpu.matmul %39, %16, %cst {dimension_numbers = #tpu.dot_dimension_numbers<[1], [0], [0], [1], [0, 0, 1, 1], [], []>} : vector<8x128xbf16>, vector<128x512xbf16>, vector<8x512xf32> -> vector<8x512xf32>
      %41 = arith.addf %38, %40 : vector<8x512xf32>
      %42 = vector.extract_strided_slice %41 {offsets = [0, 0], sizes = [8, 128], strides = [1, 1]} : vector<8x512xf32> to vector<8x128xf32>
      %43 = arith.negf %42 : vector<8x128xf32>
      %44 = math.exp %43 : vector<8x128xf32>
      %cst_28 = arith.constant 1.000000e+00 : f32
      %45 = vector.broadcast %cst_28 : f32 to vector<8x128xf32>
      %46 = arith.addf %45, %44 : vector<8x128xf32>
      %47 = arith.divf %45, %46 : vector<8x128xf32>
      %48 = vector.extract_strided_slice %41 {offsets = [0, 128], sizes = [8, 128], strides = [1, 1]} : vector<8x512xf32> to vector<8x128xf32>
      %49 = arith.negf %48 : vector<8x128xf32>
      %50 = math.exp %49 : vector<8x128xf32>
      %cst_29 = arith.constant 1.000000e+00 : f32
      %51 = vector.broadcast %cst_29 : f32 to vector<8x128xf32>
      %52 = arith.addf %51, %50 : vector<8x128xf32>
      %53 = arith.divf %51, %52 : vector<8x128xf32>
      %54 = vector.extract_strided_slice %41 {offsets = [0, 256], sizes = [8, 128], strides = [1, 1]} : vector<8x512xf32> to vector<8x128xf32>
      %55 = math.tanh %54 : vector<8x128xf32>
      %56 = vector.extract_strided_slice %41 {offsets = [0, 384], sizes = [8, 128], strides = [1, 1]} : vector<8x512xf32> to vector<8x128xf32>
      %57 = arith.negf %56 : vector<8x128xf32>
      %58 = math.exp %57 : vector<8x128xf32>
      %cst_30 = arith.constant 1.000000e+00 : f32
      %59 = vector.broadcast %cst_30 : f32 to vector<8x128xf32>
      %60 = arith.addf %59, %58 : vector<8x128xf32>
      %61 = arith.divf %59, %60 : vector<8x128xf32>
      %62 = arith.mulf %53, %27 : vector<8x128xf32>
      %63 = arith.mulf %47, %55 : vector<8x128xf32>
      %64 = arith.addf %62, %63 : vector<8x128xf32>
      %65 = math.tanh %64 : vector<8x128xf32>
      %66 = arith.mulf %61, %65 : vector<8x128xf32>
      %67 = arith.select %34, %66, %23 : vector<8x128xi1>, vector<8x128xf32>
      %68 = arith.select %34, %64, %27 : vector<8x128xi1>, vector<8x128xf32>
      %69 = arith.truncf %66 : vector<8x128xf32> to vector<8x128xbf16>
      %cst_31 = arith.constant dense<0.000000e+00> : vector<8x512xf32>
      %70 = tpu.matmul %69, %17, %cst_31 {dimension_numbers = #tpu.dot_dimension_numbers<[1], [0], [0], [1], [0, 0, 1, 1], [], []>} : vector<8x128xbf16>, vector<128x512xbf16>, vector<8x512xf32> -> vector<8x512xf32>
      %71 = arith.truncf %25 : vector<8x128xf32> to vector<8x128xbf16>
      %cst_32 = arith.constant dense<0.000000e+00> : vector<8x512xf32>
      %72 = tpu.matmul %71, %18, %cst_32 {dimension_numbers = #tpu.dot_dimension_numbers<[1], [0], [0], [1], [0, 0, 1, 1], [], []>} : vector<8x128xbf16>, vector<128x512xbf16>, vector<8x512xf32> -> vector<8x512xf32>
      %73 = arith.addf %70, %72 : vector<8x512xf32>
      %74 = arith.addf %73, %21 : vector<8x512xf32>
      %75 = vector.extract_strided_slice %74 {offsets = [0, 0], sizes = [8, 128], strides = [1, 1]} : vector<8x512xf32> to vector<8x128xf32>
      %76 = arith.negf %75 : vector<8x128xf32>
      %77 = math.exp %76 : vector<8x128xf32>
      %cst_33 = arith.constant 1.000000e+00 : f32
      %78 = vector.broadcast %cst_33 : f32 to vector<8x128xf32>
      %79 = arith.addf %78, %77 : vector<8x128xf32>
      %80 = arith.divf %78, %79 : vector<8x128xf32>
      %81 = vector.extract_strided_slice %74 {offsets = [0, 128], sizes = [8, 128], strides = [1, 1]} : vector<8x512xf32> to vector<8x128xf32>
      %82 = arith.negf %81 : vector<8x128xf32>
      %83 = math.exp %82 : vector<8x128xf32>
      %cst_34 = arith.constant 1.000000e+00 : f32
      %84 = vector.broadcast %cst_34 : f32 to vector<8x128xf32>
      %85 = arith.addf %84, %83 : vector<8x128xf32>
      %86 = arith.divf %84, %85 : vector<8x128xf32>
      %87 = vector.extract_strided_slice %74 {offsets = [0, 256], sizes = [8, 128], strides = [1, 1]} : vector<8x512xf32> to vector<8x128xf32>
      %88 = math.tanh %87 : vector<8x128xf32>
      %89 = vector.extract_strided_slice %74 {offsets = [0, 384], sizes = [8, 128], strides = [1, 1]} : vector<8x512xf32> to vector<8x128xf32>
      %90 = arith.negf %89 : vector<8x128xf32>
      %91 = math.exp %90 : vector<8x128xf32>
      %cst_35 = arith.constant 1.000000e+00 : f32
      %92 = vector.broadcast %cst_35 : f32 to vector<8x128xf32>
      %93 = arith.addf %92, %91 : vector<8x128xf32>
      %94 = arith.divf %92, %93 : vector<8x128xf32>
      %95 = arith.mulf %86, %29 : vector<8x128xf32>
      %96 = arith.mulf %80, %88 : vector<8x128xf32>
      %97 = arith.addf %95, %96 : vector<8x128xf32>
      %98 = math.tanh %97 : vector<8x128xf32>
      %99 = arith.mulf %94, %98 : vector<8x128xf32>
      %100 = arith.select %34, %99, %25 : vector<8x128xi1>, vector<8x128xf32>
      %101 = arith.select %34, %97, %29 : vector<8x128xi1>, vector<8x128xf32>
      %cst_36 = arith.constant 0.000000e+00 : f32
      %102 = vector.broadcast %cst_36 : f32 to vector<8x128xf32>
      %103 = arith.select %34, %99, %102 : vector<8x128xi1>, vector<8x128xf32>
      %104 = arith.index_cast %c0_i32_25 : i32 to index
      %c0_37 = arith.constant 0 : index
      %c0_38 = arith.constant 0 : index
      %105 = vector.load %arg11[%104, %c0_37, %c0_38] : memref<8x8x128xf32, #tpu.memory_space<vmem>>, vector<1x8x128xf32>
      %106 = vector.shape_cast %105 : vector<1x8x128xf32> to vector<8x128xf32>
      %107 = vector.shape_cast %103 : vector<8x128xf32> to vector<1x8x128xf32>
      tpu.vector_store %arg11[%104, %c0_37, %c0_38], %107 {strides = array<i32>} : memref<8x8x128xf32, #tpu.memory_space<vmem>>, vector<1x8x128xf32>,
      %c1_i32 = arith.constant 1 : i32
      %108 = arith.addi %3, %c1_i32 : i32
      %109 = vector.broadcast %108 : i32 to vector<8x1xi32>
      %110 = arith.cmpi sgt, %15, %109 : vector<8x1xi32>
      %111 = vector.shape_cast %110 : vector<8x1xi1> to vector<8x1xi1>
      %112 = vector.broadcast %111 : vector<8x1xi1> to vector<8x128xi1>
      %113 = arith.index_cast %c1_i32 : i32 to index
      %c0_39 = arith.constant 0 : index
      %c0_40 = arith.constant 0 : index
      %114 = vector.load %arg3[%113, %c0_39, %c0_40] : memref<8x8x512xbf16, #tpu.memory_space<vmem>>, vector<1x8x512xbf16>
      %115 = vector.shape_cast %114 : vector<1x8x512xbf16> to vector<8x512xbf16>
      %116 = arith.extf %115 : vector<8x512xbf16> to vector<8x512xf32>
      %117 = arith.truncf %67 : vector<8x128xf32> to vector<8x128xbf16>
      %cst_41 = arith.constant dense<0.000000e+00> : vector<8x512xf32>
      %118 = tpu.matmul %117, %16, %cst_41 {dimension_numbers = #tpu.dot_dimension_numbers<[1], [0], [0], [1], [0, 0, 1, 1], [], []>} : vector<8x128xbf16>, vector<128x512xbf16>, vector<8x512xf32> -> vector<8x512xf32>
      %119 = arith.addf %116, %118 : vector<8x512xf32>
      %120 = vector.extract_strided_slice %119 {offsets = [0, 0], sizes = [8, 128], strides = [1, 1]} : vector<8x512xf32> to vector<8x128xf32>
      %121 = arith.negf %120 : vector<8x128xf32>
      %122 = math.exp %121 : vector<8x128xf32>
      %cst_42 = arith.constant 1.000000e+00 : f32
      %123 = vector.broadcast %cst_42 : f32 to vector<8x128xf32>
      %124 = arith.addf %123, %122 : vector<8x128xf32>
      %125 = arith.divf %123, %124 : vector<8x128xf32>
      %126 = vector.extract_strided_slice %119 {offsets = [0, 128], sizes = [8, 128], strides = [1, 1]} : vector<8x512xf32> to vector<8x128xf32>
      %127 = arith.negf %126 : vector<8x128xf32>
      %128 = math.exp %127 : vector<8x128xf32>
      %cst_43 = arith.constant 1.000000e+00 : f32
      %129 = vector.broadcast %cst_43 : f32 to vector<8x128xf32>
      %130 = arith.addf %129, %128 : vector<8x128xf32>
      %131 = arith.divf %129, %130 : vector<8x128xf32>
      %132 = vector.extract_strided_slice %119 {offsets = [0, 256], sizes = [8, 128], strides = [1, 1]} : vector<8x512xf32> to vector<8x128xf32>
      %133 = math.tanh %132 : vector<8x128xf32>
      %134 = vector.extract_strided_slice %119 {offsets = [0, 384], sizes = [8, 128], strides = [1, 1]} : vector<8x512xf32> to vector<8x128xf32>
      %135 = arith.negf %134 : vector<8x128xf32>
      %136 = math.exp %135 : vector<8x128xf32>
      %cst_44 = arith.constant 1.000000e+00 : f32
      %137 = vector.broadcast %cst_44 : f32 to vector<8x128xf32>
      %138 = arith.addf %137, %136 : vector<8x128xf32>
      %139 = arith.divf %137, %138 : vector<8x128xf32>
      %140 = arith.mulf %131, %68 : vector<8x128xf32>
      %141 = arith.mulf %125, %133 : vector<8x128xf32>
      %142 = arith.addf %140, %141 : vector<8x128xf32>
      %143 = math.tanh %142 : vector<8x128xf32>
      %144 = arith.mulf %139, %143 : vector<8x128xf32>
      %145 = arith.select %112, %144, %67 : vector<8x128xi1>, vector<8x128xf32>
      %146 = arith.select %112, %142, %68 : vector<8x128xi1>, vector<8x128xf32>
      %147 = arith.truncf %144 : vector<8x128xf32> to vector<8x128xbf16>
      %cst_45 = arith.constant dense<0.000000e+00> : vector<8x512xf32>
      %148 = tpu.matmul %147, %17, %cst_45 {dimension_numbers = #tpu.dot_dimension_numbers<[1], [0], [0], [1], [0, 0, 1, 1], [], []>} : vector<8x128xbf16>, vector<128x512xbf16>, vector<8x512xf32> -> vector<8x512xf32>
      %149 = arith.truncf %100 : vector<8x128xf32> to vector<8x128xbf16>
      %cst_46 = arith.constant dense<0.000000e+00> : vector<8x512xf32>
      %150 = tpu.matmul %149, %18, %cst_46 {dimension_numbers = #tpu.dot_dimension_numbers<[1], [0], [0], [1], [0, 0, 1, 1], [], []>} : vector<8x128xbf16>, vector<128x512xbf16>, vector<8x512xf32> -> vector<8x512xf32>
      %151 = arith.addf %148, %150 : vector<8x512xf32>
      %152 = arith.addf %151, %21 : vector<8x512xf32>
      %153 = vector.extract_strided_slice %152 {offsets = [0, 0], sizes = [8, 128], strides = [1, 1]} : vector<8x512xf32> to vector<8x128xf32>
      %154 = arith.negf %153 : vector<8x128xf32>
      %155 = math.exp %154 : vector<8x128xf32>
      %cst_47 = arith.constant 1.000000e+00 : f32
      %156 = vector.broadcast %cst_47 : f32 to vector<8x128xf32>
      %157 = arith.addf %156, %155 : vector<8x128xf32>
      %158 = arith.divf %156, %157 : vector<8x128xf32>
      %159 = vector.extract_strided_slice %152 {offsets = [0, 128], sizes = [8, 128], strides = [1, 1]} : vector<8x512xf32> to vector<8x128xf32>
      %160 = arith.negf %159 : vector<8x128xf32>
      %161 = math.exp %160 : vector<8x128xf32>
      %cst_48 = arith.constant 1.000000e+00 : f32
      %162 = vector.broadcast %cst_48 : f32 to vector<8x128xf32>
      %163 = arith.addf %162, %161 : vector<8x128xf32>
      %164 = arith.divf %162, %163 : vector<8x128xf32>
      %165 = vector.extract_strided_slice %152 {offsets = [0, 256], sizes = [8, 128], strides = [1, 1]} : vector<8x512xf32> to vector<8x128xf32>
      %166 = math.tanh %165 : vector<8x128xf32>
      %167 = vector.extract_strided_slice %152 {offsets = [0, 384], sizes = [8, 128], strides = [1, 1]} : vector<8x512xf32> to vector<8x128xf32>
      %168 = arith.negf %167 : vector<8x128xf32>
      %169 = math.exp %168 : vector<8x128xf32>
      %cst_49 = arith.constant 1.000000e+00 : f32
      %170 = vector.broadcast %cst_49 : f32 to vector<8x128xf32>
      %171 = arith.addf %170, %169 : vector<8x128xf32>
      %172 = arith.divf %170, %171 : vector<8x128xf32>
      %173 = arith.mulf %164, %101 : vector<8x128xf32>
      %174 = arith.mulf %158, %166 : vector<8x128xf32>
      %175 = arith.addf %173, %174 : vector<8x128xf32>
      %176 = math.tanh %175 : vector<8x128xf32>
      %177 = arith.mulf %172, %176 : vector<8x128xf32>
      %178 = arith.select %112, %177, %100 : vector<8x128xi1>, vector<8x128xf32>
      %179 = arith.select %112, %175, %101 : vector<8x128xi1>, vector<8x128xf32>
      %cst_50 = arith.constant 0.000000e+00 : f32
      %180 = vector.broadcast %cst_50 : f32 to vector<8x128xf32>
      %181 = arith.select %112, %177, %180 : vector<8x128xi1>, vector<8x128xf32>
      %182 = arith.index_cast %c1_i32 : i32 to index
      %c0_51 = arith.constant 0 : index
      %c0_52 = arith.constant 0 : index
      %183 = vector.load %arg11[%182, %c0_51, %c0_52] : memref<8x8x128xf32, #tpu.memory_space<vmem>>, vector<1x8x128xf32>
      %184 = vector.shape_cast %183 : vector<1x8x128xf32> to vector<8x128xf32>
      %185 = vector.shape_cast %181 : vector<8x128xf32> to vector<1x8x128xf32>
      tpu.vector_store %arg11[%182, %c0_51, %c0_52], %185 {strides = array<i32>} : memref<8x8x128xf32, #tpu.memory_space<vmem>>, vector<1x8x128xf32>,
      %c2_i32 = arith.constant 2 : i32
      %186 = arith.addi %3, %c2_i32 : i32
      %187 = vector.broadcast %186 : i32 to vector<8x1xi32>
      %188 = arith.cmpi sgt, %15, %187 : vector<8x1xi32>
      %189 = vector.shape_cast %188 : vector<8x1xi1> to vector<8x1xi1>
      %190 = vector.broadcast %189 : vector<8x1xi1> to vector<8x128xi1>
      %191 = arith.index_cast %c2_i32 : i32 to index
      %c0_53 = arith.constant 0 : index
      %c0_54 = arith.constant 0 : index
      %192 = vector.load %arg3[%191, %c0_53, %c0_54] : memref<8x8x512xbf16, #tpu.memory_space<vmem>>, vector<1x8x512xbf16>
      %193 = vector.shape_cast %192 : vector<1x8x512xbf16> to vector<8x512xbf16>
      %194 = arith.extf %193 : vector<8x512xbf16> to vector<8x512xf32>
      %195 = arith.truncf %145 : vector<8x128xf32> to vector<8x128xbf16>
      %cst_55 = arith.constant dense<0.000000e+00> : vector<8x512xf32>
      %196 = tpu.matmul %195, %16, %cst_55 {dimension_numbers = #tpu.dot_dimension_numbers<[1], [0], [0], [1], [0, 0, 1, 1], [], []>} : vector<8x128xbf16>, vector<128x512xbf16>, vector<8x512xf32> -> vector<8x512xf32>
      %197 = arith.addf %194, %196 : vector<8x512xf32>
      %198 = vector.extract_strided_slice %197 {offsets = [0, 0], sizes = [8, 128], strides = [1, 1]} : vector<8x512xf32> to vector<8x128xf32>
      %199 = arith.negf %198 : vector<8x128xf32>
      %200 = math.exp %199 : vector<8x128xf32>
      %cst_56 = arith.constant 1.000000e+00 : f32
      %201 = vector.broadcast %cst_56 : f32 to vector<8x128xf32>
      %202 = arith.addf %201, %200 : vector<8x128xf32>
      %203 = arith.divf %201, %202 : vector<8x128xf32>
      %204 = vector.extract_strided_slice %197 {offsets = [0, 128], sizes = [8, 128], strides = [1, 1]} : vector<8x512xf32> to vector<8x128xf32>
      %205 = arith.negf %204 : vector<8x128xf32>
      %206 = math.exp %205 : vector<8x128xf32>
      %cst_57 = arith.constant 1.000000e+00 : f32
      %207 = vector.broadcast %cst_57 : f32 to vector<8x128xf32>
      %208 = arith.addf %207, %206 : vector<8x128xf32>
      %209 = arith.divf %207, %208 : vector<8x128xf32>
      %210 = vector.extract_strided_slice %197 {offsets = [0, 256], sizes = [8, 128], strides = [1, 1]} : vector<8x512xf32> to vector<8x128xf32>
      %211 = math.tanh %210 : vector<8x128xf32>
      %212 = vector.extract_strided_slice %197 {offsets = [0, 384], sizes = [8, 128], strides = [1, 1]} : vector<8x512xf32> to vector<8x128xf32>
      %213 = arith.negf %212 : vector<8x128xf32>
      %214 = math.exp %213 : vector<8x128xf32>
      %cst_58 = arith.constant 1.000000e+00 : f32
      %215 = vector.broadcast %cst_58 : f32 to vector<8x128xf32>
      %216 = arith.addf %215, %214 : vector<8x128xf32>
      %217 = arith.divf %215, %216 : vector<8x128xf32>
      %218 = arith.mulf %209, %146 : vector<8x128xf32>
      %219 = arith.mulf %203, %211 : vector<8x128xf32>
      %220 = arith.addf %218, %219 : vector<8x128xf32>
      %221 = math.tanh %220 : vector<8x128xf32>
      %222 = arith.mulf %217, %221 : vector<8x128xf32>
      %223 = arith.select %190, %222, %145 : vector<8x128xi1>, vector<8x128xf32>
      %224 = arith.select %190, %220, %146 : vector<8x128xi1>, vector<8x128xf32>
      %225 = arith.truncf %222 : vector<8x128xf32> to vector<8x128xbf16>
      %cst_59 = arith.constant dense<0.000000e+00> : vector<8x512xf32>
      %226 = tpu.matmul %225, %17, %cst_59 {dimension_numbers = #tpu.dot_dimension_numbers<[1], [0], [0], [1], [0, 0, 1, 1], [], []>} : vector<8x128xbf16>, vector<128x512xbf16>, vector<8x512xf32> -> vector<8x512xf32>
      %227 = arith.truncf %178 : vector<8x128xf32> to vector<8x128xbf16>
      %cst_60 = arith.constant dense<0.000000e+00> : vector<8x512xf32>
      %228 = tpu.matmul %227, %18, %cst_60 {dimension_numbers = #tpu.dot_dimension_numbers<[1], [0], [0], [1], [0, 0, 1, 1], [], []>} : vector<8x128xbf16>, vector<128x512xbf16>, vector<8x512xf32> -> vector<8x512xf32>
      %229 = arith.addf %226, %228 : vector<8x512xf32>
      %230 = arith.addf %229, %21 : vector<8x512xf32>
      %231 = vector.extract_strided_slice %230 {offsets = [0, 0], sizes = [8, 128], strides = [1, 1]} : vector<8x512xf32> to vector<8x128xf32>
      %232 = arith.negf %231 : vector<8x128xf32>
      %233 = math.exp %232 : vector<8x128xf32>
      %cst_61 = arith.constant 1.000000e+00 : f32
      %234 = vector.broadcast %cst_61 : f32 to vector<8x128xf32>
      %235 = arith.addf %234, %233 : vector<8x128xf32>
      %236 = arith.divf %234, %235 : vector<8x128xf32>
      %237 = vector.extract_strided_slice %230 {offsets = [0, 128], sizes = [8, 128], strides = [1, 1]} : vector<8x512xf32> to vector<8x128xf32>
      %238 = arith.negf %237 : vector<8x128xf32>
      %239 = math.exp %238 : vector<8x128xf32>
      %cst_62 = arith.constant 1.000000e+00 : f32
      %240 = vector.broadcast %cst_62 : f32 to vector<8x128xf32>
      %241 = arith.addf %240, %239 : vector<8x128xf32>
      %242 = arith.divf %240, %241 : vector<8x128xf32>
      %243 = vector.extract_strided_slice %230 {offsets = [0, 256], sizes = [8, 128], strides = [1, 1]} : vector<8x512xf32> to vector<8x128xf32>
      %244 = math.tanh %243 : vector<8x128xf32>
      %245 = vector.extract_strided_slice %230 {offsets = [0, 384], sizes = [8, 128], strides = [1, 1]} : vector<8x512xf32> to vector<8x128xf32>
      %246 = arith.negf %245 : vector<8x128xf32>
      %247 = math.exp %246 : vector<8x128xf32>
      %cst_63 = arith.constant 1.000000e+00 : f32
      %248 = vector.broadcast %cst_63 : f32 to vector<8x128xf32>
      %249 = arith.addf %248, %247 : vector<8x128xf32>
      %250 = arith.divf %248, %249 : vector<8x128xf32>
      %251 = arith.mulf %242, %179 : vector<8x128xf32>
      %252 = arith.mulf %236, %244 : vector<8x128xf32>
      %253 = arith.addf %251, %252 : vector<8x128xf32>
      %254 = math.tanh %253 : vector<8x128xf32>
      %255 = arith.mulf %250, %254 : vector<8x128xf32>
      %256 = arith.select %190, %255, %178 : vector<8x128xi1>, vector<8x128xf32>
      %257 = arith.select %190, %253, %179 : vector<8x128xi1>, vector<8x128xf32>
      %cst_64 = arith.constant 0.000000e+00 : f32
      %258 = vector.broadcast %cst_64 : f32 to vector<8x128xf32>
      %259 = arith.select %190, %255, %258 : vector<8x128xi1>, vector<8x128xf32>
      %260 = arith.index_cast %c2_i32 : i32 to index
      %c0_65 = arith.constant 0 : index
      %c0_66 = arith.constant 0 : index
      %261 = vector.load %arg11[%260, %c0_65, %c0_66] : memref<8x8x128xf32, #tpu.memory_space<vmem>>, vector<1x8x128xf32>
      %262 = vector.shape_cast %261 : vector<1x8x128xf32> to vector<8x128xf32>
      %263 = vector.shape_cast %259 : vector<8x128xf32> to vector<1x8x128xf32>
      tpu.vector_store %arg11[%260, %c0_65, %c0_66], %263 {strides = array<i32>} : memref<8x8x128xf32, #tpu.memory_space<vmem>>, vector<1x8x128xf32>,
      %c3_i32 = arith.constant 3 : i32
      %264 = arith.addi %3, %c3_i32 : i32
      %265 = vector.broadcast %264 : i32 to vector<8x1xi32>
      %266 = arith.cmpi sgt, %15, %265 : vector<8x1xi32>
      %267 = vector.shape_cast %266 : vector<8x1xi1> to vector<8x1xi1>
      %268 = vector.broadcast %267 : vector<8x1xi1> to vector<8x128xi1>
      %269 = arith.index_cast %c3_i32 : i32 to index
      %c0_67 = arith.constant 0 : index
      %c0_68 = arith.constant 0 : index
      %270 = vector.load %arg3[%269, %c0_67, %c0_68] : memref<8x8x512xbf16, #tpu.memory_space<vmem>>, vector<1x8x512xbf16>
      %271 = vector.shape_cast %270 : vector<1x8x512xbf16> to vector<8x512xbf16>
      %272 = arith.extf %271 : vector<8x512xbf16> to vector<8x512xf32>
      %273 = arith.truncf %223 : vector<8x128xf32> to vector<8x128xbf16>
      %cst_69 = arith.constant dense<0.000000e+00> : vector<8x512xf32>
      %274 = tpu.matmul %273, %16, %cst_69 {dimension_numbers = #tpu.dot_dimension_numbers<[1], [0], [0], [1], [0, 0, 1, 1], [], []>} : vector<8x128xbf16>, vector<128x512xbf16>, vector<8x512xf32> -> vector<8x512xf32>
      %275 = arith.addf %272, %274 : vector<8x512xf32>
      %276 = vector.extract_strided_slice %275 {offsets = [0, 0], sizes = [8, 128], strides = [1, 1]} : vector<8x512xf32> to vector<8x128xf32>
      %277 = arith.negf %276 : vector<8x128xf32>
      %278 = math.exp %277 : vector<8x128xf32>
      %cst_70 = arith.constant 1.000000e+00 : f32
      %279 = vector.broadcast %cst_70 : f32 to vector<8x128xf32>
      %280 = arith.addf %279, %278 : vector<8x128xf32>
      %281 = arith.divf %279, %280 : vector<8x128xf32>
      %282 = vector.extract_strided_slice %275 {offsets = [0, 128], sizes = [8, 128], strides = [1, 1]} : vector<8x512xf32> to vector<8x128xf32>
      %283 = arith.negf %282 : vector<8x128xf32>
      %284 = math.exp %283 : vector<8x128xf32>
      %cst_71 = arith.constant 1.000000e+00 : f32
      %285 = vector.broadcast %cst_71 : f32 to vector<8x128xf32>
      %286 = arith.addf %285, %284 : vector<8x128xf32>
      %287 = arith.divf %285, %286 : vector<8x128xf32>
      %288 = vector.extract_strided_slice %275 {offsets = [0, 256], sizes = [8, 128], strides = [1, 1]} : vector<8x512xf32> to vector<8x128xf32>
      %289 = math.tanh %288 : vector<8x128xf32>
      %290 = vector.extract_strided_slice %275 {offsets = [0, 384], sizes = [8, 128], strides = [1, 1]} : vector<8x512xf32> to vector<8x128xf32>
      %291 = arith.negf %290 : vector<8x128xf32>
      %292 = math.exp %291 : vector<8x128xf32>
      %cst_72 = arith.constant 1.000000e+00 : f32
      %293 = vector.broadcast %cst_72 : f32 to vector<8x128xf32>
      %294 = arith.addf %293, %292 : vector<8x128xf32>
      %295 = arith.divf %293, %294 : vector<8x128xf32>
      %296 = arith.mulf %287, %224 : vector<8x128xf32>
      %297 = arith.mulf %281, %289 : vector<8x128xf32>
      %298 = arith.addf %296, %297 : vector<8x128xf32>
      %299 = math.tanh %298 : vector<8x128xf32>
      %300 = arith.mulf %295, %299 : vector<8x128xf32>
      %301 = arith.select %268, %300, %223 : vector<8x128xi1>, vector<8x128xf32>
      %302 = arith.select %268, %298, %224 : vector<8x128xi1>, vector<8x128xf32>
      %303 = arith.truncf %300 : vector<8x128xf32> to vector<8x128xbf16>
      %cst_73 = arith.constant dense<0.000000e+00> : vector<8x512xf32>
      %304 = tpu.matmul %303, %17, %cst_73 {dimension_numbers = #tpu.dot_dimension_numbers<[1], [0], [0], [1], [0, 0, 1, 1], [], []>} : vector<8x128xbf16>, vector<128x512xbf16>, vector<8x512xf32> -> vector<8x512xf32>
      %305 = arith.truncf %256 : vector<8x128xf32> to vector<8x128xbf16>
      %cst_74 = arith.constant dense<0.000000e+00> : vector<8x512xf32>
      %306 = tpu.matmul %305, %18, %cst_74 {dimension_numbers = #tpu.dot_dimension_numbers<[1], [0], [0], [1], [0, 0, 1, 1], [], []>} : vector<8x128xbf16>, vector<128x512xbf16>, vector<8x512xf32> -> vector<8x512xf32>
      %307 = arith.addf %304, %306 : vector<8x512xf32>
      %308 = arith.addf %307, %21 : vector<8x512xf32>
      %309 = vector.extract_strided_slice %308 {offsets = [0, 0], sizes = [8, 128], strides = [1, 1]} : vector<8x512xf32> to vector<8x128xf32>
      %310 = arith.negf %309 : vector<8x128xf32>
      %311 = math.exp %310 : vector<8x128xf32>
      %cst_75 = arith.constant 1.000000e+00 : f32
      %312 = vector.broadcast %cst_75 : f32 to vector<8x128xf32>
      %313 = arith.addf %312, %311 : vector<8x128xf32>
      %314 = arith.divf %312, %313 : vector<8x128xf32>
      %315 = vector.extract_strided_slice %308 {offsets = [0, 128], sizes = [8, 128], strides = [1, 1]} : vector<8x512xf32> to vector<8x128xf32>
      %316 = arith.negf %315 : vector<8x128xf32>
      %317 = math.exp %316 : vector<8x128xf32>
      %cst_76 = arith.constant 1.000000e+00 : f32
      %318 = vector.broadcast %cst_76 : f32 to vector<8x128xf32>
      %319 = arith.addf %318, %317 : vector<8x128xf32>
      %320 = arith.divf %318, %319 : vector<8x128xf32>
      %321 = vector.extract_strided_slice %308 {offsets = [0, 256], sizes = [8, 128], strides = [1, 1]} : vector<8x512xf32> to vector<8x128xf32>
      %322 = math.tanh %321 : vector<8x128xf32>
      %323 = vector.extract_strided_slice %308 {offsets = [0, 384], sizes = [8, 128], strides = [1, 1]} : vector<8x512xf32> to vector<8x128xf32>
      %324 = arith.negf %323 : vector<8x128xf32>
      %325 = math.exp %324 : vector<8x128xf32>
      %cst_77 = arith.constant 1.000000e+00 : f32
      %326 = vector.broadcast %cst_77 : f32 to vector<8x128xf32>
      %327 = arith.addf %326, %325 : vector<8x128xf32>
      %328 = arith.divf %326, %327 : vector<8x128xf32>
      %329 = arith.mulf %320, %257 : vector<8x128xf32>
      %330 = arith.mulf %314, %322 : vector<8x128xf32>
      %331 = arith.addf %329, %330 : vector<8x128xf32>
      %332 = math.tanh %331 : vector<8x128xf32>
      %333 = arith.mulf %328, %332 : vector<8x128xf32>
      %334 = arith.select %268, %333, %256 : vector<8x128xi1>, vector<8x128xf32>
      %335 = arith.select %268, %331, %257 : vector<8x128xi1>, vector<8x128xf32>
      %cst_78 = arith.constant 0.000000e+00 : f32
      %336 = vector.broadcast %cst_78 : f32 to vector<8x128xf32>
      %337 = arith.select %268, %333, %336 : vector<8x128xi1>, vector<8x128xf32>
      %338 = arith.index_cast %c3_i32 : i32 to index
      %c0_79 = arith.constant 0 : index
      %c0_80 = arith.constant 0 : index
      %339 = vector.load %arg11[%338, %c0_79, %c0_80] : memref<8x8x128xf32, #tpu.memory_space<vmem>>, vector<1x8x128xf32>
      %340 = vector.shape_cast %339 : vector<1x8x128xf32> to vector<8x128xf32>
      %341 = vector.shape_cast %337 : vector<8x128xf32> to vector<1x8x128xf32>
      tpu.vector_store %arg11[%338, %c0_79, %c0_80], %341 {strides = array<i32>} : memref<8x8x128xf32, #tpu.memory_space<vmem>>, vector<1x8x128xf32>,
      %c4_i32 = arith.constant 4 : i32
      %342 = arith.addi %3, %c4_i32 : i32
      %343 = vector.broadcast %342 : i32 to vector<8x1xi32>
      %344 = arith.cmpi sgt, %15, %343 : vector<8x1xi32>
      %345 = vector.shape_cast %344 : vector<8x1xi1> to vector<8x1xi1>
      %346 = vector.broadcast %345 : vector<8x1xi1> to vector<8x128xi1>
      %347 = arith.index_cast %c4_i32 : i32 to index
      %c0_81 = arith.constant 0 : index
      %c0_82 = arith.constant 0 : index
      %348 = vector.load %arg3[%347, %c0_81, %c0_82] : memref<8x8x512xbf16, #tpu.memory_space<vmem>>, vector<1x8x512xbf16>
      %349 = vector.shape_cast %348 : vector<1x8x512xbf16> to vector<8x512xbf16>
      %350 = arith.extf %349 : vector<8x512xbf16> to vector<8x512xf32>
      %351 = arith.truncf %301 : vector<8x128xf32> to vector<8x128xbf16>
      %cst_83 = arith.constant dense<0.000000e+00> : vector<8x512xf32>
      %352 = tpu.matmul %351, %16, %cst_83 {dimension_numbers = #tpu.dot_dimension_numbers<[1], [0], [0], [1], [0, 0, 1, 1], [], []>} : vector<8x128xbf16>, vector<128x512xbf16>, vector<8x512xf32> -> vector<8x512xf32>
      %353 = arith.addf %350, %352 : vector<8x512xf32>
      %354 = vector.extract_strided_slice %353 {offsets = [0, 0], sizes = [8, 128], strides = [1, 1]} : vector<8x512xf32> to vector<8x128xf32>
      %355 = arith.negf %354 : vector<8x128xf32>
      %356 = math.exp %355 : vector<8x128xf32>
      %cst_84 = arith.constant 1.000000e+00 : f32
      %357 = vector.broadcast %cst_84 : f32 to vector<8x128xf32>
      %358 = arith.addf %357, %356 : vector<8x128xf32>
      %359 = arith.divf %357, %358 : vector<8x128xf32>
      %360 = vector.extract_strided_slice %353 {offsets = [0, 128], sizes = [8, 128], strides = [1, 1]} : vector<8x512xf32> to vector<8x128xf32>
      %361 = arith.negf %360 : vector<8x128xf32>
      %362 = math.exp %361 : vector<8x128xf32>
      %cst_85 = arith.constant 1.000000e+00 : f32
      %363 = vector.broadcast %cst_85 : f32 to vector<8x128xf32>
      %364 = arith.addf %363, %362 : vector<8x128xf32>
      %365 = arith.divf %363, %364 : vector<8x128xf32>
      %366 = vector.extract_strided_slice %353 {offsets = [0, 256], sizes = [8, 128], strides = [1, 1]} : vector<8x512xf32> to vector<8x128xf32>
      %367 = math.tanh %366 : vector<8x128xf32>
      %368 = vector.extract_strided_slice %353 {offsets = [0, 384], sizes = [8, 128], strides = [1, 1]} : vector<8x512xf32> to vector<8x128xf32>
      %369 = arith.negf %368 : vector<8x128xf32>
      %370 = math.exp %369 : vector<8x128xf32>
      %cst_86 = arith.constant 1.000000e+00 : f32
      %371 = vector.broadcast %cst_86 : f32 to vector<8x128xf32>
      %372 = arith.addf %371, %370 : vector<8x128xf32>
      %373 = arith.divf %371, %372 : vector<8x128xf32>
      %374 = arith.mulf %365, %302 : vector<8x128xf32>
      %375 = arith.mulf %359, %367 : vector<8x128xf32>
      %376 = arith.addf %374, %375 : vector<8x128xf32>
      %377 = math.tanh %376 : vector<8x128xf32>
      %378 = arith.mulf %373, %377 : vector<8x128xf32>
      %379 = arith.select %346, %378, %301 : vector<8x128xi1>, vector<8x128xf32>
      %380 = arith.select %346, %376, %302 : vector<8x128xi1>, vector<8x128xf32>
      %381 = arith.truncf %378 : vector<8x128xf32> to vector<8x128xbf16>
      %cst_87 = arith.constant dense<0.000000e+00> : vector<8x512xf32>
      %382 = tpu.matmul %381, %17, %cst_87 {dimension_numbers = #tpu.dot_dimension_numbers<[1], [0], [0], [1], [0, 0, 1, 1], [], []>} : vector<8x128xbf16>, vector<128x512xbf16>, vector<8x512xf32> -> vector<8x512xf32>
      %383 = arith.truncf %334 : vector<8x128xf32> to vector<8x128xbf16>
      %cst_88 = arith.constant dense<0.000000e+00> : vector<8x512xf32>
      %384 = tpu.matmul %383, %18, %cst_88 {dimension_numbers = #tpu.dot_dimension_numbers<[1], [0], [0], [1], [0, 0, 1, 1], [], []>} : vector<8x128xbf16>, vector<128x512xbf16>, vector<8x512xf32> -> vector<8x512xf32>
      %385 = arith.addf %382, %384 : vector<8x512xf32>
      %386 = arith.addf %385, %21 : vector<8x512xf32>
      %387 = vector.extract_strided_slice %386 {offsets = [0, 0], sizes = [8, 128], strides = [1, 1]} : vector<8x512xf32> to vector<8x128xf32>
      %388 = arith.negf %387 : vector<8x128xf32>
      %389 = math.exp %388 : vector<8x128xf32>
      %cst_89 = arith.constant 1.000000e+00 : f32
      %390 = vector.broadcast %cst_89 : f32 to vector<8x128xf32>
      %391 = arith.addf %390, %389 : vector<8x128xf32>
      %392 = arith.divf %390, %391 : vector<8x128xf32>
      %393 = vector.extract_strided_slice %386 {offsets = [0, 128], sizes = [8, 128], strides = [1, 1]} : vector<8x512xf32> to vector<8x128xf32>
      %394 = arith.negf %393 : vector<8x128xf32>
      %395 = math.exp %394 : vector<8x128xf32>
      %cst_90 = arith.constant 1.000000e+00 : f32
      %396 = vector.broadcast %cst_90 : f32 to vector<8x128xf32>
      %397 = arith.addf %396, %395 : vector<8x128xf32>
      %398 = arith.divf %396, %397 : vector<8x128xf32>
      %399 = vector.extract_strided_slice %386 {offsets = [0, 256], sizes = [8, 128], strides = [1, 1]} : vector<8x512xf32> to vector<8x128xf32>
      %400 = math.tanh %399 : vector<8x128xf32>
      %401 = vector.extract_strided_slice %386 {offsets = [0, 384], sizes = [8, 128], strides = [1, 1]} : vector<8x512xf32> to vector<8x128xf32>
      %402 = arith.negf %401 : vector<8x128xf32>
      %403 = math.exp %402 : vector<8x128xf32>
      %cst_91 = arith.constant 1.000000e+00 : f32
      %404 = vector.broadcast %cst_91 : f32 to vector<8x128xf32>
      %405 = arith.addf %404, %403 : vector<8x128xf32>
      %406 = arith.divf %404, %405 : vector<8x128xf32>
      %407 = arith.mulf %398, %335 : vector<8x128xf32>
      %408 = arith.mulf %392, %400 : vector<8x128xf32>
      %409 = arith.addf %407, %408 : vector<8x128xf32>
      %410 = math.tanh %409 : vector<8x128xf32>
      %411 = arith.mulf %406, %410 : vector<8x128xf32>
      %412 = arith.select %346, %411, %334 : vector<8x128xi1>, vector<8x128xf32>
      %413 = arith.select %346, %409, %335 : vector<8x128xi1>, vector<8x128xf32>
      %cst_92 = arith.constant 0.000000e+00 : f32
      %414 = vector.broadcast %cst_92 : f32 to vector<8x128xf32>
      %415 = arith.select %346, %411, %414 : vector<8x128xi1>, vector<8x128xf32>
      %416 = arith.index_cast %c4_i32 : i32 to index
      %c0_93 = arith.constant 0 : index
      %c0_94 = arith.constant 0 : index
      %417 = vector.load %arg11[%416, %c0_93, %c0_94] : memref<8x8x128xf32, #tpu.memory_space<vmem>>, vector<1x8x128xf32>
      %418 = vector.shape_cast %417 : vector<1x8x128xf32> to vector<8x128xf32>
      %419 = vector.shape_cast %415 : vector<8x128xf32> to vector<1x8x128xf32>
      tpu.vector_store %arg11[%416, %c0_93, %c0_94], %419 {strides = array<i32>} : memref<8x8x128xf32, #tpu.memory_space<vmem>>, vector<1x8x128xf32>,
      %c5_i32 = arith.constant 5 : i32
      %420 = arith.addi %3, %c5_i32 : i32
      %421 = vector.broadcast %420 : i32 to vector<8x1xi32>
      %422 = arith.cmpi sgt, %15, %421 : vector<8x1xi32>
      %423 = vector.shape_cast %422 : vector<8x1xi1> to vector<8x1xi1>
      %424 = vector.broadcast %423 : vector<8x1xi1> to vector<8x128xi1>
      %425 = arith.index_cast %c5_i32 : i32 to index
      %c0_95 = arith.constant 0 : index
      %c0_96 = arith.constant 0 : index
      %426 = vector.load %arg3[%425, %c0_95, %c0_96] : memref<8x8x512xbf16, #tpu.memory_space<vmem>>, vector<1x8x512xbf16>
      %427 = vector.shape_cast %426 : vector<1x8x512xbf16> to vector<8x512xbf16>
      %428 = arith.extf %427 : vector<8x512xbf16> to vector<8x512xf32>
      %429 = arith.truncf %379 : vector<8x128xf32> to vector<8x128xbf16>
      %cst_97 = arith.constant dense<0.000000e+00> : vector<8x512xf32>
      %430 = tpu.matmul %429, %16, %cst_97 {dimension_numbers = #tpu.dot_dimension_numbers<[1], [0], [0], [1], [0, 0, 1, 1], [], []>} : vector<8x128xbf16>, vector<128x512xbf16>, vector<8x512xf32> -> vector<8x512xf32>
      %431 = arith.addf %428, %430 : vector<8x512xf32>
      %432 = vector.extract_strided_slice %431 {offsets = [0, 0], sizes = [8, 128], strides = [1, 1]} : vector<8x512xf32> to vector<8x128xf32>
      %433 = arith.negf %432 : vector<8x128xf32>
      %434 = math.exp %433 : vector<8x128xf32>
      %cst_98 = arith.constant 1.000000e+00 : f32
      %435 = vector.broadcast %cst_98 : f32 to vector<8x128xf32>
      %436 = arith.addf %435, %434 : vector<8x128xf32>
      %437 = arith.divf %435, %436 : vector<8x128xf32>
      %438 = vector.extract_strided_slice %431 {offsets = [0, 128], sizes = [8, 128], strides = [1, 1]} : vector<8x512xf32> to vector<8x128xf32>
      %439 = arith.negf %438 : vector<8x128xf32>
      %440 = math.exp %439 : vector<8x128xf32>
      %cst_99 = arith.constant 1.000000e+00 : f32
      %441 = vector.broadcast %cst_99 : f32 to vector<8x128xf32>
      %442 = arith.addf %441, %440 : vector<8x128xf32>
      %443 = arith.divf %441, %442 : vector<8x128xf32>
      %444 = vector.extract_strided_slice %431 {offsets = [0, 256], sizes = [8, 128], strides = [1, 1]} : vector<8x512xf32> to vector<8x128xf32>
      %445 = math.tanh %444 : vector<8x128xf32>
      %446 = vector.extract_strided_slice %431 {offsets = [0, 384], sizes = [8, 128], strides = [1, 1]} : vector<8x512xf32> to vector<8x128xf32>
      %447 = arith.negf %446 : vector<8x128xf32>
      %448 = math.exp %447 : vector<8x128xf32>
      %cst_100 = arith.constant 1.000000e+00 : f32
      %449 = vector.broadcast %cst_100 : f32 to vector<8x128xf32>
      %450 = arith.addf %449, %448 : vector<8x128xf32>
      %451 = arith.divf %449, %450 : vector<8x128xf32>
      %452 = arith.mulf %443, %380 : vector<8x128xf32>
      %453 = arith.mulf %437, %445 : vector<8x128xf32>
      %454 = arith.addf %452, %453 : vector<8x128xf32>
      %455 = math.tanh %454 : vector<8x128xf32>
      %456 = arith.mulf %451, %455 : vector<8x128xf32>
      %457 = arith.select %424, %456, %379 : vector<8x128xi1>, vector<8x128xf32>
      %458 = arith.select %424, %454, %380 : vector<8x128xi1>, vector<8x128xf32>
      %459 = arith.truncf %456 : vector<8x128xf32> to vector<8x128xbf16>
      %cst_101 = arith.constant dense<0.000000e+00> : vector<8x512xf32>
      %460 = tpu.matmul %459, %17, %cst_101 {dimension_numbers = #tpu.dot_dimension_numbers<[1], [0], [0], [1], [0, 0, 1, 1], [], []>} : vector<8x128xbf16>, vector<128x512xbf16>, vector<8x512xf32> -> vector<8x512xf32>
      %461 = arith.truncf %412 : vector<8x128xf32> to vector<8x128xbf16>
      %cst_102 = arith.constant dense<0.000000e+00> : vector<8x512xf32>
      %462 = tpu.matmul %461, %18, %cst_102 {dimension_numbers = #tpu.dot_dimension_numbers<[1], [0], [0], [1], [0, 0, 1, 1], [], []>} : vector<8x128xbf16>, vector<128x512xbf16>, vector<8x512xf32> -> vector<8x512xf32>
      %463 = arith.addf %460, %462 : vector<8x512xf32>
      %464 = arith.addf %463, %21 : vector<8x512xf32>
      %465 = vector.extract_strided_slice %464 {offsets = [0, 0], sizes = [8, 128], strides = [1, 1]} : vector<8x512xf32> to vector<8x128xf32>
      %466 = arith.negf %465 : vector<8x128xf32>
      %467 = math.exp %466 : vector<8x128xf32>
      %cst_103 = arith.constant 1.000000e+00 : f32
      %468 = vector.broadcast %cst_103 : f32 to vector<8x128xf32>
      %469 = arith.addf %468, %467 : vector<8x128xf32>
      %470 = arith.divf %468, %469 : vector<8x128xf32>
      %471 = vector.extract_strided_slice %464 {offsets = [0, 128], sizes = [8, 128], strides = [1, 1]} : vector<8x512xf32> to vector<8x128xf32>
      %472 = arith.negf %471 : vector<8x128xf32>
      %473 = math.exp %472 : vector<8x128xf32>
      %cst_104 = arith.constant 1.000000e+00 : f32
      %474 = vector.broadcast %cst_104 : f32 to vector<8x128xf32>
      %475 = arith.addf %474, %473 : vector<8x128xf32>
      %476 = arith.divf %474, %475 : vector<8x128xf32>
      %477 = vector.extract_strided_slice %464 {offsets = [0, 256], sizes = [8, 128], strides = [1, 1]} : vector<8x512xf32> to vector<8x128xf32>
      %478 = math.tanh %477 : vector<8x128xf32>
      %479 = vector.extract_strided_slice %464 {offsets = [0, 384], sizes = [8, 128], strides = [1, 1]} : vector<8x512xf32> to vector<8x128xf32>
      %480 = arith.negf %479 : vector<8x128xf32>
      %481 = math.exp %480 : vector<8x128xf32>
      %cst_105 = arith.constant 1.000000e+00 : f32
      %482 = vector.broadcast %cst_105 : f32 to vector<8x128xf32>
      %483 = arith.addf %482, %481 : vector<8x128xf32>
      %484 = arith.divf %482, %483 : vector<8x128xf32>
      %485 = arith.mulf %476, %413 : vector<8x128xf32>
      %486 = arith.mulf %470, %478 : vector<8x128xf32>
      %487 = arith.addf %485, %486 : vector<8x128xf32>
      %488 = math.tanh %487 : vector<8x128xf32>
      %489 = arith.mulf %484, %488 : vector<8x128xf32>
      %490 = arith.select %424, %489, %412 : vector<8x128xi1>, vector<8x128xf32>
      %491 = arith.select %424, %487, %413 : vector<8x128xi1>, vector<8x128xf32>
      %cst_106 = arith.constant 0.000000e+00 : f32
      %492 = vector.broadcast %cst_106 : f32 to vector<8x128xf32>
      %493 = arith.select %424, %489, %492 : vector<8x128xi1>, vector<8x128xf32>
      %494 = arith.index_cast %c5_i32 : i32 to index
      %c0_107 = arith.constant 0 : index
      %c0_108 = arith.constant 0 : index
      %495 = vector.load %arg11[%494, %c0_107, %c0_108] : memref<8x8x128xf32, #tpu.memory_space<vmem>>, vector<1x8x128xf32>
      %496 = vector.shape_cast %495 : vector<1x8x128xf32> to vector<8x128xf32>
      %497 = vector.shape_cast %493 : vector<8x128xf32> to vector<1x8x128xf32>
      tpu.vector_store %arg11[%494, %c0_107, %c0_108], %497 {strides = array<i32>} : memref<8x8x128xf32, #tpu.memory_space<vmem>>, vector<1x8x128xf32>,
      %c6_i32 = arith.constant 6 : i32
      %498 = arith.addi %3, %c6_i32 : i32
      %499 = vector.broadcast %498 : i32 to vector<8x1xi32>
      %500 = arith.cmpi sgt, %15, %499 : vector<8x1xi32>
      %501 = vector.shape_cast %500 : vector<8x1xi1> to vector<8x1xi1>
      %502 = vector.broadcast %501 : vector<8x1xi1> to vector<8x128xi1>
      %503 = arith.index_cast %c6_i32 : i32 to index
      %c0_109 = arith.constant 0 : index
      %c0_110 = arith.constant 0 : index
      %504 = vector.load %arg3[%503, %c0_109, %c0_110] : memref<8x8x512xbf16, #tpu.memory_space<vmem>>, vector<1x8x512xbf16>
      %505 = vector.shape_cast %504 : vector<1x8x512xbf16> to vector<8x512xbf16>
      %506 = arith.extf %505 : vector<8x512xbf16> to vector<8x512xf32>
      %507 = arith.truncf %457 : vector<8x128xf32> to vector<8x128xbf16>
      %cst_111 = arith.constant dense<0.000000e+00> : vector<8x512xf32>
      %508 = tpu.matmul %507, %16, %cst_111 {dimension_numbers = #tpu.dot_dimension_numbers<[1], [0], [0], [1], [0, 0, 1, 1], [], []>} : vector<8x128xbf16>, vector<128x512xbf16>, vector<8x512xf32> -> vector<8x512xf32>
      %509 = arith.addf %506, %508 : vector<8x512xf32>
      %510 = vector.extract_strided_slice %509 {offsets = [0, 0], sizes = [8, 128], strides = [1, 1]} : vector<8x512xf32> to vector<8x128xf32>
      %511 = arith.negf %510 : vector<8x128xf32>
      %512 = math.exp %511 : vector<8x128xf32>
      %cst_112 = arith.constant 1.000000e+00 : f32
      %513 = vector.broadcast %cst_112 : f32 to vector<8x128xf32>
      %514 = arith.addf %513, %512 : vector<8x128xf32>
      %515 = arith.divf %513, %514 : vector<8x128xf32>
      %516 = vector.extract_strided_slice %509 {offsets = [0, 128], sizes = [8, 128], strides = [1, 1]} : vector<8x512xf32> to vector<8x128xf32>
      %517 = arith.negf %516 : vector<8x128xf32>
      %518 = math.exp %517 : vector<8x128xf32>
      %cst_113 = arith.constant 1.000000e+00 : f32
      %519 = vector.broadcast %cst_113 : f32 to vector<8x128xf32>
      %520 = arith.addf %519, %518 : vector<8x128xf32>
      %521 = arith.divf %519, %520 : vector<8x128xf32>
      %522 = vector.extract_strided_slice %509 {offsets = [0, 256], sizes = [8, 128], strides = [1, 1]} : vector<8x512xf32> to vector<8x128xf32>
      %523 = math.tanh %522 : vector<8x128xf32>
      %524 = vector.extract_strided_slice %509 {offsets = [0, 384], sizes = [8, 128], strides = [1, 1]} : vector<8x512xf32> to vector<8x128xf32>
      %525 = arith.negf %524 : vector<8x128xf32>
      %526 = math.exp %525 : vector<8x128xf32>
      %cst_114 = arith.constant 1.000000e+00 : f32
      %527 = vector.broadcast %cst_114 : f32 to vector<8x128xf32>
      %528 = arith.addf %527, %526 : vector<8x128xf32>
      %529 = arith.divf %527, %528 : vector<8x128xf32>
      %530 = arith.mulf %521, %458 : vector<8x128xf32>
      %531 = arith.mulf %515, %523 : vector<8x128xf32>
      %532 = arith.addf %530, %531 : vector<8x128xf32>
      %533 = math.tanh %532 : vector<8x128xf32>
      %534 = arith.mulf %529, %533 : vector<8x128xf32>
      %535 = arith.select %502, %534, %457 : vector<8x128xi1>, vector<8x128xf32>
      %536 = arith.select %502, %532, %458 : vector<8x128xi1>, vector<8x128xf32>
      %537 = arith.truncf %534 : vector<8x128xf32> to vector<8x128xbf16>
      %cst_115 = arith.constant dense<0.000000e+00> : vector<8x512xf32>
      %538 = tpu.matmul %537, %17, %cst_115 {dimension_numbers = #tpu.dot_dimension_numbers<[1], [0], [0], [1], [0, 0, 1, 1], [], []>} : vector<8x128xbf16>, vector<128x512xbf16>, vector<8x512xf32> -> vector<8x512xf32>
      %539 = arith.truncf %490 : vector<8x128xf32> to vector<8x128xbf16>
      %cst_116 = arith.constant dense<0.000000e+00> : vector<8x512xf32>
      %540 = tpu.matmul %539, %18, %cst_116 {dimension_numbers = #tpu.dot_dimension_numbers<[1], [0], [0], [1], [0, 0, 1, 1], [], []>} : vector<8x128xbf16>, vector<128x512xbf16>, vector<8x512xf32> -> vector<8x512xf32>
      %541 = arith.addf %538, %540 : vector<8x512xf32>
      %542 = arith.addf %541, %21 : vector<8x512xf32>
      %543 = vector.extract_strided_slice %542 {offsets = [0, 0], sizes = [8, 128], strides = [1, 1]} : vector<8x512xf32> to vector<8x128xf32>
      %544 = arith.negf %543 : vector<8x128xf32>
      %545 = math.exp %544 : vector<8x128xf32>
      %cst_117 = arith.constant 1.000000e+00 : f32
      %546 = vector.broadcast %cst_117 : f32 to vector<8x128xf32>
      %547 = arith.addf %546, %545 : vector<8x128xf32>
      %548 = arith.divf %546, %547 : vector<8x128xf32>
      %549 = vector.extract_strided_slice %542 {offsets = [0, 128], sizes = [8, 128], strides = [1, 1]} : vector<8x512xf32> to vector<8x128xf32>
      %550 = arith.negf %549 : vector<8x128xf32>
      %551 = math.exp %550 : vector<8x128xf32>
      %cst_118 = arith.constant 1.000000e+00 : f32
      %552 = vector.broadcast %cst_118 : f32 to vector<8x128xf32>
      %553 = arith.addf %552, %551 : vector<8x128xf32>
      %554 = arith.divf %552, %553 : vector<8x128xf32>
      %555 = vector.extract_strided_slice %542 {offsets = [0, 256], sizes = [8, 128], strides = [1, 1]} : vector<8x512xf32> to vector<8x128xf32>
      %556 = math.tanh %555 : vector<8x128xf32>
      %557 = vector.extract_strided_slice %542 {offsets = [0, 384], sizes = [8, 128], strides = [1, 1]} : vector<8x512xf32> to vector<8x128xf32>
      %558 = arith.negf %557 : vector<8x128xf32>
      %559 = math.exp %558 : vector<8x128xf32>
      %cst_119 = arith.constant 1.000000e+00 : f32
      %560 = vector.broadcast %cst_119 : f32 to vector<8x128xf32>
      %561 = arith.addf %560, %559 : vector<8x128xf32>
      %562 = arith.divf %560, %561 : vector<8x128xf32>
      %563 = arith.mulf %554, %491 : vector<8x128xf32>
      %564 = arith.mulf %548, %556 : vector<8x128xf32>
      %565 = arith.addf %563, %564 : vector<8x128xf32>
      %566 = math.tanh %565 : vector<8x128xf32>
      %567 = arith.mulf %562, %566 : vector<8x128xf32>
      %568 = arith.select %502, %567, %490 : vector<8x128xi1>, vector<8x128xf32>
      %569 = arith.select %502, %565, %491 : vector<8x128xi1>, vector<8x128xf32>
      %cst_120 = arith.constant 0.000000e+00 : f32
      %570 = vector.broadcast %cst_120 : f32 to vector<8x128xf32>
      %571 = arith.select %502, %567, %570 : vector<8x128xi1>, vector<8x128xf32>
      %572 = arith.index_cast %c6_i32 : i32 to index
      %c0_121 = arith.constant 0 : index
      %c0_122 = arith.constant 0 : index
      %573 = vector.load %arg11[%572, %c0_121, %c0_122] : memref<8x8x128xf32, #tpu.memory_space<vmem>>, vector<1x8x128xf32>
      %574 = vector.shape_cast %573 : vector<1x8x128xf32> to vector<8x128xf32>
      %575 = vector.shape_cast %571 : vector<8x128xf32> to vector<1x8x128xf32>
      tpu.vector_store %arg11[%572, %c0_121, %c0_122], %575 {strides = array<i32>} : memref<8x8x128xf32, #tpu.memory_space<vmem>>, vector<1x8x128xf32>,
      %c7_i32 = arith.constant 7 : i32
      %576 = arith.addi %3, %c7_i32 : i32
      %577 = vector.broadcast %576 : i32 to vector<8x1xi32>
      %578 = arith.cmpi sgt, %15, %577 : vector<8x1xi32>
      %579 = vector.shape_cast %578 : vector<8x1xi1> to vector<8x1xi1>
      %580 = vector.broadcast %579 : vector<8x1xi1> to vector<8x128xi1>
      %581 = arith.index_cast %c7_i32 : i32 to index
      %c0_123 = arith.constant 0 : index
      %c0_124 = arith.constant 0 : index
      %582 = vector.load %arg3[%581, %c0_123, %c0_124] : memref<8x8x512xbf16, #tpu.memory_space<vmem>>, vector<1x8x512xbf16>
      %583 = vector.shape_cast %582 : vector<1x8x512xbf16> to vector<8x512xbf16>
      %584 = arith.extf %583 : vector<8x512xbf16> to vector<8x512xf32>
      %585 = arith.truncf %535 : vector<8x128xf32> to vector<8x128xbf16>
      %cst_125 = arith.constant dense<0.000000e+00> : vector<8x512xf32>
      %586 = tpu.matmul %585, %16, %cst_125 {dimension_numbers = #tpu.dot_dimension_numbers<[1], [0], [0], [1], [0, 0, 1, 1], [], []>} : vector<8x128xbf16>, vector<128x512xbf16>, vector<8x512xf32> -> vector<8x512xf32>
      %587 = arith.addf %584, %586 : vector<8x512xf32>
      %588 = vector.extract_strided_slice %587 {offsets = [0, 0], sizes = [8, 128], strides = [1, 1]} : vector<8x512xf32> to vector<8x128xf32>
      %589 = arith.negf %588 : vector<8x128xf32>
      %590 = math.exp %589 : vector<8x128xf32>
      %cst_126 = arith.constant 1.000000e+00 : f32
      %591 = vector.broadcast %cst_126 : f32 to vector<8x128xf32>
      %592 = arith.addf %591, %590 : vector<8x128xf32>
      %593 = arith.divf %591, %592 : vector<8x128xf32>
      %594 = vector.extract_strided_slice %587 {offsets = [0, 128], sizes = [8, 128], strides = [1, 1]} : vector<8x512xf32> to vector<8x128xf32>
      %595 = arith.negf %594 : vector<8x128xf32>
      %596 = math.exp %595 : vector<8x128xf32>
      %cst_127 = arith.constant 1.000000e+00 : f32
      %597 = vector.broadcast %cst_127 : f32 to vector<8x128xf32>
      %598 = arith.addf %597, %596 : vector<8x128xf32>
      %599 = arith.divf %597, %598 : vector<8x128xf32>
      %600 = vector.extract_strided_slice %587 {offsets = [0, 256], sizes = [8, 128], strides = [1, 1]} : vector<8x512xf32> to vector<8x128xf32>
      %601 = math.tanh %600 : vector<8x128xf32>
      %602 = vector.extract_strided_slice %587 {offsets = [0, 384], sizes = [8, 128], strides = [1, 1]} : vector<8x512xf32> to vector<8x128xf32>
      %603 = arith.negf %602 : vector<8x128xf32>
      %604 = math.exp %603 : vector<8x128xf32>
      %cst_128 = arith.constant 1.000000e+00 : f32
      %605 = vector.broadcast %cst_128 : f32 to vector<8x128xf32>
      %606 = arith.addf %605, %604 : vector<8x128xf32>
      %607 = arith.divf %605, %606 : vector<8x128xf32>
      %608 = arith.mulf %599, %536 : vector<8x128xf32>
      %609 = arith.mulf %593, %601 : vector<8x128xf32>
      %610 = arith.addf %608, %609 : vector<8x128xf32>
      %611 = math.tanh %610 : vector<8x128xf32>
      %612 = arith.mulf %607, %611 : vector<8x128xf32>
      %613 = arith.select %580, %612, %535 : vector<8x128xi1>, vector<8x128xf32>
      %614 = arith.select %580, %610, %536 : vector<8x128xi1>, vector<8x128xf32>
      %615 = arith.truncf %612 : vector<8x128xf32> to vector<8x128xbf16>
      %cst_129 = arith.constant dense<0.000000e+00> : vector<8x512xf32>
      %616 = tpu.matmul %615, %17, %cst_129 {dimension_numbers = #tpu.dot_dimension_numbers<[1], [0], [0], [1], [0, 0, 1, 1], [], []>} : vector<8x128xbf16>, vector<128x512xbf16>, vector<8x512xf32> -> vector<8x512xf32>
      %617 = arith.truncf %568 : vector<8x128xf32> to vector<8x128xbf16>
      %cst_130 = arith.constant dense<0.000000e+00> : vector<8x512xf32>
      %618 = tpu.matmul %617, %18, %cst_130 {dimension_numbers = #tpu.dot_dimension_numbers<[1], [0], [0], [1], [0, 0, 1, 1], [], []>} : vector<8x128xbf16>, vector<128x512xbf16>, vector<8x512xf32> -> vector<8x512xf32>
      %619 = arith.addf %616, %618 : vector<8x512xf32>
      %620 = arith.addf %619, %21 : vector<8x512xf32>
      %621 = vector.extract_strided_slice %620 {offsets = [0, 0], sizes = [8, 128], strides = [1, 1]} : vector<8x512xf32> to vector<8x128xf32>
      %622 = arith.negf %621 : vector<8x128xf32>
      %623 = math.exp %622 : vector<8x128xf32>
      %cst_131 = arith.constant 1.000000e+00 : f32
      %624 = vector.broadcast %cst_131 : f32 to vector<8x128xf32>
      %625 = arith.addf %624, %623 : vector<8x128xf32>
      %626 = arith.divf %624, %625 : vector<8x128xf32>
      %627 = vector.extract_strided_slice %620 {offsets = [0, 128], sizes = [8, 128], strides = [1, 1]} : vector<8x512xf32> to vector<8x128xf32>
      %628 = arith.negf %627 : vector<8x128xf32>
      %629 = math.exp %628 : vector<8x128xf32>
      %cst_132 = arith.constant 1.000000e+00 : f32
      %630 = vector.broadcast %cst_132 : f32 to vector<8x128xf32>
      %631 = arith.addf %630, %629 : vector<8x128xf32>
      %632 = arith.divf %630, %631 : vector<8x128xf32>
      %633 = vector.extract_strided_slice %620 {offsets = [0, 256], sizes = [8, 128], strides = [1, 1]} : vector<8x512xf32> to vector<8x128xf32>
      %634 = math.tanh %633 : vector<8x128xf32>
      %635 = vector.extract_strided_slice %620 {offsets = [0, 384], sizes = [8, 128], strides = [1, 1]} : vector<8x512xf32> to vector<8x128xf32>
      %636 = arith.negf %635 : vector<8x128xf32>
      %637 = math.exp %636 : vector<8x128xf32>
      %cst_133 = arith.constant 1.000000e+00 : f32
      %638 = vector.broadcast %cst_133 : f32 to vector<8x128xf32>
      %639 = arith.addf %638, %637 : vector<8x128xf32>
      %640 = arith.divf %638, %639 : vector<8x128xf32>
      %641 = arith.mulf %632, %569 : vector<8x128xf32>
      %642 = arith.mulf %626, %634 : vector<8x128xf32>
      %643 = arith.addf %641, %642 : vector<8x128xf32>
      %644 = math.tanh %643 : vector<8x128xf32>
      %645 = arith.mulf %640, %644 : vector<8x128xf32>
      %646 = arith.select %580, %645, %568 : vector<8x128xi1>, vector<8x128xf32>
      %647 = arith.select %580, %643, %569 : vector<8x128xi1>, vector<8x128xf32>
      %cst_134 = arith.constant 0.000000e+00 : f32
      %648 = vector.broadcast %cst_134 : f32 to vector<8x128xf32>
      %649 = arith.select %580, %645, %648 : vector<8x128xi1>, vector<8x128xf32>
      %650 = arith.index_cast %c7_i32 : i32 to index
      %c0_135 = arith.constant 0 : index
      %c0_136 = arith.constant 0 : index
      %651 = vector.load %arg11[%650, %c0_135, %c0_136] : memref<8x8x128xf32, #tpu.memory_space<vmem>>, vector<1x8x128xf32>
      %652 = vector.shape_cast %651 : vector<1x8x128xf32> to vector<8x128xf32>
      %653 = vector.shape_cast %649 : vector<8x128xf32> to vector<1x8x128xf32>
      tpu.vector_store %arg11[%650, %c0_135, %c0_136], %653 {strides = array<i32>} : memref<8x8x128xf32, #tpu.memory_space<vmem>>, vector<1x8x128xf32>,
      %c8_i32_137 = arith.constant 8 : i32
      %c0_138 = arith.constant 0 : index
      %c0_139 = arith.constant 0 : index
      %c0_140 = arith.constant 0 : index
      %654 = vector.load %arg14[%c0_138, %c0_139, %c0_140] : memref<2x8x128xf32, #tpu.memory_space<vmem>>, vector<1x8x128xf32>
      %655 = vector.shape_cast %654 : vector<1x8x128xf32> to vector<8x128xf32>
      %656 = vector.shape_cast %613 : vector<8x128xf32> to vector<1x8x128xf32>
      tpu.vector_store %arg14[%c0_138, %c0_139, %c0_140], %656 {strides = array<i32>} : memref<2x8x128xf32, #tpu.memory_space<vmem>>, vector<1x8x128xf32>,
      %c0_141 = arith.constant 0 : index
      %c0_142 = arith.constant 0 : index
      %c0_143 = arith.constant 0 : index
      %657 = vector.load %arg15[%c0_141, %c0_142, %c0_143] : memref<2x8x128xf32, #tpu.memory_space<vmem>>, vector<1x8x128xf32>
      %658 = vector.shape_cast %657 : vector<1x8x128xf32> to vector<8x128xf32>
      %659 = vector.shape_cast %614 : vector<8x128xf32> to vector<1x8x128xf32>
      tpu.vector_store %arg15[%c0_141, %c0_142, %c0_143], %659 {strides = array<i32>} : memref<2x8x128xf32, #tpu.memory_space<vmem>>, vector<1x8x128xf32>,
      %c1_144 = arith.constant 1 : index
      %c0_145 = arith.constant 0 : index
      %c0_146 = arith.constant 0 : index
      %660 = vector.load %arg14[%c1_144, %c0_145, %c0_146] : memref<2x8x128xf32, #tpu.memory_space<vmem>>, vector<1x8x128xf32>
      %661 = vector.shape_cast %660 : vector<1x8x128xf32> to vector<8x128xf32>
      %662 = vector.shape_cast %646 : vector<8x128xf32> to vector<1x8x128xf32>
      tpu.vector_store %arg14[%c1_144, %c0_145, %c0_146], %662 {strides = array<i32>} : memref<2x8x128xf32, #tpu.memory_space<vmem>>, vector<1x8x128xf32>,
      %c1_147 = arith.constant 1 : index
      %c0_148 = arith.constant 0 : index
      %c0_149 = arith.constant 0 : index
      %663 = vector.load %arg15[%c1_147, %c0_148, %c0_149] : memref<2x8x128xf32, #tpu.memory_space<vmem>>, vector<1x8x128xf32>
      %664 = vector.shape_cast %663 : vector<1x8x128xf32> to vector<8x128xf32>
      %665 = vector.shape_cast %647 : vector<8x128xf32> to vector<1x8x128xf32>
      tpu.vector_store %arg15[%c1_147, %c0_148, %c0_149], %665 {strides = array<i32>} : memref<2x8x128xf32, #tpu.memory_space<vmem>>, vector<1x8x128xf32>,
    } else {
    }
    %c0_i32_3 = arith.constant 0 : i32
    %12 = arith.cmpi eq, %arg1, %c0_i32_3 : i32
    %13 = arith.extui %12 : i1 to i32
    %c0_i32_4 = arith.constant 0 : i32
    %14 = arith.cmpi ne, %13, %c0_i32_4 : i32
    scf.if %14 {
      %c0 = arith.constant 0 : index
      %c0_5 = arith.constant 0 : index
      %c0_6 = arith.constant 0 : index
      %15 = vector.load %arg14[%c0, %c0_5, %c0_6] : memref<2x8x128xf32, #tpu.memory_space<vmem>>, vector<2x8x128xf32>
      %c0_7 = arith.constant 0 : index
      %c0_8 = arith.constant 0 : index
      %c0_9 = arith.constant 0 : index
      %16 = vector.load %arg12[%c0_7, %c0_8, %c0_9] : memref<2x8x128xf32, #tpu.memory_space<vmem>>, vector<2x8x128xf32>
      tpu.vector_store %arg12[%c0_7, %c0_8, %c0_9], %15 {strides = array<i32>} : memref<2x8x128xf32, #tpu.memory_space<vmem>>, vector<2x8x128xf32>,
      %c0_10 = arith.constant 0 : index
      %c0_11 = arith.constant 0 : index
      %c0_12 = arith.constant 0 : index
      %17 = vector.load %arg15[%c0_10, %c0_11, %c0_12] : memref<2x8x128xf32, #tpu.memory_space<vmem>>, vector<2x8x128xf32>
      %c0_13 = arith.constant 0 : index
      %c0_14 = arith.constant 0 : index
      %c0_15 = arith.constant 0 : index
      %18 = vector.load %arg13[%c0_13, %c0_14, %c0_15] : memref<2x8x128xf32, #tpu.memory_space<vmem>>, vector<2x8x128xf32>
      tpu.vector_store %arg13[%c0_13, %c0_14, %c0_15], %17 {strides = array<i32>} : memref<2x8x128xf32, #tpu.memory_space<vmem>>, vector<2x8x128xf32>,
    } else {
    }
    return
  }
  func.func @transform_0(%arg0: i32, %arg1: i32, %arg2: memref<1xi32, #tpu.memory_space<smem>>) -> (i32, i32, i32) {
    %c0_i32 = arith.constant 0 : i32
    %c0_i32_0 = arith.constant 0 : i32
    return %arg1, %arg0, %c0_i32 : i32, i32, i32
  }
  func.func @transform_1(%arg0: i32, %arg1: i32, %arg2: memref<1xi32, #tpu.memory_space<smem>>) -> (i32, i32) {
    %c0_i32 = arith.constant 0 : i32
    %c0_i32_0 = arith.constant 0 : i32
    return %arg0, %c0_i32 : i32, i32
  }
  func.func @transform_2(%arg0: i32, %arg1: i32, %arg2: memref<1xi32, #tpu.memory_space<smem>>) -> (i32, i32, i32) {
    %c0_i32 = arith.constant 0 : i32
    %c0_i32_0 = arith.constant 0 : i32
    %c0_i32_1 = arith.constant 0 : i32
    return %c0_i32, %arg0, %c0_i32_0 : i32, i32, i32
  }
  func.func @transform_3(%arg0: i32, %arg1: i32, %arg2: memref<1xi32, #tpu.memory_space<smem>>) -> (i32, i32, i32) {
    %c0_i32 = arith.constant 0 : i32
    %c0_i32_0 = arith.constant 0 : i32
    %c0_i32_1 = arith.constant 0 : i32
    return %c0_i32, %arg0, %c0_i32_0 : i32, i32, i32
  }
  func.func @transform_4(%arg0: i32, %arg1: i32, %arg2: memref<1xi32, #tpu.memory_space<smem>>) -> (i32, i32) {
    %c0_i32 = arith.constant 0 : i32
    %c0_i32_0 = arith.constant 0 : i32
    %c0_i32_1 = arith.constant 0 : i32
    return %c0_i32, %c0_i32_0 : i32, i32
  }
  func.func @transform_5(%arg0: i32, %arg1: i32, %arg2: memref<1xi32, #tpu.memory_space<smem>>) -> (i32, i32) {
    %c0_i32 = arith.constant 0 : i32
    %c0_i32_0 = arith.constant 0 : i32
    %c0_i32_1 = arith.constant 0 : i32
    return %c0_i32, %c0_i32_0 : i32, i32
  }
  func.func @transform_6(%arg0: i32, %arg1: i32, %arg2: memref<1xi32, #tpu.memory_space<smem>>) -> (i32, i32) {
    %c0_i32 = arith.constant 0 : i32
    %c0_i32_0 = arith.constant 0 : i32
    %c0_i32_1 = arith.constant 0 : i32
    return %c0_i32, %c0_i32_0 : i32, i32
  }
  func.func @transform_7(%arg0: i32, %arg1: i32, %arg2: memref<1xi32, #tpu.memory_space<smem>>) -> (i32, i32) {
    %c0_i32 = arith.constant 0 : i32
    %c0_i32_0 = arith.constant 0 : i32
    %c0_i32_1 = arith.constant 0 : i32
    return %c0_i32, %c0_i32_0 : i32, i32
  }
  func.func @transform_8(%arg0: i32, %arg1: i32, %arg2: memref<1xi32, #tpu.memory_space<smem>>) -> (i32, i32, i32) {
    %c0_i32 = arith.constant 0 : i32
    %c0_i32_0 = arith.constant 0 : i32
    return %arg1, %arg0, %c0_i32 : i32, i32, i32
  }
  func.func @transform_9(%arg0: i32, %arg1: i32, %arg2: memref<1xi32, #tpu.memory_space<smem>>) -> (i32, i32, i32) {
    %c0_i32 = arith.constant 0 : i32
    %c0_i32_0 = arith.constant 0 : i32
    %c0_i32_1 = arith.constant 0 : i32
    return %c0_i32, %arg0, %c0_i32_0 : i32, i32, i32
  }
  func.func @transform_10(%arg0: i32, %arg1: i32, %arg2: memref<1xi32, #tpu.memory_space<smem>>) -> (i32, i32, i32) {
    %c0_i32 = arith.constant 0 : i32
    %c0_i32_0 = arith.constant 0 : i32
    %c0_i32_1 = arith.constant 0 : i32
    return %c0_i32, %arg0, %c0_i32_0 : i32, i32, i32
  }
}

</mosaic_0001>

<llo_original>
// kernel: tpu_custom_call.1
$region0: #{tpu_custom_call.1}
  #allocation0 [shape = 'u32[]', space=smem, size = 0x4, offset = 0x4, fixed_abs, tag = 'smem constant byte address 0x4 - core index']
  #allocation1 [shape = 'u32[72,128]{1,0:T(1,128)}', space=vmem, size = 0x9000, scoped, tag = 'internal scratch']
  #allocation2 [shape = 'f32[2,8,128]{2,1,0:T(8,128)}', space=vmem, size = 0x2000, scoped, tag = 'scratch operand']
  #allocation3 [shape = 'f32[2,8,128]{2,1,0:T(8,128)}', space=vmem, size = 0x2000, scoped, tag = 'scratch operand']
  #allocation4 [shape = 's32[1]{0}', space=sflag, size = 0x4, scoped, tag = 'scoped memory for tpu_custom_call.1']
  #allocation5 [shape = 's32[1]{0:T(128)S(6)}', space=smem, size = 0x200, scoped, tag = 'prefetched SMEM operand 0']
  %s0 = inlined_call_operand.<no memory space> [shape: s32[1], index: 0, kind: input, shape index: {}]
  %s1 = inlined_call_operand.hbm [shape: bf16[8,8,512], index: 1, kind: input, shape index: {}]
  %s2 = inlined_call_operand.vmem [shape: s32[8,1], index: 2, kind: input, shape index: {}]
  %s3 = inlined_call_operand.hbm [shape: f32[2,8,128], index: 3, kind: input, shape index: {}]
  %s4 = inlined_call_operand.hbm [shape: f32[2,8,128], index: 4, kind: input, shape index: {}]
  %s5 = inlined_call_operand.hbm [shape: bf16[128,512], index: 5, kind: input, shape index: {}]
  %s6 = inlined_call_operand.hbm [shape: bf16[128,512], index: 6, kind: input, shape index: {}]
  %s7 = inlined_call_operand.hbm [shape: bf16[128,512], index: 7, kind: input, shape index: {}]
  %s8 = inlined_call_operand.vmem [shape: f32[1,512], index: 8, kind: input, shape index: {}]
  %s9 = inlined_call_operand.hbm [shape: f32[8,8,128], index: 9, kind: output, shape index: {0}]
  %s10 = inlined_call_operand.hbm [shape: f32[2,8,128], index: 10, kind: output, shape index: {1}]
  %s11 = inlined_call_operand.hbm [shape: f32[2,8,128], index: 11, kind: output, shape index: {2}]
  %12 = xla_tuple %s9, %s10, %s11
  %s13 = sld [smem:[#allocation0]]
  $region98: #{tpu_custom_call.1} parent=0
    _
  %s15 = ssub.s32 1, %s13
  %s16 = scalar_select 0, %s15, %s13
  %17 = sst [smem:[#allocation5]] %s0
  $region1: #{tpu_custom_call.1} parent=0
    #allocation6 [shape = 'u8[65536]{0}', space=vmem, size = 0x10000, scoped, tag = 'input window, operand 1, single buffered']
    #allocation7 [shape = 's32[1]{0}', space=sflag, size = 0x4, scoped, tag = 'scoped memory for tpu_custom_call.1']
    #allocation8 [shape = 's32[1]{0}', space=sflag, size = 0x4, scoped, tag = 'scoped memory for tpu_custom_call.1']
    #allocation9 [shape = 'u8[8192]{0}', space=vmem, size = 0x2000, scoped, tag = 'input window, operand 3, single buffered']
    #allocation10 [shape = 's32[1]{0}', space=sflag, size = 0x4, scoped, tag = 'scoped memory for tpu_custom_call.1']
    #allocation11 [shape = 'u8[8192]{0}', space=vmem, size = 0x2000, scoped, tag = 'input window, operand 4, single buffered']
    #allocation12 [shape = 'u8[131072]{0}', space=vmem, size = 0x20000, scoped, tag = 'input window, operand 5, single buffered']
    #allocation13 [shape = 's32[1]{0}', space=sflag, size = 0x4, scoped, tag = 'scoped memory for tpu_custom_call.1']
    #allocation14 [shape = 'u8[131072]{0}', space=vmem, size = 0x20000, scoped, tag = 'input window, operand 6, single buffered']
    #allocation15 [shape = 'u8[131072]{0}', space=vmem, size = 0x20000, scoped, tag = 'input window, operand 7, single buffered']
    #allocation16 [shape = 's32[1]{0}', space=sflag, size = 0x4, scoped, tag = 'scoped memory for tpu_custom_call.1']
    #allocation17 [shape = 'u8[32768]{0}', space=vmem, size = 0x8000, scoped, tag = 'output window, operand 0, single buffered']
    #allocation18 [shape = 'u8[8192]{0}', space=vmem, size = 0x2000, scoped, tag = 'output window, operand 1, single buffered']
    #allocation19 [shape = 's32[1]{0}', space=sflag, size = 0x4, scoped, tag = 'scoped memory for tpu_custom_call.1']
    #allocation20 [shape = 'u8[8192]{0}', space=vmem, size = 0x2000, scoped, tag = 'output window, operand 2, single buffered']
    %18 = vsyncpa [#allocation7], 0
    %19 = vsyncpa [#allocation10], 0
    %20 = vsyncpa [#allocation13], 0
    %21 = vsyncpa [#allocation16], 0
    %22 = vsyncpa [#allocation8], 0
    %23 = vsyncpa [#allocation19], 0
    // Predicated region
    $region2: #{tpu_custom_call.1} parent=1 // pred_check
      _
    $region3: #{tpu_custom_call.1} parent=1 // pred_check_branch
      %25 = sbr.rel (0) target = $region5
    $region4: #{tpu_custom_call.1} parent=1 // pred_region
      %27 = vsyncadd [#allocation7], 0
      %s28 = sshll.u32 %s1, 4
      %s29 = int_to_ptr.hbm [resolvable:$true] %s28
      %s30 = sshll.u32 [#allocation6], 4
      %s31 = int_to_ptr.vmem [resolvable:$true] %s30
      %36 = dma.hbm_to_vmem [thread:$0]  %s29, 2048, %s31, [#allocation7], 256, 256, 16
    $region5: #{tpu_custom_call.1} parent=1 // pred_fallthru
      _
    // Predicated region
    $region6: #{tpu_custom_call.1} parent=1 // pred_check
      _
    $region7: #{tpu_custom_call.1} parent=1 // pred_check_branch
      %38 = sbr.rel (0) target = $region9
    $region8: #{tpu_custom_call.1} parent=1 // pred_region
      _
    $region9: #{tpu_custom_call.1} parent=1 // pred_fallthru
      _
    // Predicated region
    $region10: #{tpu_custom_call.1} parent=1 // pred_check
      _
    $region11: #{tpu_custom_call.1} parent=1 // pred_check_branch
      %40 = sbr.rel (0) target = $region13
    $region12: #{tpu_custom_call.1} parent=1 // pred_region
      %42 = vsyncadd [#allocation10], 0
      %s43 = sshll.u32 %s3, 4
      %s44 = int_to_ptr.hbm [resolvable:$true] %s43
      %s45 = sshll.u32 [#allocation9], 4
      %s46 = int_to_ptr.vmem [resolvable:$true] %s45
      %51 = dma.hbm_to_vmem [thread:$0]  %s44, 256, %s46, [#allocation10], 128, 128, 8
    $region13: #{tpu_custom_call.1} parent=1 // pred_fallthru
      _
    // Predicated region
    $region14: #{tpu_custom_call.1} parent=1 // pred_check
      _
    $region15: #{tpu_custom_call.1} parent=1 // pred_check_branch
      %53 = sbr.rel (0) target = $region17
    $region16: #{tpu_custom_call.1} parent=1 // pred_region
      %55 = vsyncadd [#allocation10], 0
      %s56 = sshll.u32 %s4, 4
      %s57 = int_to_ptr.hbm [resolvable:$true] %s56
      %s58 = sshll.u32 [#allocation11], 4
      %s59 = int_to_ptr.vmem [resolvable:$true] %s58
      %64 = dma.hbm_to_vmem [thread:$0]  %s57, 256, %s59, [#allocation10], 128, 128, 8
    $region17: #{tpu_custom_call.1} parent=1 // pred_fallthru
      _
    // Predicated region
    $region18: #{tpu_custom_call.1} parent=1 // pred_check
      _
    $region19: #{tpu_custom_call.1} parent=1 // pred_check_branch
      %66 = sbr.rel (0) target = $region21
    $region20: #{tpu_custom_call.1} parent=1 // pred_region
      %68 = vsyncadd [#allocation13], 0
      %s69 = sshll.u32 %s5, 4
      %s70 = int_to_ptr.hbm [resolvable:$true] %s69
      %s71 = sshll.u32 [#allocation12], 4
      %s72 = int_to_ptr.vmem [resolvable:$true] %s71
      %77 = dma.hbm_to_vmem [thread:$0]  %s70, 4096, %s72, [#allocation13], 256, 256, 16
    $region21: #{tpu_custom_call.1} parent=1 // pred_fallthru
      _
    // Predicated region
    $region22: #{tpu_custom_call.1} parent=1 // pred_check
      _
    $region23: #{tpu_custom_call.1} parent=1 // pred_check_branch
      %79 = sbr.rel (0) target = $region25
    $region24: #{tpu_custom_call.1} parent=1 // pred_region
      %81 = vsyncadd [#allocation13], 0
      %s82 = sshll.u32 %s6, 4
      %s83 = int_to_ptr.hbm [resolvable:$true] %s82
      %s84 = sshll.u32 [#allocation14], 4
      %s85 = int_to_ptr.vmem [resolvable:$true] %s84
      %90 = dma.hbm_to_vmem [thread:$0]  %s83, 4096, %s85, [#allocation13], 256, 256, 16
    $region25: #{tpu_custom_call.1} parent=1 // pred_fallthru
      _
    // Predicated region
    $region26: #{tpu_custom_call.1} parent=1 // pred_check
      _
    $region27: #{tpu_custom_call.1} parent=1 // pred_check_branch
      %92 = sbr.rel (0) target = $region29
    $region28: #{tpu_custom_call.1} parent=1 // pred_region
      %94 = vsyncadd [#allocation16], 0
      %s95 = sshll.u32 %s7, 4
      %s96 = int_to_ptr.hbm [resolvable:$true] %s95
      %s97 = sshll.u32 [#allocation15], 4
      %s98 = int_to_ptr.vmem [resolvable:$true] %s97
      %103 = dma.hbm_to_vmem [thread:$0]  %s96, 4096, %s98, [#allocation16], 256, 256, 16
    $region29: #{tpu_custom_call.1} parent=1 // pred_fallthru
      _
    // Predicated region
    $region30: #{tpu_custom_call.1} parent=1 // pred_check
      _
    $region31: #{tpu_custom_call.1} parent=1 // pred_check_branch
      %105 = sbr.rel (0) target = $region33
    $region32: #{tpu_custom_call.1} parent=1 // pred_region
      _
    $region33: #{tpu_custom_call.1} parent=1 // pred_fallthru
      _
    // Predicated region
    $region34: #{tpu_custom_call.1} parent=1 // pred_check
      _
    $region35: #{tpu_custom_call.1} parent=1 // pred_check_branch
      %107 = sbr.rel (0) target = $region37
    $region36: #{tpu_custom_call.1} parent=1 // pred_region
      %109 = dma.done [#allocation7], 2048
    $region37: #{tpu_custom_call.1} parent=1 // pred_fallthru
      _
    // Predicated region
    $region38: #{tpu_custom_call.1} parent=1 // pred_check
      _
    $region39: #{tpu_custom_call.1} parent=1 // pred_check_branch
      %111 = sbr.rel (0) target = $region41
    $region40: #{tpu_custom_call.1} parent=1 // pred_region
      %113 = dma.done [#allocation10], 256
    $region41: #{tpu_custom_call.1} parent=1 // pred_fallthru
      _
    // Predicated region
    $region42: #{tpu_custom_call.1} parent=1 // pred_check
      _
    $region43: #{tpu_custom_call.1} parent=1 // pred_check_branch
      %115 = sbr.rel (0) target = $region45
    $region44: #{tpu_custom_call.1} parent=1 // pred_region
      %117 = dma.done [#allocation10], 256
    $region45: #{tpu_custom_call.1} parent=1 // pred_fallthru
      _
    // Predicated region
    $region46: #{tpu_custom_call.1} parent=1 // pred_check
      _
    $region47: #{tpu_custom_call.1} parent=1 // pred_check_branch
      %119 = sbr.rel (0) target = $region49
    $region48: #{tpu_custom_call.1} parent=1 // pred_region
      %121 = dma.done [#allocation13], 4096
    $region49: #{tpu_custom_call.1} parent=1 // pred_fallthru
      _
    // Predicated region
    $region50: #{tpu_custom_call.1} parent=1 // pred_check
      _
    $region51: #{tpu_custom_call.1} parent=1 // pred_check_branch
      %123 = sbr.rel (0) target = $region53
    $region52: #{tpu_custom_call.1} parent=1 // pred_region
      %125 = dma.done [#allocation13], 4096
    $region53: #{tpu_custom_call.1} parent=1 // pred_fallthru
      _
    // Predicated region
    $region54: #{tpu_custom_call.1} parent=1 // pred_check
      _
    $region55: #{tpu_custom_call.1} parent=1 // pred_check_branch
      %127 = sbr.rel (0) target = $region57
    $region56: #{tpu_custom_call.1} parent=1 // pred_region
      %129 = dma.done [#allocation16], 4096
    $region57: #{tpu_custom_call.1} parent=1 // pred_fallthru
      _
    %p130 = scmp.eq.s32.totalorder 0, 0
    // Predicated region
    $region58: #{tpu_custom_call.1} parent=1 // pred_check
      %p131 = pneg %p130
    $region59: #{tpu_custom_call.1} parent=1 // pred_check_branch
      %133 = sbr.rel (%p131) target = $region61
    $region60: #{tpu_custom_call.1} parent=1 // pred_region
      %v134 = vld [vmem:[#allocation9] sm:$0xff]
      %v135 = vld [vmem:[#allocation9 + $0x8] sm:$0xff]
      %136 = vst [vmem:[#allocation2] sm:$0xff] %v134
      %137 = vst [vmem:[#allocation2 + $0x8] sm:$0xff] %v135
      %v138 = vld [vmem:[#allocation11] sm:$0xff]
      %v139 = vld [vmem:[#allocation11 + $0x8] sm:$0xff]
      %140 = vst [vmem:[#allocation3] sm:$0xff] %v138
      %141 = vst [vmem:[#allocation3 + $0x8] sm:$0xff] %v139
    $region61: #{tpu_custom_call.1} parent=1 // pred_fallthru
      _
    %s142 = smul.u32 0, 8
    %s143 = sld [smem:[#allocation5]]
    %p144 = scmp.lt.s32.totalorder %s142, %s143
    %p145 = scmp.ge.s32.totalorder %s142, %s143
    // Predicated region
    $region62: #{tpu_custom_call.1} parent=1 // pred_check
      %p146 = pneg %p145
    $region63: #{tpu_custom_call.1} parent=1 // pred_check_branch
      %148 = sbr.rel (%p146) target = $region65
    $region64: #{tpu_custom_call.1} parent=1 // pred_region
      %149 = vst [vmem:[#allocation17] sm:$0xff] 0.0
      %150 = vst [vmem:[#allocation17 + $0x8] sm:$0xff] 0.0
      %151 = vst [vmem:[#allocation17 + $0x10] sm:$0xff] 0.0
      %152 = vst [vmem:[#allocation17 + $0x18] sm:$0xff] 0.0
      %153 = vst [vmem:[#allocation17 + $0x20] sm:$0xff] 0.0
      %154 = vst [vmem:[#allocation17 + $0x28] sm:$0xff] 0.0
      %155 = vst [vmem:[#allocation17 + $0x30] sm:$0xff] 0.0
      %156 = vst [vmem:[#allocation17 + $0x38] sm:$0xff] 0.0
    $region65: #{tpu_custom_call.1} parent=1 // pred_fallthru
      _
    // Predicated region
    $region66: #{tpu_custom_call.1} parent=1 // pred_check
      %p157 = pneg %p144
    $region67: #{tpu_custom_call.1} parent=1 // pred_check_branch
      %159 = sbr.rel (%p157) target = $region69
    $region68: #{tpu_custom_call.1} parent=1 // pred_region
      %v160 = vld [vmem:[%s2] sm:$0xff]
      %v161 = vld [vmem:[#allocation12] sm:$0xff]
      %v162 = vld [vmem:[#allocation12 + $0x8] sm:$0xff]
      %v163 = vld [vmem:[#allocation12 + $0x10] sm:$0xff]
      %v164 = vld [vmem:[#allocation12 + $0x18] sm:$0xff]
      %v165 = vld [vmem:[#allocation12 + $0x20] sm:$0xff]
      %v166 = vld [vmem:[#allocation12 + $0x28] sm:$0xff]
      %v167 = vld [vmem:[#allocation12 + $0x30] sm:$0xff]
      %v168 = vld [vmem:[#allocation12 + $0x38] sm:$0xff]
      %v169 = vld [vmem:[#allocation12 + $0x40] sm:$0xff]
      %v170 = vld [vmem:[#allocation12 + $0x48] sm:$0xff]
      %v171 = vld [vmem:[#allocation12 + $0x50] sm:$0xff]
      %v172 = vld [vmem:[#allocation12 + $0x58] sm:$0xff]
      %v173 = vld [vmem:[#allocation12 + $0x60] sm:$0xff]
      %v174 = vld [vmem:[#allocation12 + $0x68] sm:$0xff]
      %v175 = vld [vmem:[#allocation12 + $0x70] sm:$0xff]
      %v176 = vld [vmem:[#allocation12 + $0x78] sm:$0xff]
      %v177 = vld [vmem:[#allocation12 + $0x80] sm:$0xff]
      %v178 = vld [vmem:[#allocation12 + $0x88] sm:$0xff]
      %v179 = vld [vmem:[#allocation12 + $0x90] sm:$0xff]
      %v180 = vld [vmem:[#allocation12 + $0x98] sm:$0xff]
      %v181 = vld [vmem:[#allocation12 + $0xa0] sm:$0xff]
      %v182 = vld [vmem:[#allocation12 + $0xa8] sm:$0xff]
      %v183 = vld [vmem:[#allocation12 + $0xb0] sm:$0xff]
      %v184 = vld [vmem:[#allocation12 + $0xb8] sm:$0xff]
      %v185 = vld [vmem:[#allocation12 + $0xc0] sm:$0xff]
      %v186 = vld [vmem:[#allocation12 + $0xc8] sm:$0xff]
      %v187 = vld [vmem:[#allocation12 + $0xd0] sm:$0xff]
      %v188 = vld [vmem:[#allocation12 + $0xd8] sm:$0xff]
      %v189 = vld [vmem:[#allocation12 + $0xe0] sm:$0xff]
      %v190 = vld [vmem:[#allocation12 + $0xe8] sm:$0xff]
      %v191 = vld [vmem:[#allocation12 + $0xf0] sm:$0xff]
      %v192 = vld [vmem:[#allocation12 + $0xf8] sm:$0xff]
      %v193 = vld [vmem:[#allocation14] sm:$0xff]
      %v194 = vld [vmem:[#allocation14 + $0x8] sm:$0xff]
      %v195 = vld [vmem:[#allocation14 + $0x10] sm:$0xff]
      %v196 = vld [vmem:[#allocation14 + $0x18] sm:$0xff]
      %v197 = vld [vmem:[#allocation14 + $0x20] sm:$0xff]
      %v198 = vld [vmem:[#allocation14 + $0x28] sm:$0xff]
      %v199 = vld [vmem:[#allocation14 + $0x30] sm:$0xff]
      %v200 = vld [vmem:[#allocation14 + $0x38] sm:$0xff]
      %v201 = vld [vmem:[#allocation14 + $0x40] sm:$0xff]
      %v202 = vld [vmem:[#allocation14 + $0x48] sm:$0xff]
      %v203 = vld [vmem:[#allocation14 + $0x50] sm:$0xff]
      %v204 = vld [vmem:[#allocation14 + $0x58] sm:$0xff]
      %v205 = vld [vmem:[#allocation14 + $0x60] sm:$0xff]
      %v206 = vld [vmem:[#allocation14 + $0x68] sm:$0xff]
      %v207 = vld [vmem:[#allocation14 + $0x70] sm:$0xff]
      %v208 = vld [vmem:[#allocation14 + $0x78] sm:$0xff]
      %v209 = vld [vmem:[#allocation14 + $0x80] sm:$0xff]
      %v210 = vld [vmem:[#allocation14 + $0x88] sm:$0xff]
      %v211 = vld [vmem:[#allocation14 + $0x90] sm:$0xff]
      %v212 = vld [vmem:[#allocation14 + $0x98] sm:$0xff]
      %v213 = vld [vmem:[#allocation14 + $0xa0] sm:$0xff]
      %v214 = vld [vmem:[#allocation14 + $0xa8] sm:$0xff]
      %v215 = vld [vmem:[#allocation14 + $0xb0] sm:$0xff]
      %v216 = vld [vmem:[#allocation14 + $0xb8] sm:$0xff]
      %v217 = vld [vmem:[#allocation14 + $0xc0] sm:$0xff]
      %v218 = vld [vmem:[#allocation14 + $0xc8] sm:$0xff]
      %v219 = vld [vmem:[#allocation14 + $0xd0] sm:$0xff]
      %v220 = vld [vmem:[#allocation14 + $0xd8] sm:$0xff]
      %v221 = vld [vmem:[#allocation14 + $0xe0] sm:$0xff]
      %v222 = vld [vmem:[#allocation14 + $0xe8] sm:$0xff]
      %v223 = vld [vmem:[#allocation14 + $0xf0] sm:$0xff]
      %v224 = vld [vmem:[#allocation14 + $0xf8] sm:$0xff]
      %v225 = vld [vmem:[#allocation15] sm:$0xff]
      %v226 = vld [vmem:[#allocation15 + $0x8] sm:$0xff]
      %v227 = vld [vmem:[#allocation15 + $0x10] sm:$0xff]
      %v228 = vld [vmem:[#allocation15 + $0x18] sm:$0xff]
      %v229 = vld [vmem:[#allocation15 + $0x20] sm:$0xff]
      %v230 = vld [vmem:[#allocation15 + $0x28] sm:$0xff]
      %v231 = vld [vmem:[#allocation15 + $0x30] sm:$0xff]
      %v232 = vld [vmem:[#allocation15 + $0x38] sm:$0xff]
      %v233 = vld [vmem:[#allocation15 + $0x40] sm:$0xff]
      %v234 = vld [vmem:[#allocation15 + $0x48] sm:$0xff]
      %v235 = vld [vmem:[#allocation15 + $0x50] sm:$0xff]
      %v236 = vld [vmem:[#allocation15 + $0x58] sm:$0xff]
      %v237 = vld [vmem:[#allocation15 + $0x60] sm:$0xff]
      %v238 = vld [vmem:[#allocation15 + $0x68] sm:$0xff]
      %v239 = vld [vmem:[#allocation15 + $0x70] sm:$0xff]
      %v240 = vld [vmem:[#allocation15 + $0x78] sm:$0xff]
      %v241 = vld [vmem:[#allocation15 + $0x80] sm:$0xff]
      %v242 = vld [vmem:[#allocation15 + $0x88] sm:$0xff]
      %v243 = vld [vmem:[#allocation15 + $0x90] sm:$0xff]
      %v244 = vld [vmem:[#allocation15 + $0x98] sm:$0xff]
      %v245 = vld [vmem:[#allocation15 + $0xa0] sm:$0xff]
      %v246 = vld [vmem:[#allocation15 + $0xa8] sm:$0xff]
      %v247 = vld [vmem:[#allocation15 + $0xb0] sm:$0xff]
      %v248 = vld [vmem:[#allocation15 + $0xb8] sm:$0xff]
      %v249 = vld [vmem:[#allocation15 + $0xc0] sm:$0xff]
      %v250 = vld [vmem:[#allocation15 + $0xc8] sm:$0xff]
      %v251 = vld [vmem:[#allocation15 + $0xd0] sm:$0xff]
      %v252 = vld [vmem:[#allocation15 + $0xd8] sm:$0xff]
      %v253 = vld [vmem:[#allocation15 + $0xe0] sm:$0xff]
      %v254 = vld [vmem:[#allocation15 + $0xe8] sm:$0xff]
      %v255 = vld [vmem:[#allocation15 + $0xf0] sm:$0xff]
      %v256 = vld [vmem:[#allocation15 + $0xf8] sm:$0xff]
      %v257 = vld [vmem:[%s8] sm:$0xf]
      %v259 = vperm.slane %v257, 0
      %v260 = vperm.slane %v257, 1
      %v261 = vperm.slane %v257, 2
      %v262 = vperm.slane %v257, 3
      %v267 = vld [vmem:[#allocation2] sm:$0xff]
      %s268 = scalar_lea.vmem [#allocation2], 8
      %v269 = vld [vmem:[%s268] sm:$0xff]
      %v270 = vld [vmem:[#allocation3] sm:$0xff]
      %s271 = scalar_lea.vmem [#allocation3], 8
      %v272 = vld [vmem:[%s271] sm:$0xff]
      %v273 = vstv %s142
      %vm274 = vcmp.gt.s32.totalorder %v160, %v273
      %v275 = vsel %vm274, 1, 0
      %276 = vset.pattern.permute.xlu0 0
      %277 = vperm.xlu0 %276, %v275
      %v278 = vpop.permute.xlu0 %277
      %vm279 = vcmp.eq.s32.totalorder %v278, 1
      %v280 = vld [vmem:[#allocation6] sm:$0xff]
      %v281 = vld [vmem:[#allocation6 + $0x8] sm:$0xff]
      %v282 = vunpack.c.l.bf16 %v280
      %v283 = vunpack.c.h.bf16 %v280
      %v284 = vunpack.c.l.bf16 %v281
      %v285 = vunpack.c.h.bf16 %v281
      %v286 = vpack.c.bf16 %v267, %v267
      %v319 = vunpack.c.l.b16 %v161
      %v320 = vunpack.c.h.b16 %v161
      %v321 = vunpack.c.l.b16 %v162
      %v322 = vunpack.c.h.b16 %v162
      %v323 = vunpack.c.l.b16 %v163
      %v324 = vunpack.c.h.b16 %v163
      %v325 = vunpack.c.l.b16 %v164
      %v326 = vunpack.c.h.b16 %v164
      %v327 = vunpack.c.l.b16 %v165
      %v328 = vunpack.c.h.b16 %v165
      %v329 = vunpack.c.l.b16 %v166
      %v330 = vunpack.c.h.b16 %v166
      %v331 = vunpack.c.l.b16 %v167
      %v332 = vunpack.c.h.b16 %v167
      %v333 = vunpack.c.l.b16 %v168
      %v334 = vunpack.c.h.b16 %v168
      %v335 = vunpack.c.l.b16 %v169
      %v336 = vunpack.c.h.b16 %v169
      %v337 = vunpack.c.l.b16 %v170
      %v338 = vunpack.c.h.b16 %v170
      %v339 = vunpack.c.l.b16 %v171
      %v340 = vunpack.c.h.b16 %v171
      %v341 = vunpack.c.l.b16 %v172
      %v342 = vunpack.c.h.b16 %v172
      %v343 = vunpack.c.l.b16 %v173
      %v344 = vunpack.c.h.b16 %v173
      %v345 = vunpack.c.l.b16 %v174
      %v346 = vunpack.c.h.b16 %v174
      %v347 = vunpack.c.l.b16 %v175
      %v348 = vunpack.c.h.b16 %v175
      %v349 = vunpack.c.l.b16 %v176
      %v350 = vunpack.c.h.b16 %v176
      %v351 = vunpack.c.l.b16 %v177
      %v352 = vunpack.c.h.b16 %v177
      %v353 = vunpack.c.l.b16 %v178
      %v354 = vunpack.c.h.b16 %v178
      %v355 = vunpack.c.l.b16 %v179
      %v356 = vunpack.c.h.b16 %v179
      %v357 = vunpack.c.l.b16 %v180
      %v358 = vunpack.c.h.b16 %v180
      %v359 = vunpack.c.l.b16 %v181
      %v360 = vunpack.c.h.b16 %v181
      %v361 = vunpack.c.l.b16 %v182
      %v362 = vunpack.c.h.b16 %v182
      %v363 = vunpack.c.l.b16 %v183
      %v364 = vunpack.c.h.b16 %v183
      %v365 = vunpack.c.l.b16 %v184
      %v366 = vunpack.c.h.b16 %v184
      %v367 = vunpack.c.l.b16 %v185
      %v368 = vunpack.c.h.b16 %v185
      %v369 = vunpack.c.l.b16 %v186
      %v370 = vunpack.c.h.b16 %v186
      %v371 = vunpack.c.l.b16 %v187
      %v372 = vunpack.c.h.b16 %v187
      %v373 = vunpack.c.l.b16 %v188
      %v374 = vunpack.c.h.b16 %v188
      %v375 = vunpack.c.l.b16 %v189
      %v376 = vunpack.c.h.b16 %v189
      %v377 = vunpack.c.l.b16 %v190
      %v378 = vunpack.c.h.b16 %v190
      %v379 = vunpack.c.l.b16 %v191
      %v380 = vunpack.c.h.b16 %v191
      %v381 = vunpack.c.l.b16 %v192
      %v382 = vunpack.c.h.b16 %v192
      %v383 = vpack.c.b16 %v323, %v319
      %v384 = vpack.c.b16 %v324, %v320
      %v385 = vpack.c.b16 %v325, %v321
      %v386 = vpack.c.b16 %v326, %v322
      %v387 = vpack.c.b16 %v331, %v327
      %v388 = vpack.c.b16 %v332, %v328
      %v389 = vpack.c.b16 %v333, %v329
      %v390 = vpack.c.b16 %v334, %v330
      %v391 = vpack.c.b16 %v339, %v335
      %v392 = vpack.c.b16 %v340, %v336
      %v393 = vpack.c.b16 %v341, %v337
      %v394 = vpack.c.b16 %v342, %v338
      %v395 = vpack.c.b16 %v347, %v343
      %v396 = vpack.c.b16 %v348, %v344
      %v397 = vpack.c.b16 %v349, %v345
      %v398 = vpack.c.b16 %v350, %v346
      %v399 = vpack.c.b16 %v355, %v351
      %v400 = vpack.c.b16 %v356, %v352
      %v401 = vpack.c.b16 %v357, %v353
      %v402 = vpack.c.b16 %v358, %v354
      %v403 = vpack.c.b16 %v363, %v359
      %v404 = vpack.c.b16 %v364, %v360
      %v405 = vpack.c.b16 %v365, %v361
      %v406 = vpack.c.b16 %v366, %v362
      %v407 = vpack.c.b16 %v371, %v367
      %v408 = vpack.c.b16 %v372, %v368
      %v409 = vpack.c.b16 %v373, %v369
      %v410 = vpack.c.b16 %v374, %v370
      %v411 = vpack.c.b16 %v379, %v375
      %v412 = vpack.c.b16 %v380, %v376
      %v413 = vpack.c.b16 %v381, %v377
      %v414 = vpack.c.b16 %v382, %v378
      %447 = vmatpush.bf16.msra.mxu0 %v411
      %448 = vmatpush.bf16.msra.mxu0 %v407
      %449 = vmatpush.bf16.msra.mxu0 %v403
      %450 = vmatpush.bf16.msra.mxu0 %v399
      %451 = vmatpush.bf16.msra.mxu0 %v395
      %452 = vmatpush.bf16.msra.mxu0 %v391
      %453 = vmatpush.bf16.msra.mxu0 %v387
      %454 = vmatpush.bf16.msra.mxu0 %v383
      %455 = vmatmul.bf16.gmra.mxu0 %v286
      %v456 = vpop.f32.mrf.mxu0
      %v457 = vadd.f32 0.0, %v456
      %v458 = vpop.f32.mrf.mxu0
      %459 = vdwg.mxu0
      %460 = vmatpush.bf16.msra.mxu0 %v412
      %461 = vmatpush.bf16.msra.mxu0 %v408
      %462 = vmatpush.bf16.msra.mxu0 %v404
      %463 = vmatpush.bf16.msra.mxu0 %v400
      %464 = vmatpush.bf16.msra.mxu0 %v396
      %465 = vmatpush.bf16.msra.mxu0 %v392
      %466 = vmatpush.bf16.msra.mxu0 %v388
      %467 = vmatpush.bf16.msra.mxu0 %v384
      %468 = vmatmul.bf16.gmra.mxu0 %v286
      %v469 = vpop.f32.mrf.mxu0
      %v470 = vadd.f32 0.0, %v469
      %v471 = vpop.f32.mrf.mxu0
      %472 = vdwg.mxu0
      %473 = vmatpush.bf16.msra.mxu0 %v413
      %474 = vmatpush.bf16.msra.mxu0 %v409
      %475 = vmatpush.bf16.msra.mxu0 %v405
      %476 = vmatpush.bf16.msra.mxu0 %v401
      %477 = vmatpush.bf16.msra.mxu0 %v397
      %478 = vmatpush.bf16.msra.mxu0 %v393
      %479 = vmatpush.bf16.msra.mxu0 %v389
      %480 = vmatpush.bf16.msra.mxu0 %v385
      %481 = vmatmul.bf16.gmra.mxu0 %v286
      %v482 = vpop.f32.mrf.mxu0
      %v483 = vadd.f32 0.0, %v482
      %v484 = vpop.f32.mrf.mxu0
      %485 = vdwg.mxu0
      %486 = vmatpush.bf16.msra.mxu0 %v414
      %487 = vmatpush.bf16.msra.mxu0 %v410
      %488 = vmatpush.bf16.msra.mxu0 %v406
      %489 = vmatpush.bf16.msra.mxu0 %v402
      %490 = vmatpush.bf16.msra.mxu0 %v398
      %491 = vmatpush.bf16.msra.mxu0 %v394
      %492 = vmatpush.bf16.msra.mxu0 %v390
      %493 = vmatpush.bf16.msra.mxu0 %v386
      %494 = vmatmul.bf16.gmra.mxu0 %v286
      %v495 = vpop.f32.mrf.mxu0
      %v496 = vadd.f32 0.0, %v495
      %v497 = vpop.f32.mrf.mxu0
      %498 = vdwg.mxu0
      %v499 = vadd.f32 %v282, %v457
      %v500 = vadd.f32 %v283, %v470
      %v501 = vadd.f32 %v284, %v483
      %v502 = vadd.f32 %v285, %v496
      %v503 = vxor.u32 %v499, 2147483648
      %v504 = vmul.f32 %v503, 1.442695
      %v505 = vpow.pop %v504
      %v506 = vadd.f32 %v505, 1.0
      %v507 = vrcp.pop %v506
      %v508 = vmul.f32 %v506, %v507
      %v509 = vsub.f32 1.0, %v508
      %v510 = vmul.f32 %v507, %v509
      %v511 = vadd.f32 %v507, %v510
      %vm512 = vweird.f32 %v506
      %vm513 = vweird.f32 %v507
      %vm514 = vmor %vm512, %vm513
      %v515 = vsel %vm514, %v507, %v511
      %v516 = vand.u32 2147483647, %v506
      %vm517 = vcmp.eq.f32.partialorder %v516, 8.507059e+37
      %v518 = vand.u32 %v506, 2147483648
      %v519 = vor.u32 1.1754944e-38, %v518
      %v520 = vsel %vm517, %v519, %v515
      %v521 = vmul.f32 1.0, %v520
      %v522 = vxor.u32 %v500, 2147483648
      %v523 = vmul.f32 %v522, 1.442695
      %v524 = vpow.pop %v523
      %v525 = vadd.f32 %v524, 1.0
      %v526 = vrcp.pop %v525
      %v527 = vmul.f32 %v525, %v526
      %v528 = vsub.f32 1.0, %v527
      %v529 = vmul.f32 %v526, %v528
      %v530 = vadd.f32 %v526, %v529
      %vm531 = vweird.f32 %v525
      %vm532 = vweird.f32 %v526
      %vm533 = vmor %vm531, %vm532
      %v534 = vsel %vm533, %v526, %v530
      %v535 = vand.u32 2147483647, %v525
      %vm536 = vcmp.eq.f32.partialorder %v535, 8.507059e+37
      %v537 = vand.u32 %v525, 2147483648
      %v538 = vor.u32 1.1754944e-38, %v537
      %v539 = vsel %vm536, %v538, %v534
      %v540 = vmul.f32 1.0, %v539
      %v541 = vtanh.pop %v501
      %v542 = vxor.u32 %v502, 2147483648
      %v543 = vmul.f32 %v542, 1.442695
      %v544 = vpow.pop %v543
      %v545 = vadd.f32 %v544, 1.0
      %v546 = vrcp.pop %v545
      %v547 = vmul.f32 %v545, %v546
      %v548 = vsub.f32 1.0, %v547
      %v549 = vmul.f32 %v546, %v548
      %v550 = vadd.f32 %v546, %v549
      %vm551 = vweird.f32 %v545
      %vm552 = vweird.f32 %v546
      %vm553 = vmor %vm551, %vm552
      %v554 = vsel %vm553, %v546, %v550
      %v555 = vand.u32 2147483647, %v545
      %vm556 = vcmp.eq.f32.partialorder %v555, 8.507059e+37
      %v557 = vand.u32 %v545, 2147483648
      %v558 = vor.u32 1.1754944e-38, %v557
      %v559 = vsel %vm556, %v558, %v554
      %v560 = vmul.f32 1.0, %v559
      %v561 = vmul.f32 %v540, %v270
      %v562 = vmul.f32 %v521, %v541
      %v563 = vadd.f32 %v561, %v562
      %v564 = vtanh.pop %v563
      %v565 = vmul.f32 %v560, %v564
      %v566 = vsel %vm279, %v565, %v267
      %v567 = vsel %vm279, %v563, %v270
      %v568 = vpack.c.bf16 %v565, %v565
      %v569 = vpack.c.bf16 %v269, %v269
      %v602 = vunpack.c.l.b16 %v225
      %v603 = vunpack.c.h.b16 %v225
      %v604 = vunpack.c.l.b16 %v226
      %v605 = vunpack.c.h.b16 %v226
      %v606 = vunpack.c.l.b16 %v227
      %v607 = vunpack.c.h.b16 %v227
      %v608 = vunpack.c.l.b16 %v228
      %v609 = vunpack.c.h.b16 %v228
      %v610 = vunpack.c.l.b16 %v229
      %v611 = vunpack.c.h.b16 %v229
      %v612 = vunpack.c.l.b16 %v230
      %v613 = vunpack.c.h.b16 %v230
      %v614 = vunpack.c.l.b16 %v231
      %v615 = vunpack.c.h.b16 %v231
      %v616 = vunpack.c.l.b16 %v232
      %v617 = vunpack.c.h.b16 %v232
      %v618 = vunpack.c.l.b16 %v233
      %v619 = vunpack.c.h.b16 %v233
      %v620 = vunpack.c.l.b16 %v234
      %v621 = vunpack.c.h.b16 %v234
      %v622 = vunpack.c.l.b16 %v235
      %v623 = vunpack.c.h.b16 %v235
      %v624 = vunpack.c.l.b16 %v236
      %v625 = vunpack.c.h.b16 %v236
      %v626 = vunpack.c.l.b16 %v237
      %v627 = vunpack.c.h.b16 %v237
      %v628 = vunpack.c.l.b16 %v238
      %v629 = vunpack.c.h.b16 %v238
      %v630 = vunpack.c.l.b16 %v239
      %v631 = vunpack.c.h.b16 %v239
      %v632 = vunpack.c.l.b16 %v240
      %v633 = vunpack.c.h.b16 %v240
      %v634 = vunpack.c.l.b16 %v241
      %v635 = vunpack.c.h.b16 %v241
      %v636 = vunpack.c.l.b16 %v242
      %v637 = vunpack.c.h.b16 %v242
      %v638 = vunpack.c.l.b16 %v243
      %v639 = vunpack.c.h.b16 %v243
      %v640 = vunpack.c.l.b16 %v244
      %v641 = vunpack.c.h.b16 %v244
      %v642 = vunpack.c.l.b16 %v245
      %v643 = vunpack.c.h.b16 %v245
      %v644 = vunpack.c.l.b16 %v246
      %v645 = vunpack.c.h.b16 %v246
      %v646 = vunpack.c.l.b16 %v247
      %v647 = vunpack.c.h.b16 %v247
      %v648 = vunpack.c.l.b16 %v248
      %v649 = vunpack.c.h.b16 %v248
      %v650 = vunpack.c.l.b16 %v249
      %v651 = vunpack.c.h.b16 %v249
      %v652 = vunpack.c.l.b16 %v250
      %v653 = vunpack.c.h.b16 %v250
      %v654 = vunpack.c.l.b16 %v251
      %v655 = vunpack.c.h.b16 %v251
      %v656 = vunpack.c.l.b16 %v252
      %v657 = vunpack.c.h.b16 %v252
      %v658 = vunpack.c.l.b16 %v253
      %v659 = vunpack.c.h.b16 %v253
      %v660 = vunpack.c.l.b16 %v254
      %v661 = vunpack.c.h.b16 %v254
      %v662 = vunpack.c.l.b16 %v255
      %v663 = vunpack.c.h.b16 %v255
      %v664 = vunpack.c.l.b16 %v256
      %v665 = vunpack.c.h.b16 %v256
      %v666 = vpack.c.b16 %v606, %v602
      %v667 = vpack.c.b16 %v607, %v603
      %v668 = vpack.c.b16 %v608, %v604
      %v669 = vpack.c.b16 %v609, %v605
      %v670 = vpack.c.b16 %v614, %v610
      %v671 = vpack.c.b16 %v615, %v611
      %v672 = vpack.c.b16 %v616, %v612
      %v673 = vpack.c.b16 %v617, %v613
      %v674 = vpack.c.b16 %v622, %v618
      %v675 = vpack.c.b16 %v623, %v619
      %v676 = vpack.c.b16 %v624, %v620
      %v677 = vpack.c.b16 %v625, %v621
      %v678 = vpack.c.b16 %v630, %v626
      %v679 = vpack.c.b16 %v631, %v627
      %v680 = vpack.c.b16 %v632, %v628
      %v681 = vpack.c.b16 %v633, %v629
      %v682 = vpack.c.b16 %v638, %v634
      %v683 = vpack.c.b16 %v639, %v635
      %v684 = vpack.c.b16 %v640, %v636
      %v685 = vpack.c.b16 %v641, %v637
      %v686 = vpack.c.b16 %v646, %v642
      %v687 = vpack.c.b16 %v647, %v643
      %v688 = vpack.c.b16 %v648, %v644
      %v689 = vpack.c.b16 %v649, %v645
      %v690 = vpack.c.b16 %v654, %v650
      %v691 = vpack.c.b16 %v655, %v651
      %v692 = vpack.c.b16 %v656, %v652
      %v693 = vpack.c.b16 %v657, %v653
      %v694 = vpack.c.b16 %v662, %v658
      %v695 = vpack.c.b16 %v663, %v659
      %v696 = vpack.c.b16 %v664, %v660
      %v697 = vpack.c.b16 %v665, %v661
      %730 = vmatpush.bf16.msra.mxu0 %v694
      %731 = vmatpush.bf16.msra.mxu0 %v690
      %732 = vmatpush.bf16.msra.mxu0 %v686
      %733 = vmatpush.bf16.msra.mxu0 %v682
      %734 = vmatpush.bf16.msra.mxu0 %v678
      %735 = vmatpush.bf16.msra.mxu0 %v674
      %736 = vmatpush.bf16.msra.mxu0 %v670
      %737 = vmatpush.bf16.msra.mxu0 %v666
      %738 = vmatmul.bf16.gmra.mxu0 %v569
      %v739 = vpop.f32.mrf.mxu0
      %v740 = vadd.f32 0.0, %v739
      %v741 = vpop.f32.mrf.mxu0
      %742 = vdwg.mxu0
      %743 = vmatpush.bf16.msra.mxu0 %v695
      %744 = vmatpush.bf16.msra.mxu0 %v691
      %745 = vmatpush.bf16.msra.mxu0 %v687
      %746 = vmatpush.bf16.msra.mxu0 %v683
      %747 = vmatpush.bf16.msra.mxu0 %v679
      %748 = vmatpush.bf16.msra.mxu0 %v675
      %749 = vmatpush.bf16.msra.mxu0 %v671
      %750 = vmatpush.bf16.msra.mxu0 %v667
      %751 = vmatmul.bf16.gmra.mxu0 %v569
      %v752 = vpop.f32.mrf.mxu0
      %v753 = vadd.f32 0.0, %v752
      %v754 = vpop.f32.mrf.mxu0
      %755 = vdwg.mxu0
      %756 = vmatpush.bf16.msra.mxu0 %v696
      %757 = vmatpush.bf16.msra.mxu0 %v692
      %758 = vmatpush.bf16.msra.mxu0 %v688
      %759 = vmatpush.bf16.msra.mxu0 %v684
      %760 = vmatpush.bf16.msra.mxu0 %v680
      %761 = vmatpush.bf16.msra.mxu0 %v676
      %762 = vmatpush.bf16.msra.mxu0 %v672
      %763 = vmatpush.bf16.msra.mxu0 %v668
      %764 = vmatmul.bf16.gmra.mxu0 %v569
      %v765 = vpop.f32.mrf.mxu0
      %v766 = vadd.f32 0.0, %v765
      %v767 = vpop.f32.mrf.mxu0
      %768 = vdwg.mxu0
      %769 = vmatpush.bf16.msra.mxu0 %v697
      %770 = vmatpush.bf16.msra.mxu0 %v693
      %771 = vmatpush.bf16.msra.mxu0 %v689
      %772 = vmatpush.bf16.msra.mxu0 %v685
      %773 = vmatpush.bf16.msra.mxu0 %v681
      %774 = vmatpush.bf16.msra.mxu0 %v677
      %775 = vmatpush.bf16.msra.mxu0 %v673
      %776 = vmatpush.bf16.msra.mxu0 %v669
      %777 = vmatmul.bf16.gmra.mxu0 %v569
      %v778 = vpop.f32.mrf.mxu0
      %v779 = vadd.f32 0.0, %v778
      %v780 = vpop.f32.mrf.mxu0
      %781 = vdwg.mxu0
      %v814 = vunpack.c.l.b16 %v193
      %v815 = vunpack.c.h.b16 %v193
      %v816 = vunpack.c.l.b16 %v194
      %v817 = vunpack.c.h.b16 %v194
      %v818 = vunpack.c.l.b16 %v195
      %v819 = vunpack.c.h.b16 %v195
      %v820 = vunpack.c.l.b16 %v196
      %v821 = vunpack.c.h.b16 %v196
      %v822 = vunpack.c.l.b16 %v197
      %v823 = vunpack.c.h.b16 %v197
      %v824 = vunpack.c.l.b16 %v198
      %v825 = vunpack.c.h.b16 %v198
      %v826 = vunpack.c.l.b16 %v199
      %v827 = vunpack.c.h.b16 %v199
      %v828 = vunpack.c.l.b16 %v200
      %v829 = vunpack.c.h.b16 %v200
      %v830 = vunpack.c.l.b16 %v201
      %v831 = vunpack.c.h.b16 %v201
      %v832 = vunpack.c.l.b16 %v202
      %v833 = vunpack.c.h.b16 %v202
      %v834 = vunpack.c.l.b16 %v203
      %v835 = vunpack.c.h.b16 %v203
      %v836 = vunpack.c.l.b16 %v204
      %v837 = vunpack.c.h.b16 %v204
      %v838 = vunpack.c.l.b16 %v205
      %v839 = vunpack.c.h.b16 %v205
      %v840 = vunpack.c.l.b16 %v206
      %v841 = vunpack.c.h.b16 %v206
      %v842 = vunpack.c.l.b16 %v207
      %v843 = vunpack.c.h.b16 %v207
      %v844 = vunpack.c.l.b16 %v208
      %v845 = vunpack.c.h.b16 %v208
      %v846 = vunpack.c.l.b16 %v209
      %v847 = vunpack.c.h.b16 %v209
      %v848 = vunpack.c.l.b16 %v210
      %v849 = vunpack.c.h.b16 %v210
      %v850 = vunpack.c.l.b16 %v211
      %v851 = vunpack.c.h.b16 %v211
      %v852 = vunpack.c.l.b16 %v212
      %v853 = vunpack.c.h.b16 %v212
      %v854 = vunpack.c.l.b16 %v213
      %v855 = vunpack.c.h.b16 %v213
      %v856 = vunpack.c.l.b16 %v214
      %v857 = vunpack.c.h.b16 %v214
      %v858 = vunpack.c.l.b16 %v215
      %v859 = vunpack.c.h.b16 %v215
      %v860 = vunpack.c.l.b16 %v216
      %v861 = vunpack.c.h.b16 %v216
      %v862 = vunpack.c.l.b16 %v217
      %v863 = vunpack.c.h.b16 %v217
      %v864 = vunpack.c.l.b16 %v218
      %v865 = vunpack.c.h.b16 %v218
      %v866 = vunpack.c.l.b16 %v219
      %v867 = vunpack.c.h.b16 %v219
      %v868 = vunpack.c.l.b16 %v220
      %v869 = vunpack.c.h.b16 %v220
      %v870 = vunpack.c.l.b16 %v221
      %v871 = vunpack.c.h.b16 %v221
      %v872 = vunpack.c.l.b16 %v222
      %v873 = vunpack.c.h.b16 %v222
      %v874 = vunpack.c.l.b16 %v223
      %v875 = vunpack.c.h.b16 %v223
      %v876 = vunpack.c.l.b16 %v224
      %v877 = vunpack.c.h.b16 %v224
      %v878 = vpack.c.b16 %v818, %v814
      %v879 = vpack.c.b16 %v819, %v815
      %v880 = vpack.c.b16 %v820, %v816
      %v881 = vpack.c.b16 %v821, %v817
      %v882 = vpack.c.b16 %v826, %v822
      %v883 = vpack.c.b16 %v827, %v823
      %v884 = vpack.c.b16 %v828, %v824
      %v885 = vpack.c.b16 %v829, %v825
      %v886 = vpack.c.b16 %v834, %v830
      %v887 = vpack.c.b16 %v835, %v831
      %v888 = vpack.c.b16 %v836, %v832
      %v889 = vpack.c.b16 %v837, %v833
      %v890 = vpack.c.b16 %v842, %v838
      %v891 = vpack.c.b16 %v843, %v839
      %v892 = vpack.c.b16 %v844, %v840
      %v893 = vpack.c.b16 %v845, %v841
      %v894 = vpack.c.b16 %v850, %v846
      %v895 = vpack.c.b16 %v851, %v847
      %v896 = vpack.c.b16 %v852, %v848
      %v897 = vpack.c.b16 %v853, %v849
      %v898 = vpack.c.b16 %v858, %v854
      %v899 = vpack.c.b16 %v859, %v855
      %v900 = vpack.c.b16 %v860, %v856
      %v901 = vpack.c.b16 %v861, %v857
      %v902 = vpack.c.b16 %v866, %v862
      %v903 = vpack.c.b16 %v867, %v863
      %v904 = vpack.c.b16 %v868, %v864
      %v905 = vpack.c.b16 %v869, %v865
      %v906 = vpack.c.b16 %v874, %v870
      %v907 = vpack.c.b16 %v875, %v871
      %v908 = vpack.c.b16 %v876, %v872
      %v909 = vpack.c.b16 %v877, %v873
      %942 = vmatpush.bf16.msra.mxu0 %v906
      %943 = vmatpush.bf16.msra.mxu0 %v902
      %944 = vmatpush.bf16.msra.mxu0 %v898
      %945 = vmatpush.bf16.msra.mxu0 %v894
      %946 = vmatpush.bf16.msra.mxu0 %v890
      %947 = vmatpush.bf16.msra.mxu0 %v886
      %948 = vmatpush.bf16.msra.mxu0 %v882
      %949 = vmatpush.bf16.msra.mxu0 %v878
      %950 = vmatmul.bf16.gmra.mxu0 %v568
      %v951 = vpop.f32.mrf.mxu0
      %v952 = vadd.f32 %v740, %v951
      %v953 = vpop.f32.mrf.mxu0
      %954 = vdwg.mxu0
      %955 = vmatpush.bf16.msra.mxu0 %v907
      %956 = vmatpush.bf16.msra.mxu0 %v903
      %957 = vmatpush.bf16.msra.mxu0 %v899
      %958 = vmatpush.bf16.msra.mxu0 %v895
      %959 = vmatpush.bf16.msra.mxu0 %v891
      %960 = vmatpush.bf16.msra.mxu0 %v887
      %961 = vmatpush.bf16.msra.mxu0 %v883
      %962 = vmatpush.bf16.msra.mxu0 %v879
      %963 = vmatmul.bf16.gmra.mxu0 %v568
      %v964 = vpop.f32.mrf.mxu0
      %v965 = vadd.f32 %v753, %v964
      %v966 = vpop.f32.mrf.mxu0
      %967 = vdwg.mxu0
      %968 = vmatpush.bf16.msra.mxu0 %v908
      %969 = vmatpush.bf16.msra.mxu0 %v904
      %970 = vmatpush.bf16.msra.mxu0 %v900
      %971 = vmatpush.bf16.msra.mxu0 %v896
      %972 = vmatpush.bf16.msra.mxu0 %v892
      %973 = vmatpush.bf16.msra.mxu0 %v888
      %974 = vmatpush.bf16.msra.mxu0 %v884
      %975 = vmatpush.bf16.msra.mxu0 %v880
      %976 = vmatmul.bf16.gmra.mxu0 %v568
      %v977 = vpop.f32.mrf.mxu0
      %v978 = vadd.f32 %v766, %v977
      %v979 = vpop.f32.mrf.mxu0
      %980 = vdwg.mxu0
      %981 = vmatpush.bf16.msra.mxu0 %v909
      %982 = vmatpush.bf16.msra.mxu0 %v905
      %983 = vmatpush.bf16.msra.mxu0 %v901
      %984 = vmatpush.bf16.msra.mxu0 %v897
      %985 = vmatpush.bf16.msra.mxu0 %v893
      %986 = vmatpush.bf16.msra.mxu0 %v889
      %987 = vmatpush.bf16.msra.mxu0 %v885
      %988 = vmatpush.bf16.msra.mxu0 %v881
      %989 = vmatmul.bf16.gmra.mxu0 %v568
      %v990 = vpop.f32.mrf.mxu0
      %v991 = vadd.f32 %v779, %v990
      %v992 = vpop.f32.mrf.mxu0
      %993 = vdwg.mxu0
      %v994 = vadd.f32 %v952, %v259
      %v995 = vadd.f32 %v965, %v260
      %v996 = vadd.f32 %v978, %v261
      %v997 = vadd.f32 %v991, %v262
      %v998 = vxor.u32 %v994, 2147483648
      %v999 = vmul.f32 %v998, 1.442695
      %v1000 = vpow.pop %v999
      %v1001 = vadd.f32 %v1000, 1.0
      %v1002 = vrcp.pop %v1001
      %v1003 = vmul.f32 %v1001, %v1002
      %v1004 = vsub.f32 1.0, %v1003
      %v1005 = vmul.f32 %v1002, %v1004
      %v1006 = vadd.f32 %v1002, %v1005
      %vm1007 = vweird.f32 %v1001
      %vm1008 = vweird.f32 %v1002
      %vm1009 = vmor %vm1007, %vm1008
      %v1010 = vsel %vm1009, %v1002, %v1006
      %v1011 = vand.u32 2147483647, %v1001
      %vm1012 = vcmp.eq.f32.partialorder %v1011, 8.507059e+37
      %v1013 = vand.u32 %v1001, 2147483648
      %v1014 = vor.u32 1.1754944e-38, %v1013
      %v1015 = vsel %vm1012, %v1014, %v1010
      %v1016 = vmul.f32 1.0, %v1015
      %v1017 = vxor.u32 %v995, 2147483648
      %v1018 = vmul.f32 %v1017, 1.442695
      %v1019 = vpow.pop %v1018
      %v1020 = vadd.f32 %v1019, 1.0
      %v1021 = vrcp.pop %v1020
      %v1022 = vmul.f32 %v1020, %v1021
      %v1023 = vsub.f32 1.0, %v1022
      %v1024 = vmul.f32 %v1021, %v1023
      %v1025 = vadd.f32 %v1021, %v1024
      %vm1026 = vweird.f32 %v1020
      %vm1027 = vweird.f32 %v1021
      %vm1028 = vmor %vm1026, %vm1027
      %v1029 = vsel %vm1028, %v1021, %v1025
      %v1030 = vand.u32 2147483647, %v1020
      %vm1031 = vcmp.eq.f32.partialorder %v1030, 8.507059e+37
      %v1032 = vand.u32 %v1020, 2147483648
      %v1033 = vor.u32 1.1754944e-38, %v1032
      %v1034 = vsel %vm1031, %v1033, %v1029
      %v1035 = vmul.f32 1.0, %v1034
      %v1036 = vtanh.pop %v996
      %v1037 = vxor.u32 %v997, 2147483648
      %v1038 = vmul.f32 %v1037, 1.442695
      %v1039 = vpow.pop %v1038
      %v1040 = vadd.f32 %v1039, 1.0
      %v1041 = vrcp.pop %v1040
      %v1042 = vmul.f32 %v1040, %v1041
      %v1043 = vsub.f32 1.0, %v1042
      %v1044 = vmul.f32 %v1041, %v1043
      %v1045 = vadd.f32 %v1041, %v1044
      %vm1046 = vweird.f32 %v1040
      %vm1047 = vweird.f32 %v1041
      %vm1048 = vmor %vm1046, %vm1047
      %v1049 = vsel %vm1048, %v1041, %v1045
      %v1050 = vand.u32 2147483647, %v1040
      %vm1051 = vcmp.eq.f32.partialorder %v1050, 8.507059e+37
      %v1052 = vand.u32 %v1040, 2147483648
      %v1053 = vor.u32 1.1754944e-38, %v1052
      %v1054 = vsel %vm1051, %v1053, %v1049
      %v1055 = vmul.f32 1.0, %v1054
      %v1056 = vmul.f32 %v1035, %v272
      %v1057 = vmul.f32 %v1016, %v1036
      %v1058 = vadd.f32 %v1056, %v1057
      %v1059 = vtanh.pop %v1058
      %v1060 = vmul.f32 %v1055, %v1059
      %v1061 = vsel %vm279, %v1060, %v269
      %v1062 = vsel %vm279, %v1058, %v272
      %v1063 = vsel %vm279, %v1060, 0.0
      %1064 = vst [vmem:[#allocation17] sm:$0xff] %v1063
      %s1065 = sadd.s32 %s142, 1
      %v1066 = vstv %s1065
      %vm1067 = vcmp.gt.s32.totalorder %v160, %v1066
      %v1068 = vsel %vm1067, 1, 0
      %1069 = vset.pattern.permute.xlu0 0
      %1070 = vperm.xlu0 %1069, %v1068
      %v1071 = vpop.permute.xlu0 %1070
      %vm1072 = vcmp.eq.s32.totalorder %v1071, 1
      %s1073 = scalar_lea.vmem [#allocation6], 16
      %v1074 = vld [vmem:[%s1073] sm:$0xff]
      %v1075 = vld [vmem:[%s1073 + $0x8] sm:$0xff]
      %v1076 = vunpack.c.l.bf16 %v1074
      %v1077 = vunpack.c.h.bf16 %v1074
      %v1078 = vunpack.c.l.bf16 %v1075
      %v1079 = vunpack.c.h.bf16 %v1075
      %v1080 = vpack.c.bf16 %v566, %v566
      %1081 = vmatpush.bf16.msra.mxu0 %v411
      %1082 = vmatpush.bf16.msra.mxu0 %v407
      %1083 = vmatpush.bf16.msra.mxu0 %v403
      %1084 = vmatpush.bf16.msra.mxu0 %v399
      %1085 = vmatpush.bf16.msra.mxu0 %v395
      %1086 = vmatpush.bf16.msra.mxu0 %v391
      %1087 = vmatpush.bf16.msra.mxu0 %v387
      %1088 = vmatpush.bf16.msra.mxu0 %v383
      %1089 = vmatmul.bf16.gmra.mxu0 %v1080
      %v1090 = vpop.f32.mrf.mxu0
      %v1091 = vadd.f32 0.0, %v1090
      %v1092 = vpop.f32.mrf.mxu0
      %1093 = vdwg.mxu0
      %1094 = vmatpush.bf16.msra.mxu0 %v412
      %1095 = vmatpush.bf16.msra.mxu0 %v408
      %1096 = vmatpush.bf16.msra.mxu0 %v404
      %1097 = vmatpush.bf16.msra.mxu0 %v400
      %1098 = vmatpush.bf16.msra.mxu0 %v396
      %1099 = vmatpush.bf16.msra.mxu0 %v392
      %1100 = vmatpush.bf16.msra.mxu0 %v388
      %1101 = vmatpush.bf16.msra.mxu0 %v384
      %1102 = vmatmul.bf16.gmra.mxu0 %v1080
      %v1103 = vpop.f32.mrf.mxu0
      %v1104 = vadd.f32 0.0, %v1103
      %v1105 = vpop.f32.mrf.mxu0
      %1106 = vdwg.mxu0
      %1107 = vmatpush.bf16.msra.mxu0 %v413
      %1108 = vmatpush.bf16.msra.mxu0 %v409
      %1109 = vmatpush.bf16.msra.mxu0 %v405
      %1110 = vmatpush.bf16.msra.mxu0 %v401
      %1111 = vmatpush.bf16.msra.mxu0 %v397
      %1112 = vmatpush.bf16.msra.mxu0 %v393
      %1113 = vmatpush.bf16.msra.mxu0 %v389
      %1114 = vmatpush.bf16.msra.mxu0 %v385
      %1115 = vmatmul.bf16.gmra.mxu0 %v1080
      %v1116 = vpop.f32.mrf.mxu0
      %v1117 = vadd.f32 0.0, %v1116
      %v1118 = vpop.f32.mrf.mxu0
      %1119 = vdwg.mxu0
      %1120 = vmatpush.bf16.msra.mxu0 %v414
      %1121 = vmatpush.bf16.msra.mxu0 %v410
      %1122 = vmatpush.bf16.msra.mxu0 %v406
      %1123 = vmatpush.bf16.msra.mxu0 %v402
      %1124 = vmatpush.bf16.msra.mxu0 %v398
      %1125 = vmatpush.bf16.msra.mxu0 %v394
      %1126 = vmatpush.bf16.msra.mxu0 %v390
      %1127 = vmatpush.bf16.msra.mxu0 %v386
      %1128 = vmatmul.bf16.gmra.mxu0 %v1080
      %v1129 = vpop.f32.mrf.mxu0
      %v1130 = vadd.f32 0.0, %v1129
      %v1131 = vpop.f32.mrf.mxu0
      %1132 = vdwg.mxu0
      %v1133 = vadd.f32 %v1076, %v1091
      %v1134 = vadd.f32 %v1077, %v1104
      %v1135 = vadd.f32 %v1078, %v1117
      %v1136 = vadd.f32 %v1079, %v1130
      %v1137 = vxor.u32 %v1133, 2147483648
      %v1138 = vmul.f32 %v1137, 1.442695
      %v1139 = vpow.pop %v1138
      %v1140 = vadd.f32 %v1139, 1.0
      %v1141 = vrcp.pop %v1140
      %v1142 = vmul.f32 %v1140, %v1141
      %v1143 = vsub.f32 1.0, %v1142
      %v1144 = vmul.f32 %v1141, %v1143
      %v1145 = vadd.f32 %v1141, %v1144
      %vm1146 = vweird.f32 %v1140
      %vm1147 = vweird.f32 %v1141
      %vm1148 = vmor %vm1146, %vm1147
      %v1149 = vsel %vm1148, %v1141, %v1145
      %v1150 = vand.u32 2147483647, %v1140
      %vm1151 = vcmp.eq.f32.partialorder %v1150, 8.507059e+37
      %v1152 = vand.u32 %v1140, 2147483648
      %v1153 = vor.u32 1.1754944e-38, %v1152
      %v1154 = vsel %vm1151, %v1153, %v1149
      %v1155 = vmul.f32 1.0, %v1154
      %v1156 = vxor.u32 %v1134, 2147483648
      %v1157 = vmul.f32 %v1156, 1.442695
      %v1158 = vpow.pop %v1157
      %v1159 = vadd.f32 %v1158, 1.0
      %v1160 = vrcp.pop %v1159
      %v1161 = vmul.f32 %v1159, %v1160
      %v1162 = vsub.f32 1.0, %v1161
      %v1163 = vmul.f32 %v1160, %v1162
      %v1164 = vadd.f32 %v1160, %v1163
      %vm1165 = vweird.f32 %v1159
      %vm1166 = vweird.f32 %v1160
      %vm1167 = vmor %vm1165, %vm1166
      %v1168 = vsel %vm1167, %v1160, %v1164
      %v1169 = vand.u32 2147483647, %v1159
      %vm1170 = vcmp.eq.f32.partialorder %v1169, 8.507059e+37
      %v1171 = vand.u32 %v1159, 2147483648
      %v1172 = vor.u32 1.1754944e-38, %v1171
      %v1173 = vsel %vm1170, %v1172, %v1168
      %v1174 = vmul.f32 1.0, %v1173
      %v1175 = vtanh.pop %v1135
      %v1176 = vxor.u32 %v1136, 2147483648
      %v1177 = vmul.f32 %v1176, 1.442695
      %v1178 = vpow.pop %v1177
      %v1179 = vadd.f32 %v1178, 1.0
      %v1180 = vrcp.pop %v1179
      %v1181 = vmul.f32 %v1179, %v1180
      %v1182 = vsub.f32 1.0, %v1181
      %v1183 = vmul.f32 %v1180, %v1182
      %v1184 = vadd.f32 %v1180, %v1183
      %vm1185 = vweird.f32 %v1179
      %vm1186 = vweird.f32 %v1180
      %vm1187 = vmor %vm1185, %vm1186
      %v1188 = vsel %vm1187, %v1180, %v1184
      %v1189 = vand.u32 2147483647, %v1179
      %vm1190 = vcmp.eq.f32.partialorder %v1189, 8.507059e+37
      %v1191 = vand.u32 %v1179, 2147483648
      %v1192 = vor.u32 1.1754944e-38, %v1191
      %v1193 = vsel %vm1190, %v1192, %v1188
      %v1194 = vmul.f32 1.0, %v1193
      %v1195 = vmul.f32 %v1174, %v567
      %v1196 = vmul.f32 %v1155, %v1175
      %v1197 = vadd.f32 %v1195, %v1196
      %v1198 = vtanh.pop %v1197
      %v1199 = vmul.f32 %v1194, %v1198
      %v1200 = vsel %vm1072, %v1199, %v566
      %v1201 = vsel %vm1072, %v1197, %v567
      %v1202 = vpack.c.bf16 %v1199, %v1199
      %v1203 = vpack.c.bf16 %v1061, %v1061
      %1204 = vmatpush.bf16.msra.mxu0 %v694
      %1205 = vmatpush.bf16.msra.mxu0 %v690
      %1206 = vmatpush.bf16.msra.mxu0 %v686
      %1207 = vmatpush.bf16.msra.mxu0 %v682
      %1208 = vmatpush.bf16.msra.mxu0 %v678
      %1209 = vmatpush.bf16.msra.mxu0 %v674
      %1210 = vmatpush.bf16.msra.mxu0 %v670
      %1211 = vmatpush.bf16.msra.mxu0 %v666
      %1212 = vmatmul.bf16.gmra.mxu0 %v1203
      %v1213 = vpop.f32.mrf.mxu0
      %v1214 = vadd.f32 0.0, %v1213
      %v1215 = vpop.f32.mrf.mxu0
      %1216 = vdwg.mxu0
      %1217 = vmatpush.bf16.msra.mxu0 %v695
      %1218 = vmatpush.bf16.msra.mxu0 %v691
      %1219 = vmatpush.bf16.msra.mxu0 %v687
      %1220 = vmatpush.bf16.msra.mxu0 %v683
      %1221 = vmatpush.bf16.msra.mxu0 %v679
      %1222 = vmatpush.bf16.msra.mxu0 %v675
      %1223 = vmatpush.bf16.msra.mxu0 %v671
      %1224 = vmatpush.bf16.msra.mxu0 %v667
      %1225 = vmatmul.bf16.gmra.mxu0 %v1203
      %v1226 = vpop.f32.mrf.mxu0
      %v1227 = vadd.f32 0.0, %v1226
      %v1228 = vpop.f32.mrf.mxu0
      %1229 = vdwg.mxu0
      %1230 = vmatpush.bf16.msra.mxu0 %v696
      %1231 = vmatpush.bf16.msra.mxu0 %v692
      %1232 = vmatpush.bf16.msra.mxu0 %v688
      %1233 = vmatpush.bf16.msra.mxu0 %v684
      %1234 = vmatpush.bf16.msra.mxu0 %v680
      %1235 = vmatpush.bf16.msra.mxu0 %v676
      %1236 = vmatpush.bf16.msra.mxu0 %v672
      %1237 = vmatpush.bf16.msra.mxu0 %v668
      %1238 = vmatmul.bf16.gmra.mxu0 %v1203
      %v1239 = vpop.f32.mrf.mxu0
      %v1240 = vadd.f32 0.0, %v1239
      %v1241 = vpop.f32.mrf.mxu0
      %1242 = vdwg.mxu0
      %1243 = vmatpush.bf16.msra.mxu0 %v697
      %1244 = vmatpush.bf16.msra.mxu0 %v693
      %1245 = vmatpush.bf16.msra.mxu0 %v689
      %1246 = vmatpush.bf16.msra.mxu0 %v685
      %1247 = vmatpush.bf16.msra.mxu0 %v681
      %1248 = vmatpush.bf16.msra.mxu0 %v677
      %1249 = vmatpush.bf16.msra.mxu0 %v673
      %1250 = vmatpush.bf16.msra.mxu0 %v669
      %1251 = vmatmul.bf16.gmra.mxu0 %v1203
      %v1252 = vpop.f32.mrf.mxu0
      %v1253 = vadd.f32 0.0, %v1252
      %v1254 = vpop.f32.mrf.mxu0
      %1255 = vdwg.mxu0
      %1256 = vmatpush.bf16.msra.mxu0 %v906
      %1257 = vmatpush.bf16.msra.mxu0 %v902
      %1258 = vmatpush.bf16.msra.mxu0 %v898
      %1259 = vmatpush.bf16.msra.mxu0 %v894
      %1260 = vmatpush.bf16.msra.mxu0 %v890
      %1261 = vmatpush.bf16.msra.mxu0 %v886
      %1262 = vmatpush.bf16.msra.mxu0 %v882
      %1263 = vmatpush.bf16.msra.mxu0 %v878
      %1264 = vmatmul.bf16.gmra.mxu0 %v1202
      %v1265 = vpop.f32.mrf.mxu0
      %v1266 = vadd.f32 %v1214, %v1265
      %v1267 = vpop.f32.mrf.mxu0
      %1268 = vdwg.mxu0
      %1269 = vmatpush.bf16.msra.mxu0 %v907
      %1270 = vmatpush.bf16.msra.mxu0 %v903
      %1271 = vmatpush.bf16.msra.mxu0 %v899
      %1272 = vmatpush.bf16.msra.mxu0 %v895
      %1273 = vmatpush.bf16.msra.mxu0 %v891
      %1274 = vmatpush.bf16.msra.mxu0 %v887
      %1275 = vmatpush.bf16.msra.mxu0 %v883
      %1276 = vmatpush.bf16.msra.mxu0 %v879
      %1277 = vmatmul.bf16.gmra.mxu0 %v1202
      %v1278 = vpop.f32.mrf.mxu0
      %v1279 = vadd.f32 %v1227, %v1278
      %v1280 = vpop.f32.mrf.mxu0
      %1281 = vdwg.mxu0
      %1282 = vmatpush.bf16.msra.mxu0 %v908
      %1283 = vmatpush.bf16.msra.mxu0 %v904
      %1284 = vmatpush.bf16.msra.mxu0 %v900
      %1285 = vmatpush.bf16.msra.mxu0 %v896
      %1286 = vmatpush.bf16.msra.mxu0 %v892
      %1287 = vmatpush.bf16.msra.mxu0 %v888
      %1288 = vmatpush.bf16.msra.mxu0 %v884
      %1289 = vmatpush.bf16.msra.mxu0 %v880
      %1290 = vmatmul.bf16.gmra.mxu0 %v1202
      %v1291 = vpop.f32.mrf.mxu0
      %v1292 = vadd.f32 %v1240, %v1291
      %v1293 = vpop.f32.mrf.mxu0
      %1294 = vdwg.mxu0
      %1295 = vmatpush.bf16.msra.mxu0 %v909
      %1296 = vmatpush.bf16.msra.mxu0 %v905
      %1297 = vmatpush.bf16.msra.mxu0 %v901
      %1298 = vmatpush.bf16.msra.mxu0 %v897
      %1299 = vmatpush.bf16.msra.mxu0 %v893
      %1300 = vmatpush.bf16.msra.mxu0 %v889
      %1301 = vmatpush.bf16.msra.mxu0 %v885
      %1302 = vmatpush.bf16.msra.mxu0 %v881
      %1303 = vmatmul.bf16.gmra.mxu0 %v1202
      %v1304 = vpop.f32.mrf.mxu0
      %v1305 = vadd.f32 %v1253, %v1304
      %v1306 = vpop.f32.mrf.mxu0
      %1307 = vdwg.mxu0
      %v1308 = vadd.f32 %v1266, %v259
      %v1309 = vadd.f32 %v1279, %v260
      %v1310 = vadd.f32 %v1292, %v261
      %v1311 = vadd.f32 %v1305, %v262
      %v1312 = vxor.u32 %v1308, 2147483648
      %v1313 = vmul.f32 %v1312, 1.442695
      %v1314 = vpow.pop %v1313
      %v1315 = vadd.f32 %v1314, 1.0
      %v1316 = vrcp.pop %v1315
      %v1317 = vmul.f32 %v1315, %v1316
      %v1318 = vsub.f32 1.0, %v1317
      %v1319 = vmul.f32 %v1316, %v1318
      %v1320 = vadd.f32 %v1316, %v1319
      %vm1321 = vweird.f32 %v1315
      %vm1322 = vweird.f32 %v1316
      %vm1323 = vmor %vm1321, %vm1322
      %v1324 = vsel %vm1323, %v1316, %v1320
      %v1325 = vand.u32 2147483647, %v1315
      %vm1326 = vcmp.eq.f32.partialorder %v1325, 8.507059e+37
      %v1327 = vand.u32 %v1315, 2147483648
      %v1328 = vor.u32 1.1754944e-38, %v1327
      %v1329 = vsel %vm1326, %v1328, %v1324
      %v1330 = vmul.f32 1.0, %v1329
      %v1331 = vxor.u32 %v1309, 2147483648
      %v1332 = vmul.f32 %v1331, 1.442695
      %v1333 = vpow.pop %v1332
      %v1334 = vadd.f32 %v1333, 1.0
      %v1335 = vrcp.pop %v1334
      %v1336 = vmul.f32 %v1334, %v1335
      %v1337 = vsub.f32 1.0, %v1336
      %v1338 = vmul.f32 %v1335, %v1337
      %v1339 = vadd.f32 %v1335, %v1338
      %vm1340 = vweird.f32 %v1334
      %vm1341 = vweird.f32 %v1335
      %vm1342 = vmor %vm1340, %vm1341
      %v1343 = vsel %vm1342, %v1335, %v1339
      %v1344 = vand.u32 2147483647, %v1334
      %vm1345 = vcmp.eq.f32.partialorder %v1344, 8.507059e+37
      %v1346 = vand.u32 %v1334, 2147483648
      %v1347 = vor.u32 1.1754944e-38, %v1346
      %v1348 = vsel %vm1345, %v1347, %v1343
      %v1349 = vmul.f32 1.0, %v1348
      %v1350 = vtanh.pop %v1310
      %v1351 = vxor.u32 %v1311, 2147483648
      %v1352 = vmul.f32 %v1351, 1.442695
      %v1353 = vpow.pop %v1352
      %v1354 = vadd.f32 %v1353, 1.0
      %v1355 = vrcp.pop %v1354
      %v1356 = vmul.f32 %v1354, %v1355
      %v1357 = vsub.f32 1.0, %v1356
      %v1358 = vmul.f32 %v1355, %v1357
      %v1359 = vadd.f32 %v1355, %v1358
      %vm1360 = vweird.f32 %v1354
      %vm1361 = vweird.f32 %v1355
      %vm1362 = vmor %vm1360, %vm1361
      %v1363 = vsel %vm1362, %v1355, %v1359
      %v1364 = vand.u32 2147483647, %v1354
      %vm1365 = vcmp.eq.f32.partialorder %v1364, 8.507059e+37
      %v1366 = vand.u32 %v1354, 2147483648
      %v1367 = vor.u32 1.1754944e-38, %v1366
      %v1368 = vsel %vm1365, %v1367, %v1363
      %v1369 = vmul.f32 1.0, %v1368
      %v1370 = vmul.f32 %v1349, %v1062
      %v1371 = vmul.f32 %v1330, %v1350
      %v1372 = vadd.f32 %v1370, %v1371
      %v1373 = vtanh.pop %v1372
      %v1374 = vmul.f32 %v1369, %v1373
      %v1375 = vsel %vm1072, %v1374, %v1061
      %v1376 = vsel %vm1072, %v1372, %v1062
      %v1377 = vsel %vm1072, %v1374, 0.0
      %s1378 = scalar_lea.vmem [#allocation17], 8
      %1379 = vst [vmem:[%s1378] sm:$0xff] %v1377
      %s1380 = sadd.s32 %s142, 2
      %v1381 = vstv %s1380
      %vm1382 = vcmp.gt.s32.totalorder %v160, %v1381
      %v1383 = vsel %vm1382, 1, 0
      %1384 = vset.pattern.permute.xlu0 0
      %1385 = vperm.xlu0 %1384, %v1383
      %v1386 = vpop.permute.xlu0 %1385
      %vm1387 = vcmp.eq.s32.totalorder %v1386, 1
      %s1388 = scalar_lea.vmem [#allocation6], 32
      %v1389 = vld [vmem:[%s1388] sm:$0xff]
      %v1390 = vld [vmem:[%s1388 + $0x8] sm:$0xff]
      %v1391 = vunpack.c.l.bf16 %v1389
      %v1392 = vunpack.c.h.bf16 %v1389
      %v1393 = vunpack.c.l.bf16 %v1390
      %v1394 = vunpack.c.h.bf16 %v1390
      %v1395 = vpack.c.bf16 %v1200, %v1200
      %1396 = vmatpush.bf16.msra.mxu0 %v411
      %1397 = vmatpush.bf16.msra.mxu0 %v407
      %1398 = vmatpush.bf16.msra.mxu0 %v403
      %1399 = vmatpush.bf16.msra.mxu0 %v399
      %1400 = vmatpush.bf16.msra.mxu0 %v395
      %1401 = vmatpush.bf16.msra.mxu0 %v391
      %1402 = vmatpush.bf16.msra.mxu0 %v387
      %1403 = vmatpush.bf16.msra.mxu0 %v383
      %1404 = vmatmul.bf16.gmra.mxu0 %v1395
      %v1405 = vpop.f32.mrf.mxu0
      %v1406 = vadd.f32 0.0, %v1405
      %v1407 = vpop.f32.mrf.mxu0
      %1408 = vdwg.mxu0
      %1409 = vmatpush.bf16.msra.mxu0 %v412
      %1410 = vmatpush.bf16.msra.mxu0 %v408
      %1411 = vmatpush.bf16.msra.mxu0 %v404
      %1412 = vmatpush.bf16.msra.mxu0 %v400
      %1413 = vmatpush.bf16.msra.mxu0 %v396
      %1414 = vmatpush.bf16.msra.mxu0 %v392
      %1415 = vmatpush.bf16.msra.mxu0 %v388
      %1416 = vmatpush.bf16.msra.mxu0 %v384
      %1417 = vmatmul.bf16.gmra.mxu0 %v1395
      %v1418 = vpop.f32.mrf.mxu0
      %v1419 = vadd.f32 0.0, %v1418
      %v1420 = vpop.f32.mrf.mxu0
      %1421 = vdwg.mxu0
      %1422 = vmatpush.bf16.msra.mxu0 %v413
      %1423 = vmatpush.bf16.msra.mxu0 %v409
      %1424 = vmatpush.bf16.msra.mxu0 %v405
      %1425 = vmatpush.bf16.msra.mxu0 %v401
      %1426 = vmatpush.bf16.msra.mxu0 %v397
      %1427 = vmatpush.bf16.msra.mxu0 %v393
      %1428 = vmatpush.bf16.msra.mxu0 %v389
      %1429 = vmatpush.bf16.msra.mxu0 %v385
      %1430 = vmatmul.bf16.gmra.mxu0 %v1395
      %v1431 = vpop.f32.mrf.mxu0
      %v1432 = vadd.f32 0.0, %v1431
      %v1433 = vpop.f32.mrf.mxu0
      %1434 = vdwg.mxu0
      %1435 = vmatpush.bf16.msra.mxu0 %v414
      %1436 = vmatpush.bf16.msra.mxu0 %v410
      %1437 = vmatpush.bf16.msra.mxu0 %v406
      %1438 = vmatpush.bf16.msra.mxu0 %v402
      %1439 = vmatpush.bf16.msra.mxu0 %v398
      %1440 = vmatpush.bf16.msra.mxu0 %v394
      %1441 = vmatpush.bf16.msra.mxu0 %v390
      %1442 = vmatpush.bf16.msra.mxu0 %v386
      %1443 = vmatmul.bf16.gmra.mxu0 %v1395
      %v1444 = vpop.f32.mrf.mxu0
      %v1445 = vadd.f32 0.0, %v1444
      %v1446 = vpop.f32.mrf.mxu0
      %1447 = vdwg.mxu0
      %v1448 = vadd.f32 %v1391, %v1406
      %v1449 = vadd.f32 %v1392, %v1419
      %v1450 = vadd.f32 %v1393, %v1432
      %v1451 = vadd.f32 %v1394, %v1445
      %v1452 = vxor.u32 %v1448, 2147483648
      %v1453 = vmul.f32 %v1452, 1.442695
      %v1454 = vpow.pop %v1453
      %v1455 = vadd.f32 %v1454, 1.0
      %v1456 = vrcp.pop %v1455
      %v1457 = vmul.f32 %v1455, %v1456
      %v1458 = vsub.f32 1.0, %v1457
      %v1459 = vmul.f32 %v1456, %v1458
      %v1460 = vadd.f32 %v1456, %v1459
      %vm1461 = vweird.f32 %v1455
      %vm1462 = vweird.f32 %v1456
      %vm1463 = vmor %vm1461, %vm1462
      %v1464 = vsel %vm1463, %v1456, %v1460
      %v1465 = vand.u32 2147483647, %v1455
      %vm1466 = vcmp.eq.f32.partialorder %v1465, 8.507059e+37
      %v1467 = vand.u32 %v1455, 2147483648
      %v1468 = vor.u32 1.1754944e-38, %v1467
      %v1469 = vsel %vm1466, %v1468, %v1464
      %v1470 = vmul.f32 1.0, %v1469
      %v1471 = vxor.u32 %v1449, 2147483648
      %v1472 = vmul.f32 %v1471, 1.442695
      %v1473 = vpow.pop %v1472
      %v1474 = vadd.f32 %v1473, 1.0
      %v1475 = vrcp.pop %v1474
      %v1476 = vmul.f32 %v1474, %v1475
      %v1477 = vsub.f32 1.0, %v1476
      %v1478 = vmul.f32 %v1475, %v1477
      %v1479 = vadd.f32 %v1475, %v1478
      %vm1480 = vweird.f32 %v1474
      %vm1481 = vweird.f32 %v1475
      %vm1482 = vmor %vm1480, %vm1481
      %v1483 = vsel %vm1482, %v1475, %v1479
      %v1484 = vand.u32 2147483647, %v1474
      %vm1485 = vcmp.eq.f32.partialorder %v1484, 8.507059e+37
      %v1486 = vand.u32 %v1474, 2147483648
      %v1487 = vor.u32 1.1754944e-38, %v1486
      %v1488 = vsel %vm1485, %v1487, %v1483
      %v1489 = vmul.f32 1.0, %v1488
      %v1490 = vtanh.pop %v1450
      %v1491 = vxor.u32 %v1451, 2147483648
      %v1492 = vmul.f32 %v1491, 1.442695
      %v1493 = vpow.pop %v1492
      %v1494 = vadd.f32 %v1493, 1.0
      %v1495 = vrcp.pop %v1494
      %v1496 = vmul.f32 %v1494, %v1495
      %v1497 = vsub.f32 1.0, %v1496
      %v1498 = vmul.f32 %v1495, %v1497
      %v1499 = vadd.f32 %v1495, %v1498
      %vm1500 = vweird.f32 %v1494
      %vm1501 = vweird.f32 %v1495
      %vm1502 = vmor %vm1500, %vm1501
      %v1503 = vsel %vm1502, %v1495, %v1499
      %v1504 = vand.u32 2147483647, %v1494
      %vm1505 = vcmp.eq.f32.partialorder %v1504, 8.507059e+37
      %v1506 = vand.u32 %v1494, 2147483648
      %v1507 = vor.u32 1.1754944e-38, %v1506
      %v1508 = vsel %vm1505, %v1507, %v1503
      %v1509 = vmul.f32 1.0, %v1508
      %v1510 = vmul.f32 %v1489, %v1201
      %v1511 = vmul.f32 %v1470, %v1490
      %v1512 = vadd.f32 %v1510, %v1511
      %v1513 = vtanh.pop %v1512
      %v1514 = vmul.f32 %v1509, %v1513
      %v1515 = vsel %vm1387, %v1514, %v1200
      %v1516 = vsel %vm1387, %v1512, %v1201
      %v1517 = vpack.c.bf16 %v1514, %v1514
      %v1518 = vpack.c.bf16 %v1375, %v1375
      %1519 = vmatpush.bf16.msra.mxu0 %v694
      %1520 = vmatpush.bf16.msra.mxu0 %v690
      %1521 = vmatpush.bf16.msra.mxu0 %v686
      %1522 = vmatpush.bf16.msra.mxu0 %v682
      %1523 = vmatpush.bf16.msra.mxu0 %v678
      %1524 = vmatpush.bf16.msra.mxu0 %v674
      %1525 = vmatpush.bf16.msra.mxu0 %v670
      %1526 = vmatpush.bf16.msra.mxu0 %v666
      %1527 = vmatmul.bf16.gmra.mxu0 %v1518
      %v1528 = vpop.f32.mrf.mxu0
      %v1529 = vadd.f32 0.0, %v1528
      %v1530 = vpop.f32.mrf.mxu0
      %1531 = vdwg.mxu0
      %1532 = vmatpush.bf16.msra.mxu0 %v695
      %1533 = vmatpush.bf16.msra.mxu0 %v691
      %1534 = vmatpush.bf16.msra.mxu0 %v687
      %1535 = vmatpush.bf16.msra.mxu0 %v683
      %1536 = vmatpush.bf16.msra.mxu0 %v679
      %1537 = vmatpush.bf16.msra.mxu0 %v675
      %1538 = vmatpush.bf16.msra.mxu0 %v671
      %1539 = vmatpush.bf16.msra.mxu0 %v667
      %1540 = vmatmul.bf16.gmra.mxu0 %v1518
      %v1541 = vpop.f32.mrf.mxu0
      %v1542 = vadd.f32 0.0, %v1541
      %v1543 = vpop.f32.mrf.mxu0
      %1544 = vdwg.mxu0
      %1545 = vmatpush.bf16.msra.mxu0 %v696
      %1546 = vmatpush.bf16.msra.mxu0 %v692
      %1547 = vmatpush.bf16.msra.mxu0 %v688
      %1548 = vmatpush.bf16.msra.mxu0 %v684
      %1549 = vmatpush.bf16.msra.mxu0 %v680
      %1550 = vmatpush.bf16.msra.mxu0 %v676
      %1551 = vmatpush.bf16.msra.mxu0 %v672
      %1552 = vmatpush.bf16.msra.mxu0 %v668
      %1553 = vmatmul.bf16.gmra.mxu0 %v1518
      %v1554 = vpop.f32.mrf.mxu0
      %v1555 = vadd.f32 0.0, %v1554
      %v1556 = vpop.f32.mrf.mxu0
      %1557 = vdwg.mxu0
      %1558 = vmatpush.bf16.msra.mxu0 %v697
      %1559 = vmatpush.bf16.msra.mxu0 %v693
      %1560 = vmatpush.bf16.msra.mxu0 %v689
      %1561 = vmatpush.bf16.msra.mxu0 %v685
      %1562 = vmatpush.bf16.msra.mxu0 %v681
      %1563 = vmatpush.bf16.msra.mxu0 %v677
      %1564 = vmatpush.bf16.msra.mxu0 %v673
      %1565 = vmatpush.bf16.msra.mxu0 %v669
      %1566 = vmatmul.bf16.gmra.mxu0 %v1518
      %v1567 = vpop.f32.mrf.mxu0
      %v1568 = vadd.f32 0.0, %v1567
      %v1569 = vpop.f32.mrf.mxu0
      %1570 = vdwg.mxu0
      %1571 = vmatpush.bf16.msra.mxu0 %v906
      %1572 = vmatpush.bf16.msra.mxu0 %v902
      %1573 = vmatpush.bf16.msra.mxu0 %v898
      %1574 = vmatpush.bf16.msra.mxu0 %v894
      %1575 = vmatpush.bf16.msra.mxu0 %v890
      %1576 = vmatpush.bf16.msra.mxu0 %v886
      %1577 = vmatpush.bf16.msra.mxu0 %v882
      %1578 = vmatpush.bf16.msra.mxu0 %v878
      %1579 = vmatmul.bf16.gmra.mxu0 %v1517
      %v1580 = vpop.f32.mrf.mxu0
      %v1581 = vadd.f32 %v1529, %v1580
      %v1582 = vpop.f32.mrf.mxu0
      %1583 = vdwg.mxu0
      %1584 = vmatpush.bf16.msra.mxu0 %v907
      %1585 = vmatpush.bf16.msra.mxu0 %v903
      %1586 = vmatpush.bf16.msra.mxu0 %v899
      %1587 = vmatpush.bf16.msra.mxu0 %v895
      %1588 = vmatpush.bf16.msra.mxu0 %v891
      %1589 = vmatpush.bf16.msra.mxu0 %v887
      %1590 = vmatpush.bf16.msra.mxu0 %v883
      %1591 = vmatpush.bf16.msra.mxu0 %v879
      %1592 = vmatmul.bf16.gmra.mxu0 %v1517
      %v1593 = vpop.f32.mrf.mxu0
      %v1594 = vadd.f32 %v1542, %v1593
      %v1595 = vpop.f32.mrf.mxu0
      %1596 = vdwg.mxu0
      %1597 = vmatpush.bf16.msra.mxu0 %v908
      %1598 = vmatpush.bf16.msra.mxu0 %v904
      %1599 = vmatpush.bf16.msra.mxu0 %v900
      %1600 = vmatpush.bf16.msra.mxu0 %v896
      %1601 = vmatpush.bf16.msra.mxu0 %v892
      %1602 = vmatpush.bf16.msra.mxu0 %v888
      %1603 = vmatpush.bf16.msra.mxu0 %v884
      %1604 = vmatpush.bf16.msra.mxu0 %v880
      %1605 = vmatmul.bf16.gmra.mxu0 %v1517
      %v1606 = vpop.f32.mrf.mxu0
      %v1607 = vadd.f32 %v1555, %v1606
      %v1608 = vpop.f32.mrf.mxu0
      %1609 = vdwg.mxu0
      %1610 = vmatpush.bf16.msra.mxu0 %v909
      %1611 = vmatpush.bf16.msra.mxu0 %v905
      %1612 = vmatpush.bf16.msra.mxu0 %v901
      %1613 = vmatpush.bf16.msra.mxu0 %v897
      %1614 = vmatpush.bf16.msra.mxu0 %v893
      %1615 = vmatpush.bf16.msra.mxu0 %v889
      %1616 = vmatpush.bf16.msra.mxu0 %v885
      %1617 = vmatpush.bf16.msra.mxu0 %v881
      %1618 = vmatmul.bf16.gmra.mxu0 %v1517
      %v1619 = vpop.f32.mrf.mxu0
      %v1620 = vadd.f32 %v1568, %v1619
      %v1621 = vpop.f32.mrf.mxu0
      %1622 = vdwg.mxu0
      %v1623 = vadd.f32 %v1581, %v259
      %v1624 = vadd.f32 %v1594, %v260
      %v1625 = vadd.f32 %v1607, %v261
      %v1626 = vadd.f32 %v1620, %v262
      %v1627 = vxor.u32 %v1623, 2147483648
      %v1628 = vmul.f32 %v1627, 1.442695
      %v1629 = vpow.pop %v1628
      %v1630 = vadd.f32 %v1629, 1.0
      %v1631 = vrcp.pop %v1630
      %v1632 = vmul.f32 %v1630, %v1631
      %v1633 = vsub.f32 1.0, %v1632
      %v1634 = vmul.f32 %v1631, %v1633
      %v1635 = vadd.f32 %v1631, %v1634
      %vm1636 = vweird.f32 %v1630
      %vm1637 = vweird.f32 %v1631
      %vm1638 = vmor %vm1636, %vm1637
      %v1639 = vsel %vm1638, %v1631, %v1635
      %v1640 = vand.u32 2147483647, %v1630
      %vm1641 = vcmp.eq.f32.partialorder %v1640, 8.507059e+37
      %v1642 = vand.u32 %v1630, 2147483648
      %v1643 = vor.u32 1.1754944e-38, %v1642
      %v1644 = vsel %vm1641, %v1643, %v1639
      %v1645 = vmul.f32 1.0, %v1644
      %v1646 = vxor.u32 %v1624, 2147483648
      %v1647 = vmul.f32 %v1646, 1.442695
      %v1648 = vpow.pop %v1647
      %v1649 = vadd.f32 %v1648, 1.0
      %v1650 = vrcp.pop %v1649
      %v1651 = vmul.f32 %v1649, %v1650
      %v1652 = vsub.f32 1.0, %v1651
      %v1653 = vmul.f32 %v1650, %v1652
      %v1654 = vadd.f32 %v1650, %v1653
      %vm1655 = vweird.f32 %v1649
      %vm1656 = vweird.f32 %v1650
      %vm1657 = vmor %vm1655, %vm1656
      %v1658 = vsel %vm1657, %v1650, %v1654
      %v1659 = vand.u32 2147483647, %v1649
      %vm1660 = vcmp.eq.f32.partialorder %v1659, 8.507059e+37
      %v1661 = vand.u32 %v1649, 2147483648
      %v1662 = vor.u32 1.1754944e-38, %v1661
      %v1663 = vsel %vm1660, %v1662, %v1658
      %v1664 = vmul.f32 1.0, %v1663
      %v1665 = vtanh.pop %v1625
      %v1666 = vxor.u32 %v1626, 2147483648
      %v1667 = vmul.f32 %v1666, 1.442695
      %v1668 = vpow.pop %v1667
      %v1669 = vadd.f32 %v1668, 1.0
      %v1670 = vrcp.pop %v1669
      %v1671 = vmul.f32 %v1669, %v1670
      %v1672 = vsub.f32 1.0, %v1671
      %v1673 = vmul.f32 %v1670, %v1672
      %v1674 = vadd.f32 %v1670, %v1673
      %vm1675 = vweird.f32 %v1669
      %vm1676 = vweird.f32 %v1670
      %vm1677 = vmor %vm1675, %vm1676
      %v1678 = vsel %vm1677, %v1670, %v1674
      %v1679 = vand.u32 2147483647, %v1669
      %vm1680 = vcmp.eq.f32.partialorder %v1679, 8.507059e+37
      %v1681 = vand.u32 %v1669, 2147483648
      %v1682 = vor.u32 1.1754944e-38, %v1681
      %v1683 = vsel %vm1680, %v1682, %v1678
      %v1684 = vmul.f32 1.0, %v1683
      %v1685 = vmul.f32 %v1664, %v1376
      %v1686 = vmul.f32 %v1645, %v1665
      %v1687 = vadd.f32 %v1685, %v1686
      %v1688 = vtanh.pop %v1687
      %v1689 = vmul.f32 %v1684, %v1688
      %v1690 = vsel %vm1387, %v1689, %v1375
      %v1691 = vsel %vm1387, %v1687, %v1376
      %v1692 = vsel %vm1387, %v1689, 0.0
      %s1693 = scalar_lea.vmem [#allocation17], 16
      %1694 = vst [vmem:[%s1693] sm:$0xff] %v1692
      %s1695 = sadd.s32 %s142, 3
      %v1696 = vstv %s1695
      %vm1697 = vcmp.gt.s32.totalorder %v160, %v1696
      %v1698 = vsel %vm1697, 1, 0
      %1699 = vset.pattern.permute.xlu0 0
      %1700 = vperm.xlu0 %1699, %v1698
      %v1701 = vpop.permute.xlu0 %1700
      %vm1702 = vcmp.eq.s32.totalorder %v1701, 1
      %s1703 = scalar_lea.vmem [#allocation6], 48
      %v1704 = vld [vmem:[%s1703] sm:$0xff]
      %v1705 = vld [vmem:[%s1703 + $0x8] sm:$0xff]
      %v1706 = vunpack.c.l.bf16 %v1704
      %v1707 = vunpack.c.h.bf16 %v1704
      %v1708 = vunpack.c.l.bf16 %v1705
      %v1709 = vunpack.c.h.bf16 %v1705
      %v1710 = vpack.c.bf16 %v1515, %v1515
      %1711 = vmatpush.bf16.msra.mxu0 %v411
      %1712 = vmatpush.bf16.msra.mxu0 %v407
      %1713 = vmatpush.bf16.msra.mxu0 %v403
      %1714 = vmatpush.bf16.msra.mxu0 %v399
      %1715 = vmatpush.bf16.msra.mxu0 %v395
      %1716 = vmatpush.bf16.msra.mxu0 %v391
      %1717 = vmatpush.bf16.msra.mxu0 %v387
      %1718 = vmatpush.bf16.msra.mxu0 %v383
      %1719 = vmatmul.bf16.gmra.mxu0 %v1710
      %v1720 = vpop.f32.mrf.mxu0
      %v1721 = vadd.f32 0.0, %v1720
      %v1722 = vpop.f32.mrf.mxu0
      %1723 = vdwg.mxu0
      %1724 = vmatpush.bf16.msra.mxu0 %v412
      %1725 = vmatpush.bf16.msra.mxu0 %v408
      %1726 = vmatpush.bf16.msra.mxu0 %v404
      %1727 = vmatpush.bf16.msra.mxu0 %v400
      %1728 = vmatpush.bf16.msra.mxu0 %v396
      %1729 = vmatpush.bf16.msra.mxu0 %v392
      %1730 = vmatpush.bf16.msra.mxu0 %v388
      %1731 = vmatpush.bf16.msra.mxu0 %v384
      %1732 = vmatmul.bf16.gmra.mxu0 %v1710
      %v1733 = vpop.f32.mrf.mxu0
      %v1734 = vadd.f32 0.0, %v1733
      %v1735 = vpop.f32.mrf.mxu0
      %1736 = vdwg.mxu0
      %1737 = vmatpush.bf16.msra.mxu0 %v413
      %1738 = vmatpush.bf16.msra.mxu0 %v409
      %1739 = vmatpush.bf16.msra.mxu0 %v405
      %1740 = vmatpush.bf16.msra.mxu0 %v401
      %1741 = vmatpush.bf16.msra.mxu0 %v397
      %1742 = vmatpush.bf16.msra.mxu0 %v393
      %1743 = vmatpush.bf16.msra.mxu0 %v389
      %1744 = vmatpush.bf16.msra.mxu0 %v385
      %1745 = vmatmul.bf16.gmra.mxu0 %v1710
      %v1746 = vpop.f32.mrf.mxu0
      %v1747 = vadd.f32 0.0, %v1746
      %v1748 = vpop.f32.mrf.mxu0
      %1749 = vdwg.mxu0
      %1750 = vmatpush.bf16.msra.mxu0 %v414
      %1751 = vmatpush.bf16.msra.mxu0 %v410
      %1752 = vmatpush.bf16.msra.mxu0 %v406
      %1753 = vmatpush.bf16.msra.mxu0 %v402
      %1754 = vmatpush.bf16.msra.mxu0 %v398
      %1755 = vmatpush.bf16.msra.mxu0 %v394
      %1756 = vmatpush.bf16.msra.mxu0 %v390
      %1757 = vmatpush.bf16.msra.mxu0 %v386
      %1758 = vmatmul.bf16.gmra.mxu0 %v1710
      %v1759 = vpop.f32.mrf.mxu0
      %v1760 = vadd.f32 0.0, %v1759
      %v1761 = vpop.f32.mrf.mxu0
      %1762 = vdwg.mxu0
      %v1763 = vadd.f32 %v1706, %v1721
      %v1764 = vadd.f32 %v1707, %v1734
      %v1765 = vadd.f32 %v1708, %v1747
      %v1766 = vadd.f32 %v1709, %v1760
      %v1767 = vxor.u32 %v1763, 2147483648
      %v1768 = vmul.f32 %v1767, 1.442695
      %v1769 = vpow.pop %v1768
      %v1770 = vadd.f32 %v1769, 1.0
      %v1771 = vrcp.pop %v1770
      %v1772 = vmul.f32 %v1770, %v1771
      %v1773 = vsub.f32 1.0, %v1772
      %v1774 = vmul.f32 %v1771, %v1773
      %v1775 = vadd.f32 %v1771, %v1774
      %vm1776 = vweird.f32 %v1770
      %vm1777 = vweird.f32 %v1771
      %vm1778 = vmor %vm1776, %vm1777
      %v1779 = vsel %vm1778, %v1771, %v1775
      %v1780 = vand.u32 2147483647, %v1770
      %vm1781 = vcmp.eq.f32.partialorder %v1780, 8.507059e+37
      %v1782 = vand.u32 %v1770, 2147483648
      %v1783 = vor.u32 1.1754944e-38, %v1782
      %v1784 = vsel %vm1781, %v1783, %v1779
      %v1785 = vmul.f32 1.0, %v1784
      %v1786 = vxor.u32 %v1764, 2147483648
      %v1787 = vmul.f32 %v1786, 1.442695
      %v1788 = vpow.pop %v1787
      %v1789 = vadd.f32 %v1788, 1.0
      %v1790 = vrcp.pop %v1789
      %v1791 = vmul.f32 %v1789, %v1790
      %v1792 = vsub.f32 1.0, %v1791
      %v1793 = vmul.f32 %v1790, %v1792
      %v1794 = vadd.f32 %v1790, %v1793
      %vm1795 = vweird.f32 %v1789
      %vm1796 = vweird.f32 %v1790
      %vm1797 = vmor %vm1795, %vm1796
      %v1798 = vsel %vm1797, %v1790, %v1794
      %v1799 = vand.u32 2147483647, %v1789
      %vm1800 = vcmp.eq.f32.partialorder %v1799, 8.507059e+37
      %v1801 = vand.u32 %v1789, 2147483648
      %v1802 = vor.u32 1.1754944e-38, %v1801
      %v1803 = vsel %vm1800, %v1802, %v1798
      %v1804 = vmul.f32 1.0, %v1803
      %v1805 = vtanh.pop %v1765
      %v1806 = vxor.u32 %v1766, 2147483648
      %v1807 = vmul.f32 %v1806, 1.442695
      %v1808 = vpow.pop %v1807
      %v1809 = vadd.f32 %v1808, 1.0
      %v1810 = vrcp.pop %v1809
      %v1811 = vmul.f32 %v1809, %v1810
      %v1812 = vsub.f32 1.0, %v1811
      %v1813 = vmul.f32 %v1810, %v1812
      %v1814 = vadd.f32 %v1810, %v1813
      %vm1815 = vweird.f32 %v1809
      %vm1816 = vweird.f32 %v1810
      %vm1817 = vmor %vm1815, %vm1816
      %v1818 = vsel %vm1817, %v1810, %v1814
      %v1819 = vand.u32 2147483647, %v1809
      %vm1820 = vcmp.eq.f32.partialorder %v1819, 8.507059e+37
      %v1821 = vand.u32 %v1809, 2147483648
      %v1822 = vor.u32 1.1754944e-38, %v1821
      %v1823 = vsel %vm1820, %v1822, %v1818
      %v1824 = vmul.f32 1.0, %v1823
      %v1825 = vmul.f32 %v1804, %v1516
      %v1826 = vmul.f32 %v1785, %v1805
      %v1827 = vadd.f32 %v1825, %v1826
      %v1828 = vtanh.pop %v1827
      %v1829 = vmul.f32 %v1824, %v1828
      %v1830 = vsel %vm1702, %v1829, %v1515
      %v1831 = vsel %vm1702, %v1827, %v1516
      %v1832 = vpack.c.bf16 %v1829, %v1829
      %v1833 = vpack.c.bf16 %v1690, %v1690
      %1834 = vmatpush.bf16.msra.mxu0 %v694
      %1835 = vmatpush.bf16.msra.mxu0 %v690
      %1836 = vmatpush.bf16.msra.mxu0 %v686
      %1837 = vmatpush.bf16.msra.mxu0 %v682
      %1838 = vmatpush.bf16.msra.mxu0 %v678
      %1839 = vmatpush.bf16.msra.mxu0 %v674
      %1840 = vmatpush.bf16.msra.mxu0 %v670
      %1841 = vmatpush.bf16.msra.mxu0 %v666
      %1842 = vmatmul.bf16.gmra.mxu0 %v1833
      %v1843 = vpop.f32.mrf.mxu0
      %v1844 = vadd.f32 0.0, %v1843
      %v1845 = vpop.f32.mrf.mxu0
      %1846 = vdwg.mxu0
      %1847 = vmatpush.bf16.msra.mxu0 %v695
      %1848 = vmatpush.bf16.msra.mxu0 %v691
      %1849 = vmatpush.bf16.msra.mxu0 %v687
      %1850 = vmatpush.bf16.msra.mxu0 %v683
      %1851 = vmatpush.bf16.msra.mxu0 %v679
      %1852 = vmatpush.bf16.msra.mxu0 %v675
      %1853 = vmatpush.bf16.msra.mxu0 %v671
      %1854 = vmatpush.bf16.msra.mxu0 %v667
      %1855 = vmatmul.bf16.gmra.mxu0 %v1833
      %v1856 = vpop.f32.mrf.mxu0
      %v1857 = vadd.f32 0.0, %v1856
      %v1858 = vpop.f32.mrf.mxu0
      %1859 = vdwg.mxu0
      %1860 = vmatpush.bf16.msra.mxu0 %v696
      %1861 = vmatpush.bf16.msra.mxu0 %v692
      %1862 = vmatpush.bf16.msra.mxu0 %v688
      %1863 = vmatpush.bf16.msra.mxu0 %v684
      %1864 = vmatpush.bf16.msra.mxu0 %v680
      %1865 = vmatpush.bf16.msra.mxu0 %v676
      %1866 = vmatpush.bf16.msra.mxu0 %v672
      %1867 = vmatpush.bf16.msra.mxu0 %v668
      %1868 = vmatmul.bf16.gmra.mxu0 %v1833
      %v1869 = vpop.f32.mrf.mxu0
      %v1870 = vadd.f32 0.0, %v1869
      %v1871 = vpop.f32.mrf.mxu0
      %1872 = vdwg.mxu0
      %1873 = vmatpush.bf16.msra.mxu0 %v697
      %1874 = vmatpush.bf16.msra.mxu0 %v693
      %1875 = vmatpush.bf16.msra.mxu0 %v689
      %1876 = vmatpush.bf16.msra.mxu0 %v685
      %1877 = vmatpush.bf16.msra.mxu0 %v681
      %1878 = vmatpush.bf16.msra.mxu0 %v677
      %1879 = vmatpush.bf16.msra.mxu0 %v673
      %1880 = vmatpush.bf16.msra.mxu0 %v669
      %1881 = vmatmul.bf16.gmra.mxu0 %v1833
      %v1882 = vpop.f32.mrf.mxu0
      %v1883 = vadd.f32 0.0, %v1882
      %v1884 = vpop.f32.mrf.mxu0
      %1885 = vdwg.mxu0
      %1886 = vmatpush.bf16.msra.mxu0 %v906
      %1887 = vmatpush.bf16.msra.mxu0 %v902
      %1888 = vmatpush.bf16.msra.mxu0 %v898
      %1889 = vmatpush.bf16.msra.mxu0 %v894
      %1890 = vmatpush.bf16.msra.mxu0 %v890
      %1891 = vmatpush.bf16.msra.mxu0 %v886
      %1892 = vmatpush.bf16.msra.mxu0 %v882
      %1893 = vmatpush.bf16.msra.mxu0 %v878
      %1894 = vmatmul.bf16.gmra.mxu0 %v1832
      %v1895 = vpop.f32.mrf.mxu0
      %v1896 = vadd.f32 %v1844, %v1895
      %v1897 = vpop.f32.mrf.mxu0
      %1898 = vdwg.mxu0
      %1899 = vmatpush.bf16.msra.mxu0 %v907
      %1900 = vmatpush.bf16.msra.mxu0 %v903
      %1901 = vmatpush.bf16.msra.mxu0 %v899
      %1902 = vmatpush.bf16.msra.mxu0 %v895
      %1903 = vmatpush.bf16.msra.mxu0 %v891
      %1904 = vmatpush.bf16.msra.mxu0 %v887
      %1905 = vmatpush.bf16.msra.mxu0 %v883
      %1906 = vmatpush.bf16.msra.mxu0 %v879
      %1907 = vmatmul.bf16.gmra.mxu0 %v1832
      %v1908 = vpop.f32.mrf.mxu0
      %v1909 = vadd.f32 %v1857, %v1908
      %v1910 = vpop.f32.mrf.mxu0
      %1911 = vdwg.mxu0
      %1912 = vmatpush.bf16.msra.mxu0 %v908
      %1913 = vmatpush.bf16.msra.mxu0 %v904
      %1914 = vmatpush.bf16.msra.mxu0 %v900
      %1915 = vmatpush.bf16.msra.mxu0 %v896
      %1916 = vmatpush.bf16.msra.mxu0 %v892
      %1917 = vmatpush.bf16.msra.mxu0 %v888
      %1918 = vmatpush.bf16.msra.mxu0 %v884
      %1919 = vmatpush.bf16.msra.mxu0 %v880
      %1920 = vmatmul.bf16.gmra.mxu0 %v1832
      %v1921 = vpop.f32.mrf.mxu0
      %v1922 = vadd.f32 %v1870, %v1921
      %v1923 = vpop.f32.mrf.mxu0
      %1924 = vdwg.mxu0
      %1925 = vmatpush.bf16.msra.mxu0 %v909
      %1926 = vmatpush.bf16.msra.mxu0 %v905
      %1927 = vmatpush.bf16.msra.mxu0 %v901
      %1928 = vmatpush.bf16.msra.mxu0 %v897
      %1929 = vmatpush.bf16.msra.mxu0 %v893
      %1930 = vmatpush.bf16.msra.mxu0 %v889
      %1931 = vmatpush.bf16.msra.mxu0 %v885
      %1932 = vmatpush.bf16.msra.mxu0 %v881
      %1933 = vmatmul.bf16.gmra.mxu0 %v1832
      %v1934 = vpop.f32.mrf.mxu0
      %v1935 = vadd.f32 %v1883, %v1934
      %v1936 = vpop.f32.mrf.mxu0
      %1937 = vdwg.mxu0
      %v1938 = vadd.f32 %v1896, %v259
      %v1939 = vadd.f32 %v1909, %v260
      %v1940 = vadd.f32 %v1922, %v261
      %v1941 = vadd.f32 %v1935, %v262
      %v1942 = vxor.u32 %v1938, 2147483648
      %v1943 = vmul.f32 %v1942, 1.442695
      %v1944 = vpow.pop %v1943
      %v1945 = vadd.f32 %v1944, 1.0
      %v1946 = vrcp.pop %v1945
      %v1947 = vmul.f32 %v1945, %v1946
      %v1948 = vsub.f32 1.0, %v1947
      %v1949 = vmul.f32 %v1946, %v1948
      %v1950 = vadd.f32 %v1946, %v1949
      %vm1951 = vweird.f32 %v1945
      %vm1952 = vweird.f32 %v1946
      %vm1953 = vmor %vm1951, %vm1952
      %v1954 = vsel %vm1953, %v1946, %v1950
      %v1955 = vand.u32 2147483647, %v1945
      %vm1956 = vcmp.eq.f32.partialorder %v1955, 8.507059e+37
      %v1957 = vand.u32 %v1945, 2147483648
      %v1958 = vor.u32 1.1754944e-38, %v1957
      %v1959 = vsel %vm1956, %v1958, %v1954
      %v1960 = vmul.f32 1.0, %v1959
      %v1961 = vxor.u32 %v1939, 2147483648
      %v1962 = vmul.f32 %v1961, 1.442695
      %v1963 = vpow.pop %v1962
      %v1964 = vadd.f32 %v1963, 1.0
      %v1965 = vrcp.pop %v1964
      %v1966 = vmul.f32 %v1964, %v1965
      %v1967 = vsub.f32 1.0, %v1966
      %v1968 = vmul.f32 %v1965, %v1967
      %v1969 = vadd.f32 %v1965, %v1968
      %vm1970 = vweird.f32 %v1964
      %vm1971 = vweird.f32 %v1965
      %vm1972 = vmor %vm1970, %vm1971
      %v1973 = vsel %vm1972, %v1965, %v1969
      %v1974 = vand.u32 2147483647, %v1964
      %vm1975 = vcmp.eq.f32.partialorder %v1974, 8.507059e+37
      %v1976 = vand.u32 %v1964, 2147483648
      %v1977 = vor.u32 1.1754944e-38, %v1976
      %v1978 = vsel %vm1975, %v1977, %v1973
      %v1979 = vmul.f32 1.0, %v1978
      %v1980 = vtanh.pop %v1940
      %v1981 = vxor.u32 %v1941, 2147483648
      %v1982 = vmul.f32 %v1981, 1.442695
      %v1983 = vpow.pop %v1982
      %v1984 = vadd.f32 %v1983, 1.0
      %v1985 = vrcp.pop %v1984
      %v1986 = vmul.f32 %v1984, %v1985
      %v1987 = vsub.f32 1.0, %v1986
      %v1988 = vmul.f32 %v1985, %v1987
      %v1989 = vadd.f32 %v1985, %v1988
      %vm1990 = vweird.f32 %v1984
      %vm1991 = vweird.f32 %v1985
      %vm1992 = vmor %vm1990, %vm1991
      %v1993 = vsel %vm1992, %v1985, %v1989
      %v1994 = vand.u32 2147483647, %v1984
      %vm1995 = vcmp.eq.f32.partialorder %v1994, 8.507059e+37
      %v1996 = vand.u32 %v1984, 2147483648
      %v1997 = vor.u32 1.1754944e-38, %v1996
      %v1998 = vsel %vm1995, %v1997, %v1993
      %v1999 = vmul.f32 1.0, %v1998
      %v2000 = vmul.f32 %v1979, %v1691
      %v2001 = vmul.f32 %v1960, %v1980
      %v2002 = vadd.f32 %v2000, %v2001
      %v2003 = vtanh.pop %v2002
      %v2004 = vmul.f32 %v1999, %v2003
      %v2005 = vsel %vm1702, %v2004, %v1690
      %v2006 = vsel %vm1702, %v2002, %v1691
      %v2007 = vsel %vm1702, %v2004, 0.0
      %s2008 = scalar_lea.vmem [#allocation17], 24
      %2009 = vst [vmem:[%s2008] sm:$0xff] %v2007
      %s2010 = sadd.s32 %s142, 4
      %v2011 = vstv %s2010
      %vm2012 = vcmp.gt.s32.totalorder %v160, %v2011
      %v2013 = vsel %vm2012, 1, 0
      %2014 = vset.pattern.permute.xlu0 0
      %2015 = vperm.xlu0 %2014, %v2013
      %v2016 = vpop.permute.xlu0 %2015
      %vm2017 = vcmp.eq.s32.totalorder %v2016, 1
      %s2018 = scalar_lea.vmem [#allocation6], 64
      %v2019 = vld [vmem:[%s2018] sm:$0xff]
      %v2020 = vld [vmem:[%s2018 + $0x8] sm:$0xff]
      %v2021 = vunpack.c.l.bf16 %v2019
      %v2022 = vunpack.c.h.bf16 %v2019
      %v2023 = vunpack.c.l.bf16 %v2020
      %v2024 = vunpack.c.h.bf16 %v2020
      %v2025 = vpack.c.bf16 %v1830, %v1830
      %2026 = vmatpush.bf16.msra.mxu0 %v411
      %2027 = vmatpush.bf16.msra.mxu0 %v407
      %2028 = vmatpush.bf16.msra.mxu0 %v403
      %2029 = vmatpush.bf16.msra.mxu0 %v399
      %2030 = vmatpush.bf16.msra.mxu0 %v395
      %2031 = vmatpush.bf16.msra.mxu0 %v391
      %2032 = vmatpush.bf16.msra.mxu0 %v387
      %2033 = vmatpush.bf16.msra.mxu0 %v383
      %2034 = vmatmul.bf16.gmra.mxu0 %v2025
      %v2035 = vpop.f32.mrf.mxu0
      %v2036 = vadd.f32 0.0, %v2035
      %v2037 = vpop.f32.mrf.mxu0
      %2038 = vdwg.mxu0
      %2039 = vmatpush.bf16.msra.mxu0 %v412
      %2040 = vmatpush.bf16.msra.mxu0 %v408
      %2041 = vmatpush.bf16.msra.mxu0 %v404
      %2042 = vmatpush.bf16.msra.mxu0 %v400
      %2043 = vmatpush.bf16.msra.mxu0 %v396
      %2044 = vmatpush.bf16.msra.mxu0 %v392
      %2045 = vmatpush.bf16.msra.mxu0 %v388
      %2046 = vmatpush.bf16.msra.mxu0 %v384
      %2047 = vmatmul.bf16.gmra.mxu0 %v2025
      %v2048 = vpop.f32.mrf.mxu0
      %v2049 = vadd.f32 0.0, %v2048
      %v2050 = vpop.f32.mrf.mxu0
      %2051 = vdwg.mxu0
      %2052 = vmatpush.bf16.msra.mxu0 %v413
      %2053 = vmatpush.bf16.msra.mxu0 %v409
      %2054 = vmatpush.bf16.msra.mxu0 %v405
      %2055 = vmatpush.bf16.msra.mxu0 %v401
      %2056 = vmatpush.bf16.msra.mxu0 %v397
      %2057 = vmatpush.bf16.msra.mxu0 %v393
      %2058 = vmatpush.bf16.msra.mxu0 %v389
      %2059 = vmatpush.bf16.msra.mxu0 %v385
      %2060 = vmatmul.bf16.gmra.mxu0 %v2025
      %v2061 = vpop.f32.mrf.mxu0
      %v2062 = vadd.f32 0.0, %v2061
      %v2063 = vpop.f32.mrf.mxu0
      %2064 = vdwg.mxu0
      %2065 = vmatpush.bf16.msra.mxu0 %v414
      %2066 = vmatpush.bf16.msra.mxu0 %v410
      %2067 = vmatpush.bf16.msra.mxu0 %v406
      %2068 = vmatpush.bf16.msra.mxu0 %v402
      %2069 = vmatpush.bf16.msra.mxu0 %v398
      %2070 = vmatpush.bf16.msra.mxu0 %v394
      %2071 = vmatpush.bf16.msra.mxu0 %v390
      %2072 = vmatpush.bf16.msra.mxu0 %v386
      %2073 = vmatmul.bf16.gmra.mxu0 %v2025
      %v2074 = vpop.f32.mrf.mxu0
      %v2075 = vadd.f32 0.0, %v2074
      %v2076 = vpop.f32.mrf.mxu0
      %2077 = vdwg.mxu0
      %v2078 = vadd.f32 %v2021, %v2036
      %v2079 = vadd.f32 %v2022, %v2049
      %v2080 = vadd.f32 %v2023, %v2062
      %v2081 = vadd.f32 %v2024, %v2075
      %v2082 = vxor.u32 %v2078, 2147483648
      %v2083 = vmul.f32 %v2082, 1.442695
      %v2084 = vpow.pop %v2083
      %v2085 = vadd.f32 %v2084, 1.0
      %v2086 = vrcp.pop %v2085
      %v2087 = vmul.f32 %v2085, %v2086
      %v2088 = vsub.f32 1.0, %v2087
      %v2089 = vmul.f32 %v2086, %v2088
      %v2090 = vadd.f32 %v2086, %v2089
      %vm2091 = vweird.f32 %v2085
      %vm2092 = vweird.f32 %v2086
      %vm2093 = vmor %vm2091, %vm2092
      %v2094 = vsel %vm2093, %v2086, %v2090
      %v2095 = vand.u32 2147483647, %v2085
      %vm2096 = vcmp.eq.f32.partialorder %v2095, 8.507059e+37
      %v2097 = vand.u32 %v2085, 2147483648
      %v2098 = vor.u32 1.1754944e-38, %v2097
      %v2099 = vsel %vm2096, %v2098, %v2094
      %v2100 = vmul.f32 1.0, %v2099
      %v2101 = vxor.u32 %v2079, 2147483648
      %v2102 = vmul.f32 %v2101, 1.442695
      %v2103 = vpow.pop %v2102
      %v2104 = vadd.f32 %v2103, 1.0
      %v2105 = vrcp.pop %v2104
      %v2106 = vmul.f32 %v2104, %v2105
      %v2107 = vsub.f32 1.0, %v2106
      %v2108 = vmul.f32 %v2105, %v2107
      %v2109 = vadd.f32 %v2105, %v2108
      %vm2110 = vweird.f32 %v2104
      %vm2111 = vweird.f32 %v2105
      %vm2112 = vmor %vm2110, %vm2111
      %v2113 = vsel %vm2112, %v2105, %v2109
      %v2114 = vand.u32 2147483647, %v2104
      %vm2115 = vcmp.eq.f32.partialorder %v2114, 8.507059e+37
      %v2116 = vand.u32 %v2104, 2147483648
      %v2117 = vor.u32 1.1754944e-38, %v2116
      %v2118 = vsel %vm2115, %v2117, %v2113
      %v2119 = vmul.f32 1.0, %v2118
      %v2120 = vtanh.pop %v2080
      %v2121 = vxor.u32 %v2081, 2147483648
      %v2122 = vmul.f32 %v2121, 1.442695
      %v2123 = vpow.pop %v2122
      %v2124 = vadd.f32 %v2123, 1.0
      %v2125 = vrcp.pop %v2124
      %v2126 = vmul.f32 %v2124, %v2125
      %v2127 = vsub.f32 1.0, %v2126
      %v2128 = vmul.f32 %v2125, %v2127
      %v2129 = vadd.f32 %v2125, %v2128
      %vm2130 = vweird.f32 %v2124
      %vm2131 = vweird.f32 %v2125
      %vm2132 = vmor %vm2130, %vm2131
      %v2133 = vsel %vm2132, %v2125, %v2129
      %v2134 = vand.u32 2147483647, %v2124
      %vm2135 = vcmp.eq.f32.partialorder %v2134, 8.507059e+37
      %v2136 = vand.u32 %v2124, 2147483648
      %v2137 = vor.u32 1.1754944e-38, %v2136
      %v2138 = vsel %vm2135, %v2137, %v2133
      %v2139 = vmul.f32 1.0, %v2138
      %v2140 = vmul.f32 %v2119, %v1831
      %v2141 = vmul.f32 %v2100, %v2120
      %v2142 = vadd.f32 %v2140, %v2141
      %v2143 = vtanh.pop %v2142
      %v2144 = vmul.f32 %v2139, %v2143
      %v2145 = vsel %vm2017, %v2144, %v1830
      %v2146 = vsel %vm2017, %v2142, %v1831
      %v2147 = vpack.c.bf16 %v2144, %v2144
      %v2148 = vpack.c.bf16 %v2005, %v2005
      %2149 = vmatpush.bf16.msra.mxu0 %v694
      %2150 = vmatpush.bf16.msra.mxu0 %v690
      %2151 = vmatpush.bf16.msra.mxu0 %v686
      %2152 = vmatpush.bf16.msra.mxu0 %v682
      %2153 = vmatpush.bf16.msra.mxu0 %v678
      %2154 = vmatpush.bf16.msra.mxu0 %v674
      %2155 = vmatpush.bf16.msra.mxu0 %v670
      %2156 = vmatpush.bf16.msra.mxu0 %v666
      %2157 = vmatmul.bf16.gmra.mxu0 %v2148
      %v2158 = vpop.f32.mrf.mxu0
      %v2159 = vadd.f32 0.0, %v2158
      %v2160 = vpop.f32.mrf.mxu0
      %2161 = vdwg.mxu0
      %2162 = vmatpush.bf16.msra.mxu0 %v695
      %2163 = vmatpush.bf16.msra.mxu0 %v691
      %2164 = vmatpush.bf16.msra.mxu0 %v687
      %2165 = vmatpush.bf16.msra.mxu0 %v683
      %2166 = vmatpush.bf16.msra.mxu0 %v679
      %2167 = vmatpush.bf16.msra.mxu0 %v675
      %2168 = vmatpush.bf16.msra.mxu0 %v671
      %2169 = vmatpush.bf16.msra.mxu0 %v667
      %2170 = vmatmul.bf16.gmra.mxu0 %v2148
      %v2171 = vpop.f32.mrf.mxu0
      %v2172 = vadd.f32 0.0, %v2171
      %v2173 = vpop.f32.mrf.mxu0
      %2174 = vdwg.mxu0
      %2175 = vmatpush.bf16.msra.mxu0 %v696
      %2176 = vmatpush.bf16.msra.mxu0 %v692
      %2177 = vmatpush.bf16.msra.mxu0 %v688
      %2178 = vmatpush.bf16.msra.mxu0 %v684
      %2179 = vmatpush.bf16.msra.mxu0 %v680
      %2180 = vmatpush.bf16.msra.mxu0 %v676
      %2181 = vmatpush.bf16.msra.mxu0 %v672
      %2182 = vmatpush.bf16.msra.mxu0 %v668
      %2183 = vmatmul.bf16.gmra.mxu0 %v2148
      %v2184 = vpop.f32.mrf.mxu0
      %v2185 = vadd.f32 0.0, %v2184
      %v2186 = vpop.f32.mrf.mxu0
      %2187 = vdwg.mxu0
      %2188 = vmatpush.bf16.msra.mxu0 %v697
      %2189 = vmatpush.bf16.msra.mxu0 %v693
      %2190 = vmatpush.bf16.msra.mxu0 %v689
      %2191 = vmatpush.bf16.msra.mxu0 %v685
      %2192 = vmatpush.bf16.msra.mxu0 %v681
      %2193 = vmatpush.bf16.msra.mxu0 %v677
      %2194 = vmatpush.bf16.msra.mxu0 %v673
      %2195 = vmatpush.bf16.msra.mxu0 %v669
      %2196 = vmatmul.bf16.gmra.mxu0 %v2148
      %v2197 = vpop.f32.mrf.mxu0
      %v2198 = vadd.f32 0.0, %v2197
      %v2199 = vpop.f32.mrf.mxu0
      %2200 = vdwg.mxu0
      %2201 = vmatpush.bf16.msra.mxu0 %v906
      %2202 = vmatpush.bf16.msra.mxu0 %v902
      %2203 = vmatpush.bf16.msra.mxu0 %v898
      %2204 = vmatpush.bf16.msra.mxu0 %v894
      %2205 = vmatpush.bf16.msra.mxu0 %v890
      %2206 = vmatpush.bf16.msra.mxu0 %v886
      %2207 = vmatpush.bf16.msra.mxu0 %v882
      %2208 = vmatpush.bf16.msra.mxu0 %v878
      %2209 = vmatmul.bf16.gmra.mxu0 %v2147
      %v2210 = vpop.f32.mrf.mxu0
      %v2211 = vadd.f32 %v2159, %v2210
      %v2212 = vpop.f32.mrf.mxu0
      %2213 = vdwg.mxu0
      %2214 = vmatpush.bf16.msra.mxu0 %v907
      %2215 = vmatpush.bf16.msra.mxu0 %v903
      %2216 = vmatpush.bf16.msra.mxu0 %v899
      %2217 = vmatpush.bf16.msra.mxu0 %v895
      %2218 = vmatpush.bf16.msra.mxu0 %v891
      %2219 = vmatpush.bf16.msra.mxu0 %v887
      %2220 = vmatpush.bf16.msra.mxu0 %v883
      %2221 = vmatpush.bf16.msra.mxu0 %v879
      %2222 = vmatmul.bf16.gmra.mxu0 %v2147
      %v2223 = vpop.f32.mrf.mxu0
      %v2224 = vadd.f32 %v2172, %v2223
      %v2225 = vpop.f32.mrf.mxu0
      %2226 = vdwg.mxu0
      %2227 = vmatpush.bf16.msra.mxu0 %v908
      %2228 = vmatpush.bf16.msra.mxu0 %v904
      %2229 = vmatpush.bf16.msra.mxu0 %v900
      %2230 = vmatpush.bf16.msra.mxu0 %v896
      %2231 = vmatpush.bf16.msra.mxu0 %v892
      %2232 = vmatpush.bf16.msra.mxu0 %v888
      %2233 = vmatpush.bf16.msra.mxu0 %v884
      %2234 = vmatpush.bf16.msra.mxu0 %v880
      %2235 = vmatmul.bf16.gmra.mxu0 %v2147
      %v2236 = vpop.f32.mrf.mxu0
      %v2237 = vadd.f32 %v2185, %v2236
      %v2238 = vpop.f32.mrf.mxu0
      %2239 = vdwg.mxu0
      %2240 = vmatpush.bf16.msra.mxu0 %v909
      %2241 = vmatpush.bf16.msra.mxu0 %v905
      %2242 = vmatpush.bf16.msra.mxu0 %v901
      %2243 = vmatpush.bf16.msra.mxu0 %v897
      %2244 = vmatpush.bf16.msra.mxu0 %v893
      %2245 = vmatpush.bf16.msra.mxu0 %v889
      %2246 = vmatpush.bf16.msra.mxu0 %v885
      %2247 = vmatpush.bf16.msra.mxu0 %v881
      %2248 = vmatmul.bf16.gmra.mxu0 %v2147
      %v2249 = vpop.f32.mrf.mxu0
      %v2250 = vadd.f32 %v2198, %v2249
      %v2251 = vpop.f32.mrf.mxu0
      %2252 = vdwg.mxu0
      %v2253 = vadd.f32 %v2211, %v259
      %v2254 = vadd.f32 %v2224, %v260
      %v2255 = vadd.f32 %v2237, %v261
      %v2256 = vadd.f32 %v2250, %v262
      %v2257 = vxor.u32 %v2253, 2147483648
      %v2258 = vmul.f32 %v2257, 1.442695
      %v2259 = vpow.pop %v2258
      %v2260 = vadd.f32 %v2259, 1.0
      %v2261 = vrcp.pop %v2260
      %v2262 = vmul.f32 %v2260, %v2261
      %v2263 = vsub.f32 1.0, %v2262
      %v2264 = vmul.f32 %v2261, %v2263
      %v2265 = vadd.f32 %v2261, %v2264
      %vm2266 = vweird.f32 %v2260
      %vm2267 = vweird.f32 %v2261
      %vm2268 = vmor %vm2266, %vm2267
      %v2269 = vsel %vm2268, %v2261, %v2265
      %v2270 = vand.u32 2147483647, %v2260
      %vm2271 = vcmp.eq.f32.partialorder %v2270, 8.507059e+37
      %v2272 = vand.u32 %v2260, 2147483648
      %v2273 = vor.u32 1.1754944e-38, %v2272
      %v2274 = vsel %vm2271, %v2273, %v2269
      %v2275 = vmul.f32 1.0, %v2274
      %v2276 = vxor.u32 %v2254, 2147483648
      %v2277 = vmul.f32 %v2276, 1.442695
      %v2278 = vpow.pop %v2277
      %v2279 = vadd.f32 %v2278, 1.0
      %v2280 = vrcp.pop %v2279
      %v2281 = vmul.f32 %v2279, %v2280
      %v2282 = vsub.f32 1.0, %v2281
      %v2283 = vmul.f32 %v2280, %v2282
      %v2284 = vadd.f32 %v2280, %v2283
      %vm2285 = vweird.f32 %v2279
      %vm2286 = vweird.f32 %v2280
      %vm2287 = vmor %vm2285, %vm2286
      %v2288 = vsel %vm2287, %v2280, %v2284
      %v2289 = vand.u32 2147483647, %v2279
      %vm2290 = vcmp.eq.f32.partialorder %v2289, 8.507059e+37
      %v2291 = vand.u32 %v2279, 2147483648
      %v2292 = vor.u32 1.1754944e-38, %v2291
      %v2293 = vsel %vm2290, %v2292, %v2288
      %v2294 = vmul.f32 1.0, %v2293
      %v2295 = vtanh.pop %v2255
      %v2296 = vxor.u32 %v2256, 2147483648
      %v2297 = vmul.f32 %v2296, 1.442695
      %v2298 = vpow.pop %v2297
      %v2299 = vadd.f32 %v2298, 1.0
      %v2300 = vrcp.pop %v2299
      %v2301 = vmul.f32 %v2299, %v2300
      %v2302 = vsub.f32 1.0, %v2301
      %v2303 = vmul.f32 %v2300, %v2302
      %v2304 = vadd.f32 %v2300, %v2303
      %vm2305 = vweird.f32 %v2299
      %vm2306 = vweird.f32 %v2300
      %vm2307 = vmor %vm2305, %vm2306
      %v2308 = vsel %vm2307, %v2300, %v2304
      %v2309 = vand.u32 2147483647, %v2299
      %vm2310 = vcmp.eq.f32.partialorder %v2309, 8.507059e+37
      %v2311 = vand.u32 %v2299, 2147483648
      %v2312 = vor.u32 1.1754944e-38, %v2311
      %v2313 = vsel %vm2310, %v2312, %v2308
      %v2314 = vmul.f32 1.0, %v2313
      %v2315 = vmul.f32 %v2294, %v2006
      %v2316 = vmul.f32 %v2275, %v2295
      %v2317 = vadd.f32 %v2315, %v2316
      %v2318 = vtanh.pop %v2317
      %v2319 = vmul.f32 %v2314, %v2318
      %v2320 = vsel %vm2017, %v2319, %v2005
      %v2321 = vsel %vm2017, %v2317, %v2006
      %v2322 = vsel %vm2017, %v2319, 0.0
      %s2323 = scalar_lea.vmem [#allocation17], 32
      %2324 = vst [vmem:[%s2323] sm:$0xff] %v2322
      %s2325 = sadd.s32 %s142, 5
      %v2326 = vstv %s2325
      %vm2327 = vcmp.gt.s32.totalorder %v160, %v2326
      %v2328 = vsel %vm2327, 1, 0
      %2329 = vset.pattern.permute.xlu0 0
      %2330 = vperm.xlu0 %2329, %v2328
      %v2331 = vpop.permute.xlu0 %2330
      %vm2332 = vcmp.eq.s32.totalorder %v2331, 1
      %s2333 = scalar_lea.vmem [#allocation6], 80
      %v2334 = vld [vmem:[%s2333] sm:$0xff]
      %v2335 = vld [vmem:[%s2333 + $0x8] sm:$0xff]
      %v2336 = vunpack.c.l.bf16 %v2334
      %v2337 = vunpack.c.h.bf16 %v2334
      %v2338 = vunpack.c.l.bf16 %v2335
      %v2339 = vunpack.c.h.bf16 %v2335
      %v2340 = vpack.c.bf16 %v2145, %v2145
      %2341 = vmatpush.bf16.msra.mxu0 %v411
      %2342 = vmatpush.bf16.msra.mxu0 %v407
      %2343 = vmatpush.bf16.msra.mxu0 %v403
      %2344 = vmatpush.bf16.msra.mxu0 %v399
      %2345 = vmatpush.bf16.msra.mxu0 %v395
      %2346 = vmatpush.bf16.msra.mxu0 %v391
      %2347 = vmatpush.bf16.msra.mxu0 %v387
      %2348 = vmatpush.bf16.msra.mxu0 %v383
      %2349 = vmatmul.bf16.gmra.mxu0 %v2340
      %v2350 = vpop.f32.mrf.mxu0
      %v2351 = vadd.f32 0.0, %v2350
      %v2352 = vpop.f32.mrf.mxu0
      %2353 = vdwg.mxu0
      %2354 = vmatpush.bf16.msra.mxu0 %v412
      %2355 = vmatpush.bf16.msra.mxu0 %v408
      %2356 = vmatpush.bf16.msra.mxu0 %v404
      %2357 = vmatpush.bf16.msra.mxu0 %v400
      %2358 = vmatpush.bf16.msra.mxu0 %v396
      %2359 = vmatpush.bf16.msra.mxu0 %v392
      %2360 = vmatpush.bf16.msra.mxu0 %v388
      %2361 = vmatpush.bf16.msra.mxu0 %v384
      %2362 = vmatmul.bf16.gmra.mxu0 %v2340
      %v2363 = vpop.f32.mrf.mxu0
      %v2364 = vadd.f32 0.0, %v2363
      %v2365 = vpop.f32.mrf.mxu0
      %2366 = vdwg.mxu0
      %2367 = vmatpush.bf16.msra.mxu0 %v413
      %2368 = vmatpush.bf16.msra.mxu0 %v409
      %2369 = vmatpush.bf16.msra.mxu0 %v405
      %2370 = vmatpush.bf16.msra.mxu0 %v401
      %2371 = vmatpush.bf16.msra.mxu0 %v397
      %2372 = vmatpush.bf16.msra.mxu0 %v393
      %2373 = vmatpush.bf16.msra.mxu0 %v389
      %2374 = vmatpush.bf16.msra.mxu0 %v385
      %2375 = vmatmul.bf16.gmra.mxu0 %v2340
      %v2376 = vpop.f32.mrf.mxu0
      %v2377 = vadd.f32 0.0, %v2376
      %v2378 = vpop.f32.mrf.mxu0
      %2379 = vdwg.mxu0
      %2380 = vmatpush.bf16.msra.mxu0 %v414
      %2381 = vmatpush.bf16.msra.mxu0 %v410
      %2382 = vmatpush.bf16.msra.mxu0 %v406
      %2383 = vmatpush.bf16.msra.mxu0 %v402
      %2384 = vmatpush.bf16.msra.mxu0 %v398
      %2385 = vmatpush.bf16.msra.mxu0 %v394
      %2386 = vmatpush.bf16.msra.mxu0 %v390
      %2387 = vmatpush.bf16.msra.mxu0 %v386
      %2388 = vmatmul.bf16.gmra.mxu0 %v2340
      %v2389 = vpop.f32.mrf.mxu0
      %v2390 = vadd.f32 0.0, %v2389
      %v2391 = vpop.f32.mrf.mxu0
      %2392 = vdwg.mxu0
      %v2393 = vadd.f32 %v2336, %v2351
      %v2394 = vadd.f32 %v2337, %v2364
      %v2395 = vadd.f32 %v2338, %v2377
      %v2396 = vadd.f32 %v2339, %v2390
      %v2397 = vxor.u32 %v2393, 2147483648
      %v2398 = vmul.f32 %v2397, 1.442695
      %v2399 = vpow.pop %v2398
      %v2400 = vadd.f32 %v2399, 1.0
      %v2401 = vrcp.pop %v2400
      %v2402 = vmul.f32 %v2400, %v2401
      %v2403 = vsub.f32 1.0, %v2402
      %v2404 = vmul.f32 %v2401, %v2403
      %v2405 = vadd.f32 %v2401, %v2404
      %vm2406 = vweird.f32 %v2400
      %vm2407 = vweird.f32 %v2401
      %vm2408 = vmor %vm2406, %vm2407
      %v2409 = vsel %vm2408, %v2401, %v2405
      %v2410 = vand.u32 2147483647, %v2400
      %vm2411 = vcmp.eq.f32.partialorder %v2410, 8.507059e+37
      %v2412 = vand.u32 %v2400, 2147483648
      %v2413 = vor.u32 1.1754944e-38, %v2412
      %v2414 = vsel %vm2411, %v2413, %v2409
      %v2415 = vmul.f32 1.0, %v2414
      %v2416 = vxor.u32 %v2394, 2147483648
      %v2417 = vmul.f32 %v2416, 1.442695
      %v2418 = vpow.pop %v2417
      %v2419 = vadd.f32 %v2418, 1.0
      %v2420 = vrcp.pop %v2419
      %v2421 = vmul.f32 %v2419, %v2420
      %v2422 = vsub.f32 1.0, %v2421
      %v2423 = vmul.f32 %v2420, %v2422
      %v2424 = vadd.f32 %v2420, %v2423
      %vm2425 = vweird.f32 %v2419
      %vm2426 = vweird.f32 %v2420
      %vm2427 = vmor %vm2425, %vm2426
      %v2428 = vsel %vm2427, %v2420, %v2424
      %v2429 = vand.u32 2147483647, %v2419
      %vm2430 = vcmp.eq.f32.partialorder %v2429, 8.507059e+37
      %v2431 = vand.u32 %v2419, 2147483648
      %v2432 = vor.u32 1.1754944e-38, %v2431
      %v2433 = vsel %vm2430, %v2432, %v2428
      %v2434 = vmul.f32 1.0, %v2433
      %v2435 = vtanh.pop %v2395
      %v2436 = vxor.u32 %v2396, 2147483648
      %v2437 = vmul.f32 %v2436, 1.442695
      %v2438 = vpow.pop %v2437
      %v2439 = vadd.f32 %v2438, 1.0
      %v2440 = vrcp.pop %v2439
      %v2441 = vmul.f32 %v2439, %v2440
      %v2442 = vsub.f32 1.0, %v2441
      %v2443 = vmul.f32 %v2440, %v2442
      %v2444 = vadd.f32 %v2440, %v2443
      %vm2445 = vweird.f32 %v2439
      %vm2446 = vweird.f32 %v2440
      %vm2447 = vmor %vm2445, %vm2446
      %v2448 = vsel %vm2447, %v2440, %v2444
      %v2449 = vand.u32 2147483647, %v2439
      %vm2450 = vcmp.eq.f32.partialorder %v2449, 8.507059e+37
      %v2451 = vand.u32 %v2439, 2147483648
      %v2452 = vor.u32 1.1754944e-38, %v2451
      %v2453 = vsel %vm2450, %v2452, %v2448
      %v2454 = vmul.f32 1.0, %v2453
      %v2455 = vmul.f32 %v2434, %v2146
      %v2456 = vmul.f32 %v2415, %v2435
      %v2457 = vadd.f32 %v2455, %v2456
      %v2458 = vtanh.pop %v2457
      %v2459 = vmul.f32 %v2454, %v2458
      %v2460 = vsel %vm2332, %v2459, %v2145
      %v2461 = vsel %vm2332, %v2457, %v2146
      %v2462 = vpack.c.bf16 %v2459, %v2459
      %v2463 = vpack.c.bf16 %v2320, %v2320
      %2464 = vmatpush.bf16.msra.mxu0 %v694
      %2465 = vmatpush.bf16.msra.mxu0 %v690
      %2466 = vmatpush.bf16.msra.mxu0 %v686
      %2467 = vmatpush.bf16.msra.mxu0 %v682
      %2468 = vmatpush.bf16.msra.mxu0 %v678
      %2469 = vmatpush.bf16.msra.mxu0 %v674
      %2470 = vmatpush.bf16.msra.mxu0 %v670
      %2471 = vmatpush.bf16.msra.mxu0 %v666
      %2472 = vmatmul.bf16.gmra.mxu0 %v2463
      %v2473 = vpop.f32.mrf.mxu0
      %v2474 = vadd.f32 0.0, %v2473
      %v2475 = vpop.f32.mrf.mxu0
      %2476 = vdwg.mxu0
      %2477 = vmatpush.bf16.msra.mxu0 %v695
      %2478 = vmatpush.bf16.msra.mxu0 %v691
      %2479 = vmatpush.bf16.msra.mxu0 %v687
      %2480 = vmatpush.bf16.msra.mxu0 %v683
      %2481 = vmatpush.bf16.msra.mxu0 %v679
      %2482 = vmatpush.bf16.msra.mxu0 %v675
      %2483 = vmatpush.bf16.msra.mxu0 %v671
      %2484 = vmatpush.bf16.msra.mxu0 %v667
      %2485 = vmatmul.bf16.gmra.mxu0 %v2463
      %v2486 = vpop.f32.mrf.mxu0
      %v2487 = vadd.f32 0.0, %v2486
      %v2488 = vpop.f32.mrf.mxu0
      %2489 = vdwg.mxu0
      %2490 = vmatpush.bf16.msra.mxu0 %v696
      %2491 = vmatpush.bf16.msra.mxu0 %v692
      %2492 = vmatpush.bf16.msra.mxu0 %v688
      %2493 = vmatpush.bf16.msra.mxu0 %v684
      %2494 = vmatpush.bf16.msra.mxu0 %v680
      %2495 = vmatpush.bf16.msra.mxu0 %v676
      %2496 = vmatpush.bf16.msra.mxu0 %v672
      %2497 = vmatpush.bf16.msra.mxu0 %v668
      %2498 = vmatmul.bf16.gmra.mxu0 %v2463
      %v2499 = vpop.f32.mrf.mxu0
      %v2500 = vadd.f32 0.0, %v2499
      %v2501 = vpop.f32.mrf.mxu0
      %2502 = vdwg.mxu0
      %2503 = vmatpush.bf16.msra.mxu0 %v697
      %2504 = vmatpush.bf16.msra.mxu0 %v693
      %2505 = vmatpush.bf16.msra.mxu0 %v689
      %2506 = vmatpush.bf16.msra.mxu0 %v685
      %2507 = vmatpush.bf16.msra.mxu0 %v681
      %2508 = vmatpush.bf16.msra.mxu0 %v677
      %2509 = vmatpush.bf16.msra.mxu0 %v673
      %2510 = vmatpush.bf16.msra.mxu0 %v669
      %2511 = vmatmul.bf16.gmra.mxu0 %v2463
      %v2512 = vpop.f32.mrf.mxu0
      %v2513 = vadd.f32 0.0, %v2512
      %v2514 = vpop.f32.mrf.mxu0
      %2515 = vdwg.mxu0
      %2516 = vmatpush.bf16.msra.mxu0 %v906
      %2517 = vmatpush.bf16.msra.mxu0 %v902
      %2518 = vmatpush.bf16.msra.mxu0 %v898
      %2519 = vmatpush.bf16.msra.mxu0 %v894
      %2520 = vmatpush.bf16.msra.mxu0 %v890
      %2521 = vmatpush.bf16.msra.mxu0 %v886
      %2522 = vmatpush.bf16.msra.mxu0 %v882
      %2523 = vmatpush.bf16.msra.mxu0 %v878
      %2524 = vmatmul.bf16.gmra.mxu0 %v2462
      %v2525 = vpop.f32.mrf.mxu0
      %v2526 = vadd.f32 %v2474, %v2525
      %v2527 = vpop.f32.mrf.mxu0
      %2528 = vdwg.mxu0
      %2529 = vmatpush.bf16.msra.mxu0 %v907
      %2530 = vmatpush.bf16.msra.mxu0 %v903
      %2531 = vmatpush.bf16.msra.mxu0 %v899
      %2532 = vmatpush.bf16.msra.mxu0 %v895
      %2533 = vmatpush.bf16.msra.mxu0 %v891
      %2534 = vmatpush.bf16.msra.mxu0 %v887
      %2535 = vmatpush.bf16.msra.mxu0 %v883
      %2536 = vmatpush.bf16.msra.mxu0 %v879
      %2537 = vmatmul.bf16.gmra.mxu0 %v2462
      %v2538 = vpop.f32.mrf.mxu0
      %v2539 = vadd.f32 %v2487, %v2538
      %v2540 = vpop.f32.mrf.mxu0
      %2541 = vdwg.mxu0
      %2542 = vmatpush.bf16.msra.mxu0 %v908
      %2543 = vmatpush.bf16.msra.mxu0 %v904
      %2544 = vmatpush.bf16.msra.mxu0 %v900
      %2545 = vmatpush.bf16.msra.mxu0 %v896
      %2546 = vmatpush.bf16.msra.mxu0 %v892
      %2547 = vmatpush.bf16.msra.mxu0 %v888
      %2548 = vmatpush.bf16.msra.mxu0 %v884
      %2549 = vmatpush.bf16.msra.mxu0 %v880
      %2550 = vmatmul.bf16.gmra.mxu0 %v2462
      %v2551 = vpop.f32.mrf.mxu0
      %v2552 = vadd.f32 %v2500, %v2551
      %v2553 = vpop.f32.mrf.mxu0
      %2554 = vdwg.mxu0
      %2555 = vmatpush.bf16.msra.mxu0 %v909
      %2556 = vmatpush.bf16.msra.mxu0 %v905
      %2557 = vmatpush.bf16.msra.mxu0 %v901
      %2558 = vmatpush.bf16.msra.mxu0 %v897
      %2559 = vmatpush.bf16.msra.mxu0 %v893
      %2560 = vmatpush.bf16.msra.mxu0 %v889
      %2561 = vmatpush.bf16.msra.mxu0 %v885
      %2562 = vmatpush.bf16.msra.mxu0 %v881
      %2563 = vmatmul.bf16.gmra.mxu0 %v2462
      %v2564 = vpop.f32.mrf.mxu0
      %v2565 = vadd.f32 %v2513, %v2564
      %v2566 = vpop.f32.mrf.mxu0
      %2567 = vdwg.mxu0
      %v2568 = vadd.f32 %v2526, %v259
      %v2569 = vadd.f32 %v2539, %v260
      %v2570 = vadd.f32 %v2552, %v261
      %v2571 = vadd.f32 %v2565, %v262
      %v2572 = vxor.u32 %v2568, 2147483648
      %v2573 = vmul.f32 %v2572, 1.442695
      %v2574 = vpow.pop %v2573
      %v2575 = vadd.f32 %v2574, 1.0
      %v2576 = vrcp.pop %v2575
      %v2577 = vmul.f32 %v2575, %v2576
      %v2578 = vsub.f32 1.0, %v2577
      %v2579 = vmul.f32 %v2576, %v2578
      %v2580 = vadd.f32 %v2576, %v2579
      %vm2581 = vweird.f32 %v2575
      %vm2582 = vweird.f32 %v2576
      %vm2583 = vmor %vm2581, %vm2582
      %v2584 = vsel %vm2583, %v2576, %v2580
      %v2585 = vand.u32 2147483647, %v2575
      %vm2586 = vcmp.eq.f32.partialorder %v2585, 8.507059e+37
      %v2587 = vand.u32 %v2575, 2147483648
      %v2588 = vor.u32 1.1754944e-38, %v2587
      %v2589 = vsel %vm2586, %v2588, %v2584
      %v2590 = vmul.f32 1.0, %v2589
      %v2591 = vxor.u32 %v2569, 2147483648
      %v2592 = vmul.f32 %v2591, 1.442695
      %v2593 = vpow.pop %v2592
      %v2594 = vadd.f32 %v2593, 1.0
      %v2595 = vrcp.pop %v2594
      %v2596 = vmul.f32 %v2594, %v2595
      %v2597 = vsub.f32 1.0, %v2596
      %v2598 = vmul.f32 %v2595, %v2597
      %v2599 = vadd.f32 %v2595, %v2598
      %vm2600 = vweird.f32 %v2594
      %vm2601 = vweird.f32 %v2595
      %vm2602 = vmor %vm2600, %vm2601
      %v2603 = vsel %vm2602, %v2595, %v2599
      %v2604 = vand.u32 2147483647, %v2594
      %vm2605 = vcmp.eq.f32.partialorder %v2604, 8.507059e+37
      %v2606 = vand.u32 %v2594, 2147483648
      %v2607 = vor.u32 1.1754944e-38, %v2606
      %v2608 = vsel %vm2605, %v2607, %v2603
      %v2609 = vmul.f32 1.0, %v2608
      %v2610 = vtanh.pop %v2570
      %v2611 = vxor.u32 %v2571, 2147483648
      %v2612 = vmul.f32 %v2611, 1.442695
      %v2613 = vpow.pop %v2612
      %v2614 = vadd.f32 %v2613, 1.0
      %v2615 = vrcp.pop %v2614
      %v2616 = vmul.f32 %v2614, %v2615
      %v2617 = vsub.f32 1.0, %v2616
      %v2618 = vmul.f32 %v2615, %v2617
      %v2619 = vadd.f32 %v2615, %v2618
      %vm2620 = vweird.f32 %v2614
      %vm2621 = vweird.f32 %v2615
      %vm2622 = vmor %vm2620, %vm2621
      %v2623 = vsel %vm2622, %v2615, %v2619
      %v2624 = vand.u32 2147483647, %v2614
      %vm2625 = vcmp.eq.f32.partialorder %v2624, 8.507059e+37
      %v2626 = vand.u32 %v2614, 2147483648
      %v2627 = vor.u32 1.1754944e-38, %v2626
      %v2628 = vsel %vm2625, %v2627, %v2623
      %v2629 = vmul.f32 1.0, %v2628
      %v2630 = vmul.f32 %v2609, %v2321
      %v2631 = vmul.f32 %v2590, %v2610
      %v2632 = vadd.f32 %v2630, %v2631
      %v2633 = vtanh.pop %v2632
      %v2634 = vmul.f32 %v2629, %v2633
      %v2635 = vsel %vm2332, %v2634, %v2320
      %v2636 = vsel %vm2332, %v2632, %v2321
      %v2637 = vsel %vm2332, %v2634, 0.0
      %s2638 = scalar_lea.vmem [#allocation17], 40
      %2639 = vst [vmem:[%s2638] sm:$0xff] %v2637
      %s2640 = sadd.s32 %s142, 6
      %v2641 = vstv %s2640
      %vm2642 = vcmp.gt.s32.totalorder %v160, %v2641
      %v2643 = vsel %vm2642, 1, 0
      %2644 = vset.pattern.permute.xlu0 0
      %2645 = vperm.xlu0 %2644, %v2643
      %v2646 = vpop.permute.xlu0 %2645
      %vm2647 = vcmp.eq.s32.totalorder %v2646, 1
      %s2648 = scalar_lea.vmem [#allocation6], 96
      %v2649 = vld [vmem:[%s2648] sm:$0xff]
      %v2650 = vld [vmem:[%s2648 + $0x8] sm:$0xff]
      %v2651 = vunpack.c.l.bf16 %v2649
      %v2652 = vunpack.c.h.bf16 %v2649
      %v2653 = vunpack.c.l.bf16 %v2650
      %v2654 = vunpack.c.h.bf16 %v2650
      %v2655 = vpack.c.bf16 %v2460, %v2460
      %2656 = vmatpush.bf16.msra.mxu0 %v411
      %2657 = vmatpush.bf16.msra.mxu0 %v407
      %2658 = vmatpush.bf16.msra.mxu0 %v403
      %2659 = vmatpush.bf16.msra.mxu0 %v399
      %2660 = vmatpush.bf16.msra.mxu0 %v395
      %2661 = vmatpush.bf16.msra.mxu0 %v391
      %2662 = vmatpush.bf16.msra.mxu0 %v387
      %2663 = vmatpush.bf16.msra.mxu0 %v383
      %2664 = vmatmul.bf16.gmra.mxu0 %v2655
      %v2665 = vpop.f32.mrf.mxu0
      %v2666 = vadd.f32 0.0, %v2665
      %v2667 = vpop.f32.mrf.mxu0
      %2668 = vdwg.mxu0
      %2669 = vmatpush.bf16.msra.mxu0 %v412
      %2670 = vmatpush.bf16.msra.mxu0 %v408
      %2671 = vmatpush.bf16.msra.mxu0 %v404
      %2672 = vmatpush.bf16.msra.mxu0 %v400
      %2673 = vmatpush.bf16.msra.mxu0 %v396
      %2674 = vmatpush.bf16.msra.mxu0 %v392
      %2675 = vmatpush.bf16.msra.mxu0 %v388
      %2676 = vmatpush.bf16.msra.mxu0 %v384
      %2677 = vmatmul.bf16.gmra.mxu0 %v2655
      %v2678 = vpop.f32.mrf.mxu0
      %v2679 = vadd.f32 0.0, %v2678
      %v2680 = vpop.f32.mrf.mxu0
      %2681 = vdwg.mxu0
      %2682 = vmatpush.bf16.msra.mxu0 %v413
      %2683 = vmatpush.bf16.msra.mxu0 %v409
      %2684 = vmatpush.bf16.msra.mxu0 %v405
      %2685 = vmatpush.bf16.msra.mxu0 %v401
      %2686 = vmatpush.bf16.msra.mxu0 %v397
      %2687 = vmatpush.bf16.msra.mxu0 %v393
      %2688 = vmatpush.bf16.msra.mxu0 %v389
      %2689 = vmatpush.bf16.msra.mxu0 %v385
      %2690 = vmatmul.bf16.gmra.mxu0 %v2655
      %v2691 = vpop.f32.mrf.mxu0
      %v2692 = vadd.f32 0.0, %v2691
      %v2693 = vpop.f32.mrf.mxu0
      %2694 = vdwg.mxu0
      %2695 = vmatpush.bf16.msra.mxu0 %v414
      %2696 = vmatpush.bf16.msra.mxu0 %v410
      %2697 = vmatpush.bf16.msra.mxu0 %v406
      %2698 = vmatpush.bf16.msra.mxu0 %v402
      %2699 = vmatpush.bf16.msra.mxu0 %v398
      %2700 = vmatpush.bf16.msra.mxu0 %v394
      %2701 = vmatpush.bf16.msra.mxu0 %v390
      %2702 = vmatpush.bf16.msra.mxu0 %v386
      %2703 = vmatmul.bf16.gmra.mxu0 %v2655
      %v2704 = vpop.f32.mrf.mxu0
      %v2705 = vadd.f32 0.0, %v2704
      %v2706 = vpop.f32.mrf.mxu0
      %2707 = vdwg.mxu0
      %v2708 = vadd.f32 %v2651, %v2666
      %v2709 = vadd.f32 %v2652, %v2679
      %v2710 = vadd.f32 %v2653, %v2692
      %v2711 = vadd.f32 %v2654, %v2705
      %v2712 = vxor.u32 %v2708, 2147483648
      %v2713 = vmul.f32 %v2712, 1.442695
      %v2714 = vpow.pop %v2713
      %v2715 = vadd.f32 %v2714, 1.0
      %v2716 = vrcp.pop %v2715
      %v2717 = vmul.f32 %v2715, %v2716
      %v2718 = vsub.f32 1.0, %v2717
      %v2719 = vmul.f32 %v2716, %v2718
      %v2720 = vadd.f32 %v2716, %v2719
      %vm2721 = vweird.f32 %v2715
      %vm2722 = vweird.f32 %v2716
      %vm2723 = vmor %vm2721, %vm2722
      %v2724 = vsel %vm2723, %v2716, %v2720
      %v2725 = vand.u32 2147483647, %v2715
      %vm2726 = vcmp.eq.f32.partialorder %v2725, 8.507059e+37
      %v2727 = vand.u32 %v2715, 2147483648
      %v2728 = vor.u32 1.1754944e-38, %v2727
      %v2729 = vsel %vm2726, %v2728, %v2724
      %v2730 = vmul.f32 1.0, %v2729
      %v2731 = vxor.u32 %v2709, 2147483648
      %v2732 = vmul.f32 %v2731, 1.442695
      %v2733 = vpow.pop %v2732
      %v2734 = vadd.f32 %v2733, 1.0
      %v2735 = vrcp.pop %v2734
      %v2736 = vmul.f32 %v2734, %v2735
      %v2737 = vsub.f32 1.0, %v2736
      %v2738 = vmul.f32 %v2735, %v2737
      %v2739 = vadd.f32 %v2735, %v2738
      %vm2740 = vweird.f32 %v2734
      %vm2741 = vweird.f32 %v2735
      %vm2742 = vmor %vm2740, %vm2741
      %v2743 = vsel %vm2742, %v2735, %v2739
      %v2744 = vand.u32 2147483647, %v2734
      %vm2745 = vcmp.eq.f32.partialorder %v2744, 8.507059e+37
      %v2746 = vand.u32 %v2734, 2147483648
      %v2747 = vor.u32 1.1754944e-38, %v2746
      %v2748 = vsel %vm2745, %v2747, %v2743
      %v2749 = vmul.f32 1.0, %v2748
      %v2750 = vtanh.pop %v2710
      %v2751 = vxor.u32 %v2711, 2147483648
      %v2752 = vmul.f32 %v2751, 1.442695
      %v2753 = vpow.pop %v2752
      %v2754 = vadd.f32 %v2753, 1.0
      %v2755 = vrcp.pop %v2754
      %v2756 = vmul.f32 %v2754, %v2755
      %v2757 = vsub.f32 1.0, %v2756
      %v2758 = vmul.f32 %v2755, %v2757
      %v2759 = vadd.f32 %v2755, %v2758
      %vm2760 = vweird.f32 %v2754
      %vm2761 = vweird.f32 %v2755
      %vm2762 = vmor %vm2760, %vm2761
      %v2763 = vsel %vm2762, %v2755, %v2759
      %v2764 = vand.u32 2147483647, %v2754
      %vm2765 = vcmp.eq.f32.partialorder %v2764, 8.507059e+37
      %v2766 = vand.u32 %v2754, 2147483648
      %v2767 = vor.u32 1.1754944e-38, %v2766
      %v2768 = vsel %vm2765, %v2767, %v2763
      %v2769 = vmul.f32 1.0, %v2768
      %v2770 = vmul.f32 %v2749, %v2461
      %v2771 = vmul.f32 %v2730, %v2750
      %v2772 = vadd.f32 %v2770, %v2771
      %v2773 = vtanh.pop %v2772
      %v2774 = vmul.f32 %v2769, %v2773
      %v2775 = vsel %vm2647, %v2774, %v2460
      %v2776 = vsel %vm2647, %v2772, %v2461
      %v2777 = vpack.c.bf16 %v2774, %v2774
      %v2778 = vpack.c.bf16 %v2635, %v2635
      %2779 = vmatpush.bf16.msra.mxu0 %v694
      %2780 = vmatpush.bf16.msra.mxu0 %v690
      %2781 = vmatpush.bf16.msra.mxu0 %v686
      %2782 = vmatpush.bf16.msra.mxu0 %v682
      %2783 = vmatpush.bf16.msra.mxu0 %v678
      %2784 = vmatpush.bf16.msra.mxu0 %v674
      %2785 = vmatpush.bf16.msra.mxu0 %v670
      %2786 = vmatpush.bf16.msra.mxu0 %v666
      %2787 = vmatmul.bf16.gmra.mxu0 %v2778
      %v2788 = vpop.f32.mrf.mxu0
      %v2789 = vadd.f32 0.0, %v2788
      %v2790 = vpop.f32.mrf.mxu0
      %2791 = vdwg.mxu0
      %2792 = vmatpush.bf16.msra.mxu0 %v695
      %2793 = vmatpush.bf16.msra.mxu0 %v691
      %2794 = vmatpush.bf16.msra.mxu0 %v687
      %2795 = vmatpush.bf16.msra.mxu0 %v683
      %2796 = vmatpush.bf16.msra.mxu0 %v679
      %2797 = vmatpush.bf16.msra.mxu0 %v675
      %2798 = vmatpush.bf16.msra.mxu0 %v671
      %2799 = vmatpush.bf16.msra.mxu0 %v667
      %2800 = vmatmul.bf16.gmra.mxu0 %v2778
      %v2801 = vpop.f32.mrf.mxu0
      %v2802 = vadd.f32 0.0, %v2801
      %v2803 = vpop.f32.mrf.mxu0
      %2804 = vdwg.mxu0
      %2805 = vmatpush.bf16.msra.mxu0 %v696
      %2806 = vmatpush.bf16.msra.mxu0 %v692
      %2807 = vmatpush.bf16.msra.mxu0 %v688
      %2808 = vmatpush.bf16.msra.mxu0 %v684
      %2809 = vmatpush.bf16.msra.mxu0 %v680
      %2810 = vmatpush.bf16.msra.mxu0 %v676
      %2811 = vmatpush.bf16.msra.mxu0 %v672
      %2812 = vmatpush.bf16.msra.mxu0 %v668
      %2813 = vmatmul.bf16.gmra.mxu0 %v2778
      %v2814 = vpop.f32.mrf.mxu0
      %v2815 = vadd.f32 0.0, %v2814
      %v2816 = vpop.f32.mrf.mxu0
      %2817 = vdwg.mxu0
      %2818 = vmatpush.bf16.msra.mxu0 %v697
      %2819 = vmatpush.bf16.msra.mxu0 %v693
      %2820 = vmatpush.bf16.msra.mxu0 %v689
      %2821 = vmatpush.bf16.msra.mxu0 %v685
      %2822 = vmatpush.bf16.msra.mxu0 %v681
      %2823 = vmatpush.bf16.msra.mxu0 %v677
      %2824 = vmatpush.bf16.msra.mxu0 %v673
      %2825 = vmatpush.bf16.msra.mxu0 %v669
      %2826 = vmatmul.bf16.gmra.mxu0 %v2778
      %v2827 = vpop.f32.mrf.mxu0
      %v2828 = vadd.f32 0.0, %v2827
      %v2829 = vpop.f32.mrf.mxu0
      %2830 = vdwg.mxu0
      %2831 = vmatpush.bf16.msra.mxu0 %v906
      %2832 = vmatpush.bf16.msra.mxu0 %v902
      %2833 = vmatpush.bf16.msra.mxu0 %v898
      %2834 = vmatpush.bf16.msra.mxu0 %v894
      %2835 = vmatpush.bf16.msra.mxu0 %v890
      %2836 = vmatpush.bf16.msra.mxu0 %v886
      %2837 = vmatpush.bf16.msra.mxu0 %v882
      %2838 = vmatpush.bf16.msra.mxu0 %v878
      %2839 = vmatmul.bf16.gmra.mxu0 %v2777
      %v2840 = vpop.f32.mrf.mxu0
      %v2841 = vadd.f32 %v2789, %v2840
      %v2842 = vpop.f32.mrf.mxu0
      %2843 = vdwg.mxu0
      %2844 = vmatpush.bf16.msra.mxu0 %v907
      %2845 = vmatpush.bf16.msra.mxu0 %v903
      %2846 = vmatpush.bf16.msra.mxu0 %v899
      %2847 = vmatpush.bf16.msra.mxu0 %v895
      %2848 = vmatpush.bf16.msra.mxu0 %v891
      %2849 = vmatpush.bf16.msra.mxu0 %v887
      %2850 = vmatpush.bf16.msra.mxu0 %v883
      %2851 = vmatpush.bf16.msra.mxu0 %v879
      %2852 = vmatmul.bf16.gmra.mxu0 %v2777
      %v2853 = vpop.f32.mrf.mxu0
      %v2854 = vadd.f32 %v2802, %v2853
      %v2855 = vpop.f32.mrf.mxu0
      %2856 = vdwg.mxu0
      %2857 = vmatpush.bf16.msra.mxu0 %v908
      %2858 = vmatpush.bf16.msra.mxu0 %v904
      %2859 = vmatpush.bf16.msra.mxu0 %v900
      %2860 = vmatpush.bf16.msra.mxu0 %v896
      %2861 = vmatpush.bf16.msra.mxu0 %v892
      %2862 = vmatpush.bf16.msra.mxu0 %v888
      %2863 = vmatpush.bf16.msra.mxu0 %v884
      %2864 = vmatpush.bf16.msra.mxu0 %v880
      %2865 = vmatmul.bf16.gmra.mxu0 %v2777
      %v2866 = vpop.f32.mrf.mxu0
      %v2867 = vadd.f32 %v2815, %v2866
      %v2868 = vpop.f32.mrf.mxu0
      %2869 = vdwg.mxu0
      %2870 = vmatpush.bf16.msra.mxu0 %v909
      %2871 = vmatpush.bf16.msra.mxu0 %v905
      %2872 = vmatpush.bf16.msra.mxu0 %v901
      %2873 = vmatpush.bf16.msra.mxu0 %v897
      %2874 = vmatpush.bf16.msra.mxu0 %v893
      %2875 = vmatpush.bf16.msra.mxu0 %v889
      %2876 = vmatpush.bf16.msra.mxu0 %v885
      %2877 = vmatpush.bf16.msra.mxu0 %v881
      %2878 = vmatmul.bf16.gmra.mxu0 %v2777
      %v2879 = vpop.f32.mrf.mxu0
      %v2880 = vadd.f32 %v2828, %v2879
      %v2881 = vpop.f32.mrf.mxu0
      %2882 = vdwg.mxu0
      %v2883 = vadd.f32 %v2841, %v259
      %v2884 = vadd.f32 %v2854, %v260
      %v2885 = vadd.f32 %v2867, %v261
      %v2886 = vadd.f32 %v2880, %v262
      %v2887 = vxor.u32 %v2883, 2147483648
      %v2888 = vmul.f32 %v2887, 1.442695
      %v2889 = vpow.pop %v2888
      %v2890 = vadd.f32 %v2889, 1.0
      %v2891 = vrcp.pop %v2890
      %v2892 = vmul.f32 %v2890, %v2891
      %v2893 = vsub.f32 1.0, %v2892
      %v2894 = vmul.f32 %v2891, %v2893
      %v2895 = vadd.f32 %v2891, %v2894
      %vm2896 = vweird.f32 %v2890
      %vm2897 = vweird.f32 %v2891
      %vm2898 = vmor %vm2896, %vm2897
      %v2899 = vsel %vm2898, %v2891, %v2895
      %v2900 = vand.u32 2147483647, %v2890
      %vm2901 = vcmp.eq.f32.partialorder %v2900, 8.507059e+37
      %v2902 = vand.u32 %v2890, 2147483648
      %v2903 = vor.u32 1.1754944e-38, %v2902
      %v2904 = vsel %vm2901, %v2903, %v2899
      %v2905 = vmul.f32 1.0, %v2904
      %v2906 = vxor.u32 %v2884, 2147483648
      %v2907 = vmul.f32 %v2906, 1.442695
      %v2908 = vpow.pop %v2907
      %v2909 = vadd.f32 %v2908, 1.0
      %v2910 = vrcp.pop %v2909
      %v2911 = vmul.f32 %v2909, %v2910
      %v2912 = vsub.f32 1.0, %v2911
      %v2913 = vmul.f32 %v2910, %v2912
      %v2914 = vadd.f32 %v2910, %v2913
      %vm2915 = vweird.f32 %v2909
      %vm2916 = vweird.f32 %v2910
      %vm2917 = vmor %vm2915, %vm2916
      %v2918 = vsel %vm2917, %v2910, %v2914
      %v2919 = vand.u32 2147483647, %v2909
      %vm2920 = vcmp.eq.f32.partialorder %v2919, 8.507059e+37
      %v2921 = vand.u32 %v2909, 2147483648
      %v2922 = vor.u32 1.1754944e-38, %v2921
      %v2923 = vsel %vm2920, %v2922, %v2918
      %v2924 = vmul.f32 1.0, %v2923
      %v2925 = vtanh.pop %v2885
      %v2926 = vxor.u32 %v2886, 2147483648
      %v2927 = vmul.f32 %v2926, 1.442695
      %v2928 = vpow.pop %v2927
      %v2929 = vadd.f32 %v2928, 1.0
      %v2930 = vrcp.pop %v2929
      %v2931 = vmul.f32 %v2929, %v2930
      %v2932 = vsub.f32 1.0, %v2931
      %v2933 = vmul.f32 %v2930, %v2932
      %v2934 = vadd.f32 %v2930, %v2933
      %vm2935 = vweird.f32 %v2929
      %vm2936 = vweird.f32 %v2930
      %vm2937 = vmor %vm2935, %vm2936
      %v2938 = vsel %vm2937, %v2930, %v2934
      %v2939 = vand.u32 2147483647, %v2929
      %vm2940 = vcmp.eq.f32.partialorder %v2939, 8.507059e+37
      %v2941 = vand.u32 %v2929, 2147483648
      %v2942 = vor.u32 1.1754944e-38, %v2941
      %v2943 = vsel %vm2940, %v2942, %v2938
      %v2944 = vmul.f32 1.0, %v2943
      %v2945 = vmul.f32 %v2924, %v2636
      %v2946 = vmul.f32 %v2905, %v2925
      %v2947 = vadd.f32 %v2945, %v2946
      %v2948 = vtanh.pop %v2947
      %v2949 = vmul.f32 %v2944, %v2948
      %v2950 = vsel %vm2647, %v2949, %v2635
      %v2951 = vsel %vm2647, %v2947, %v2636
      %v2952 = vsel %vm2647, %v2949, 0.0
      %s2953 = scalar_lea.vmem [#allocation17], 48
      %2954 = vst [vmem:[%s2953] sm:$0xff] %v2952
      %s2955 = sadd.s32 %s142, 7
      %v2956 = vstv %s2955
      %vm2957 = vcmp.gt.s32.totalorder %v160, %v2956
      %v2958 = vsel %vm2957, 1, 0
      %2959 = vset.pattern.permute.xlu0 0
      %2960 = vperm.xlu0 %2959, %v2958
      %v2961 = vpop.permute.xlu0 %2960
      %vm2962 = vcmp.eq.s32.totalorder %v2961, 1
      %s2963 = scalar_lea.vmem [#allocation6], 112
      %v2964 = vld [vmem:[%s2963] sm:$0xff]
      %v2965 = vld [vmem:[%s2963 + $0x8] sm:$0xff]
      %v2966 = vunpack.c.l.bf16 %v2964
      %v2967 = vunpack.c.h.bf16 %v2964
      %v2968 = vunpack.c.l.bf16 %v2965
      %v2969 = vunpack.c.h.bf16 %v2965
      %v2970 = vpack.c.bf16 %v2775, %v2775
      %2971 = vmatpush.bf16.msra.mxu0 %v411
      %2972 = vmatpush.bf16.msra.mxu0 %v407
      %2973 = vmatpush.bf16.msra.mxu0 %v403
      %2974 = vmatpush.bf16.msra.mxu0 %v399
      %2975 = vmatpush.bf16.msra.mxu0 %v395
      %2976 = vmatpush.bf16.msra.mxu0 %v391
      %2977 = vmatpush.bf16.msra.mxu0 %v387
      %2978 = vmatpush.bf16.msra.mxu0 %v383
      %2979 = vmatmul.bf16.gmra.mxu0 %v2970
      %v2980 = vpop.f32.mrf.mxu0
      %v2981 = vadd.f32 0.0, %v2980
      %v2982 = vpop.f32.mrf.mxu0
      %2983 = vdwg.mxu0
      %2984 = vmatpush.bf16.msra.mxu0 %v412
      %2985 = vmatpush.bf16.msra.mxu0 %v408
      %2986 = vmatpush.bf16.msra.mxu0 %v404
      %2987 = vmatpush.bf16.msra.mxu0 %v400
      %2988 = vmatpush.bf16.msra.mxu0 %v396
      %2989 = vmatpush.bf16.msra.mxu0 %v392
      %2990 = vmatpush.bf16.msra.mxu0 %v388
      %2991 = vmatpush.bf16.msra.mxu0 %v384
      %2992 = vmatmul.bf16.gmra.mxu0 %v2970
      %v2993 = vpop.f32.mrf.mxu0
      %v2994 = vadd.f32 0.0, %v2993
      %v2995 = vpop.f32.mrf.mxu0
      %2996 = vdwg.mxu0
      %2997 = vmatpush.bf16.msra.mxu0 %v413
      %2998 = vmatpush.bf16.msra.mxu0 %v409
      %2999 = vmatpush.bf16.msra.mxu0 %v405
      %3000 = vmatpush.bf16.msra.mxu0 %v401
      %3001 = vmatpush.bf16.msra.mxu0 %v397
      %3002 = vmatpush.bf16.msra.mxu0 %v393
      %3003 = vmatpush.bf16.msra.mxu0 %v389
      %3004 = vmatpush.bf16.msra.mxu0 %v385
      %3005 = vmatmul.bf16.gmra.mxu0 %v2970
      %v3006 = vpop.f32.mrf.mxu0
      %v3007 = vadd.f32 0.0, %v3006
      %v3008 = vpop.f32.mrf.mxu0
      %3009 = vdwg.mxu0
      %3010 = vmatpush.bf16.msra.mxu0 %v414
      %3011 = vmatpush.bf16.msra.mxu0 %v410
      %3012 = vmatpush.bf16.msra.mxu0 %v406
      %3013 = vmatpush.bf16.msra.mxu0 %v402
      %3014 = vmatpush.bf16.msra.mxu0 %v398
      %3015 = vmatpush.bf16.msra.mxu0 %v394
      %3016 = vmatpush.bf16.msra.mxu0 %v390
      %3017 = vmatpush.bf16.msra.mxu0 %v386
      %3018 = vmatmul.bf16.gmra.mxu0 %v2970
      %v3019 = vpop.f32.mrf.mxu0
      %v3020 = vadd.f32 0.0, %v3019
      %v3021 = vpop.f32.mrf.mxu0
      %3022 = vdwg.mxu0
      %v3023 = vadd.f32 %v2966, %v2981
      %v3024 = vadd.f32 %v2967, %v2994
      %v3025 = vadd.f32 %v2968, %v3007
      %v3026 = vadd.f32 %v2969, %v3020
      %v3027 = vxor.u32 %v3023, 2147483648
      %v3028 = vmul.f32 %v3027, 1.442695
      %v3029 = vpow.pop %v3028
      %v3030 = vadd.f32 %v3029, 1.0
      %v3031 = vrcp.pop %v3030
      %v3032 = vmul.f32 %v3030, %v3031
      %v3033 = vsub.f32 1.0, %v3032
      %v3034 = vmul.f32 %v3031, %v3033
      %v3035 = vadd.f32 %v3031, %v3034
      %vm3036 = vweird.f32 %v3030
      %vm3037 = vweird.f32 %v3031
      %vm3038 = vmor %vm3036, %vm3037
      %v3039 = vsel %vm3038, %v3031, %v3035
      %v3040 = vand.u32 2147483647, %v3030
      %vm3041 = vcmp.eq.f32.partialorder %v3040, 8.507059e+37
      %v3042 = vand.u32 %v3030, 2147483648
      %v3043 = vor.u32 1.1754944e-38, %v3042
      %v3044 = vsel %vm3041, %v3043, %v3039
      %v3045 = vmul.f32 1.0, %v3044
      %v3046 = vxor.u32 %v3024, 2147483648
      %v3047 = vmul.f32 %v3046, 1.442695
      %v3048 = vpow.pop %v3047
      %v3049 = vadd.f32 %v3048, 1.0
      %v3050 = vrcp.pop %v3049
      %v3051 = vmul.f32 %v3049, %v3050
      %v3052 = vsub.f32 1.0, %v3051
      %v3053 = vmul.f32 %v3050, %v3052
      %v3054 = vadd.f32 %v3050, %v3053
      %vm3055 = vweird.f32 %v3049
      %vm3056 = vweird.f32 %v3050
      %vm3057 = vmor %vm3055, %vm3056
      %v3058 = vsel %vm3057, %v3050, %v3054
      %v3059 = vand.u32 2147483647, %v3049
      %vm3060 = vcmp.eq.f32.partialorder %v3059, 8.507059e+37
      %v3061 = vand.u32 %v3049, 2147483648
      %v3062 = vor.u32 1.1754944e-38, %v3061
      %v3063 = vsel %vm3060, %v3062, %v3058
      %v3064 = vmul.f32 1.0, %v3063
      %v3065 = vtanh.pop %v3025
      %v3066 = vxor.u32 %v3026, 2147483648
      %v3067 = vmul.f32 %v3066, 1.442695
      %v3068 = vpow.pop %v3067
      %v3069 = vadd.f32 %v3068, 1.0
      %v3070 = vrcp.pop %v3069
      %v3071 = vmul.f32 %v3069, %v3070
      %v3072 = vsub.f32 1.0, %v3071
      %v3073 = vmul.f32 %v3070, %v3072
      %v3074 = vadd.f32 %v3070, %v3073
      %vm3075 = vweird.f32 %v3069
      %vm3076 = vweird.f32 %v3070
      %vm3077 = vmor %vm3075, %vm3076
      %v3078 = vsel %vm3077, %v3070, %v3074
      %v3079 = vand.u32 2147483647, %v3069
      %vm3080 = vcmp.eq.f32.partialorder %v3079, 8.507059e+37
      %v3081 = vand.u32 %v3069, 2147483648
      %v3082 = vor.u32 1.1754944e-38, %v3081
      %v3083 = vsel %vm3080, %v3082, %v3078
      %v3084 = vmul.f32 1.0, %v3083
      %v3085 = vmul.f32 %v3064, %v2776
      %v3086 = vmul.f32 %v3045, %v3065
      %v3087 = vadd.f32 %v3085, %v3086
      %v3088 = vtanh.pop %v3087
      %v3089 = vmul.f32 %v3084, %v3088
      %v3090 = vsel %vm2962, %v3089, %v2775
      %v3091 = vsel %vm2962, %v3087, %v2776
      %v3092 = vpack.c.bf16 %v3089, %v3089
      %v3093 = vpack.c.bf16 %v2950, %v2950
      %3094 = vmatpush.bf16.msra.mxu0 %v694
      %3095 = vmatpush.bf16.msra.mxu0 %v690
      %3096 = vmatpush.bf16.msra.mxu0 %v686
      %3097 = vmatpush.bf16.msra.mxu0 %v682
      %3098 = vmatpush.bf16.msra.mxu0 %v678
      %3099 = vmatpush.bf16.msra.mxu0 %v674
      %3100 = vmatpush.bf16.msra.mxu0 %v670
      %3101 = vmatpush.bf16.msra.mxu0 %v666
      %3102 = vmatmul.bf16.gmra.mxu0 %v3093
      %v3103 = vpop.f32.mrf.mxu0
      %v3104 = vadd.f32 0.0, %v3103
      %v3105 = vpop.f32.mrf.mxu0
      %3106 = vdwg.mxu0
      %3107 = vmatpush.bf16.msra.mxu0 %v695
      %3108 = vmatpush.bf16.msra.mxu0 %v691
      %3109 = vmatpush.bf16.msra.mxu0 %v687
      %3110 = vmatpush.bf16.msra.mxu0 %v683
      %3111 = vmatpush.bf16.msra.mxu0 %v679
      %3112 = vmatpush.bf16.msra.mxu0 %v675
      %3113 = vmatpush.bf16.msra.mxu0 %v671
      %3114 = vmatpush.bf16.msra.mxu0 %v667
      %3115 = vmatmul.bf16.gmra.mxu0 %v3093
      %v3116 = vpop.f32.mrf.mxu0
      %v3117 = vadd.f32 0.0, %v3116
      %v3118 = vpop.f32.mrf.mxu0
      %3119 = vdwg.mxu0
      %3120 = vmatpush.bf16.msra.mxu0 %v696
      %3121 = vmatpush.bf16.msra.mxu0 %v692
      %3122 = vmatpush.bf16.msra.mxu0 %v688
      %3123 = vmatpush.bf16.msra.mxu0 %v684
      %3124 = vmatpush.bf16.msra.mxu0 %v680
      %3125 = vmatpush.bf16.msra.mxu0 %v676
      %3126 = vmatpush.bf16.msra.mxu0 %v672
      %3127 = vmatpush.bf16.msra.mxu0 %v668
      %3128 = vmatmul.bf16.gmra.mxu0 %v3093
      %v3129 = vpop.f32.mrf.mxu0
      %v3130 = vadd.f32 0.0, %v3129
      %v3131 = vpop.f32.mrf.mxu0
      %3132 = vdwg.mxu0
      %3133 = vmatpush.bf16.msra.mxu0 %v697
      %3134 = vmatpush.bf16.msra.mxu0 %v693
      %3135 = vmatpush.bf16.msra.mxu0 %v689
      %3136 = vmatpush.bf16.msra.mxu0 %v685
      %3137 = vmatpush.bf16.msra.mxu0 %v681
      %3138 = vmatpush.bf16.msra.mxu0 %v677
      %3139 = vmatpush.bf16.msra.mxu0 %v673
      %3140 = vmatpush.bf16.msra.mxu0 %v669
      %3141 = vmatmul.bf16.gmra.mxu0 %v3093
      %v3142 = vpop.f32.mrf.mxu0
      %v3143 = vadd.f32 0.0, %v3142
      %v3144 = vpop.f32.mrf.mxu0
      %3145 = vdwg.mxu0
      %3146 = vmatpush.bf16.msra.mxu0 %v906
      %3147 = vmatpush.bf16.msra.mxu0 %v902
      %3148 = vmatpush.bf16.msra.mxu0 %v898
      %3149 = vmatpush.bf16.msra.mxu0 %v894
      %3150 = vmatpush.bf16.msra.mxu0 %v890
      %3151 = vmatpush.bf16.msra.mxu0 %v886
      %3152 = vmatpush.bf16.msra.mxu0 %v882
      %3153 = vmatpush.bf16.msra.mxu0 %v878
      %3154 = vmatmul.bf16.gmra.mxu0 %v3092
      %v3155 = vpop.f32.mrf.mxu0
      %v3156 = vadd.f32 %v3104, %v3155
      %v3157 = vpop.f32.mrf.mxu0
      %3158 = vdwg.mxu0
      %3159 = vmatpush.bf16.msra.mxu0 %v907
      %3160 = vmatpush.bf16.msra.mxu0 %v903
      %3161 = vmatpush.bf16.msra.mxu0 %v899
      %3162 = vmatpush.bf16.msra.mxu0 %v895
      %3163 = vmatpush.bf16.msra.mxu0 %v891
      %3164 = vmatpush.bf16.msra.mxu0 %v887
      %3165 = vmatpush.bf16.msra.mxu0 %v883
      %3166 = vmatpush.bf16.msra.mxu0 %v879
      %3167 = vmatmul.bf16.gmra.mxu0 %v3092
      %v3168 = vpop.f32.mrf.mxu0
      %v3169 = vadd.f32 %v3117, %v3168
      %v3170 = vpop.f32.mrf.mxu0
      %3171 = vdwg.mxu0
      %3172 = vmatpush.bf16.msra.mxu0 %v908
      %3173 = vmatpush.bf16.msra.mxu0 %v904
      %3174 = vmatpush.bf16.msra.mxu0 %v900
      %3175 = vmatpush.bf16.msra.mxu0 %v896
      %3176 = vmatpush.bf16.msra.mxu0 %v892
      %3177 = vmatpush.bf16.msra.mxu0 %v888
      %3178 = vmatpush.bf16.msra.mxu0 %v884
      %3179 = vmatpush.bf16.msra.mxu0 %v880
      %3180 = vmatmul.bf16.gmra.mxu0 %v3092
      %v3181 = vpop.f32.mrf.mxu0
      %v3182 = vadd.f32 %v3130, %v3181
      %v3183 = vpop.f32.mrf.mxu0
      %3184 = vdwg.mxu0
      %3185 = vmatpush.bf16.msra.mxu0 %v909
      %3186 = vmatpush.bf16.msra.mxu0 %v905
      %3187 = vmatpush.bf16.msra.mxu0 %v901
      %3188 = vmatpush.bf16.msra.mxu0 %v897
      %3189 = vmatpush.bf16.msra.mxu0 %v893
      %3190 = vmatpush.bf16.msra.mxu0 %v889
      %3191 = vmatpush.bf16.msra.mxu0 %v885
      %3192 = vmatpush.bf16.msra.mxu0 %v881
      %3193 = vmatmul.bf16.gmra.mxu0 %v3092
      %v3194 = vpop.f32.mrf.mxu0
      %v3195 = vadd.f32 %v3143, %v3194
      %v3196 = vpop.f32.mrf.mxu0
      %3197 = vdwg.mxu0
      %v3198 = vadd.f32 %v3156, %v259
      %v3199 = vadd.f32 %v3169, %v260
      %v3200 = vadd.f32 %v3182, %v261
      %v3201 = vadd.f32 %v3195, %v262
      %v3202 = vxor.u32 %v3198, 2147483648
      %v3203 = vmul.f32 %v3202, 1.442695
      %v3204 = vpow.pop %v3203
      %v3205 = vadd.f32 %v3204, 1.0
      %v3206 = vrcp.pop %v3205
      %v3207 = vmul.f32 %v3205, %v3206
      %v3208 = vsub.f32 1.0, %v3207
      %v3209 = vmul.f32 %v3206, %v3208
      %v3210 = vadd.f32 %v3206, %v3209
      %vm3211 = vweird.f32 %v3205
      %vm3212 = vweird.f32 %v3206
      %vm3213 = vmor %vm3211, %vm3212
      %v3214 = vsel %vm3213, %v3206, %v3210
      %v3215 = vand.u32 2147483647, %v3205
      %vm3216 = vcmp.eq.f32.partialorder %v3215, 8.507059e+37
      %v3217 = vand.u32 %v3205, 2147483648
      %v3218 = vor.u32 1.1754944e-38, %v3217
      %v3219 = vsel %vm3216, %v3218, %v3214
      %v3220 = vmul.f32 1.0, %v3219
      %v3221 = vxor.u32 %v3199, 2147483648
      %v3222 = vmul.f32 %v3221, 1.442695
      %v3223 = vpow.pop %v3222
      %v3224 = vadd.f32 %v3223, 1.0
      %v3225 = vrcp.pop %v3224
      %v3226 = vmul.f32 %v3224, %v3225
      %v3227 = vsub.f32 1.0, %v3226
      %v3228 = vmul.f32 %v3225, %v3227
      %v3229 = vadd.f32 %v3225, %v3228
      %vm3230 = vweird.f32 %v3224
      %vm3231 = vweird.f32 %v3225
      %vm3232 = vmor %vm3230, %vm3231
      %v3233 = vsel %vm3232, %v3225, %v3229
      %v3234 = vand.u32 2147483647, %v3224
      %vm3235 = vcmp.eq.f32.partialorder %v3234, 8.507059e+37
      %v3236 = vand.u32 %v3224, 2147483648
      %v3237 = vor.u32 1.1754944e-38, %v3236
      %v3238 = vsel %vm3235, %v3237, %v3233
      %v3239 = vmul.f32 1.0, %v3238
      %v3240 = vtanh.pop %v3200
      %v3241 = vxor.u32 %v3201, 2147483648
      %v3242 = vmul.f32 %v3241, 1.442695
      %v3243 = vpow.pop %v3242
      %v3244 = vadd.f32 %v3243, 1.0
      %v3245 = vrcp.pop %v3244
      %v3246 = vmul.f32 %v3244, %v3245
      %v3247 = vsub.f32 1.0, %v3246
      %v3248 = vmul.f32 %v3245, %v3247
      %v3249 = vadd.f32 %v3245, %v3248
      %vm3250 = vweird.f32 %v3244
      %vm3251 = vweird.f32 %v3245
      %vm3252 = vmor %vm3250, %vm3251
      %v3253 = vsel %vm3252, %v3245, %v3249
      %v3254 = vand.u32 2147483647, %v3244
      %vm3255 = vcmp.eq.f32.partialorder %v3254, 8.507059e+37
      %v3256 = vand.u32 %v3244, 2147483648
      %v3257 = vor.u32 1.1754944e-38, %v3256
      %v3258 = vsel %vm3255, %v3257, %v3253
      %v3259 = vmul.f32 1.0, %v3258
      %v3260 = vmul.f32 %v3239, %v2951
      %v3261 = vmul.f32 %v3220, %v3240
      %v3262 = vadd.f32 %v3260, %v3261
      %v3263 = vtanh.pop %v3262
      %v3264 = vmul.f32 %v3259, %v3263
      %v3265 = vsel %vm2962, %v3264, %v2950
      %v3266 = vsel %vm2962, %v3262, %v2951
      %v3267 = vsel %vm2962, %v3264, 0.0
      %s3268 = scalar_lea.vmem [#allocation17], 56
      %3269 = vst [vmem:[%s3268] sm:$0xff] %v3267
      %3270 = vst [vmem:[#allocation2] sm:$0xff] %v3090
      %3271 = vst [vmem:[#allocation3] sm:$0xff] %v3091
      %3272 = vst [vmem:[%s268] sm:$0xff] %v3265
      %3273 = vst [vmem:[%s271] sm:$0xff] %v3266
    $region69: #{tpu_custom_call.1} parent=1 // pred_fallthru
      _
    // Predicated region
    $region70: #{tpu_custom_call.1} parent=1 // pred_check
      %p3274 = pneg %p130
    $region71: #{tpu_custom_call.1} parent=1 // pred_check_branch
      %3276 = sbr.rel (%p3274) target = $region73
    $region72: #{tpu_custom_call.1} parent=1 // pred_region
      %v3277 = vld [vmem:[#allocation2] sm:$0xff]
      %v3278 = vld [vmem:[#allocation2 + $0x8] sm:$0xff]
      %3279 = vst [vmem:[#allocation18] sm:$0xff] %v3277
      %3280 = vst [vmem:[#allocation18 + $0x8] sm:$0xff] %v3278
      %v3281 = vld [vmem:[#allocation3] sm:$0xff]
      %v3282 = vld [vmem:[#allocation3 + $0x8] sm:$0xff]
      %3283 = vst [vmem:[#allocation20] sm:$0xff] %v3281
      %3284 = vst [vmem:[#allocation20 + $0x8] sm:$0xff] %v3282
    $region73: #{tpu_custom_call.1} parent=1 // pred_fallthru
      _
    // Predicated region
    $region74: #{tpu_custom_call.1} parent=1 // pred_check
      _
    $region75: #{tpu_custom_call.1} parent=1 // pred_check_branch
      %3286 = sbr.rel (0) target = $region77
    $region76: #{tpu_custom_call.1} parent=1 // pred_region
      %3288 = vsyncadd [#allocation8], 0
      %s3289 = sshll.u32 [#allocation17], 4
      %s3290 = int_to_ptr.vmem [resolvable:$true] %s3289
      %s3291 = sshll.u32 %s9, 4
      %s3292 = int_to_ptr.hbm [resolvable:$true] %s3291
      %3297 = dma.vmem_to_hbm [thread:$0]  %s3290, 1024, %s3292, [#allocation8], 128, 128, 8
    $region77: #{tpu_custom_call.1} parent=1 // pred_fallthru
      _
    // Predicated region
    $region78: #{tpu_custom_call.1} parent=1 // pred_check
      _
    $region79: #{tpu_custom_call.1} parent=1 // pred_check_branch
      %3299 = sbr.rel (0) target = $region81
    $region80: #{tpu_custom_call.1} parent=1 // pred_region
      %3301 = vsyncadd [#allocation19], 0
      %s3302 = sshll.u32 [#allocation18], 4
      %s3303 = int_to_ptr.vmem [resolvable:$true] %s3302
      %s3304 = sshll.u32 %s10, 4
      %s3305 = int_to_ptr.hbm [resolvable:$true] %s3304
      %3310 = dma.vmem_to_hbm [thread:$0]  %s3303, 256, %s3305, [#allocation19], 128, 128, 8
    $region81: #{tpu_custom_call.1} parent=1 // pred_fallthru
      _
    // Predicated region
    $region82: #{tpu_custom_call.1} parent=1 // pred_check
      _
    $region83: #{tpu_custom_call.1} parent=1 // pred_check_branch
      %3312 = sbr.rel (0) target = $region85
    $region84: #{tpu_custom_call.1} parent=1 // pred_region
      %3314 = vsyncadd [#allocation19], 0
      %s3315 = sshll.u32 [#allocation20], 4
      %s3316 = int_to_ptr.vmem [resolvable:$true] %s3315
      %s3317 = sshll.u32 %s11, 4
      %s3318 = int_to_ptr.hbm [resolvable:$true] %s3317
      %3323 = dma.vmem_to_hbm [thread:$0]  %s3316, 256, %s3318, [#allocation19], 128, 128, 8
    $region85: #{tpu_custom_call.1} parent=1 // pred_fallthru
      _
    // Predicated region
    $region86: #{tpu_custom_call.1} parent=1 // pred_check
      _
    $region87: #{tpu_custom_call.1} parent=1 // pred_check_branch
      %3325 = sbr.rel (0) target = $region89
    $region88: #{tpu_custom_call.1} parent=1 // pred_region
      %3327 = dma.done [#allocation8], 1024
    $region89: #{tpu_custom_call.1} parent=1 // pred_fallthru
      _
    // Predicated region
    $region90: #{tpu_custom_call.1} parent=1 // pred_check
      _
    $region91: #{tpu_custom_call.1} parent=1 // pred_check_branch
      %3329 = sbr.rel (0) target = $region93
    $region92: #{tpu_custom_call.1} parent=1 // pred_region
      %3331 = dma.done [#allocation19], 256
    $region93: #{tpu_custom_call.1} parent=1 // pred_fallthru
      _
    // Predicated region
    $region94: #{tpu_custom_call.1} parent=1 // pred_check
      _
    $region95: #{tpu_custom_call.1} parent=1 // pred_check_branch
      %3333 = sbr.rel (0) target = $region97
    $region96: #{tpu_custom_call.1} parent=1 // pred_region
      %3335 = dma.done [#allocation19], 256
    $region97: #{tpu_custom_call.1} parent=1 // pred_fallthru
      _
    %3336 = vsyncpa [#allocation7], 1
    %3337 = vsyncpa [#allocation10], 1
    %3338 = vsyncpa [#allocation13], 1
    %3339 = vsyncpa [#allocation16], 1
    %3340 = vsyncpa [#allocation8], 1
    %3341 = vsyncpa [#allocation19], 1

</llo_original>
